<compile_context>
chip_gen: v5e
topology: v5e:2x2
jax: 0.10.0
libtpu: 0.0.40
codegen_flags: <defaults>
</compile_context>

<pallas_src>
import jax
import jax.numpy as jnp
from jax import lax
from jax.experimental import pallas as pl
from jax.experimental.pallas import tpu as pltpu

N_EMBD = 256
N_HEAD = 4
HEAD_SIZE = N_EMBD // N_HEAD
FF_HIDDEN = 4 * N_EMBD
LN_EPS = 1e-5  # PyTorch nn.LayerNorm default
NEG_INF = -1e30  # finite "minus infinity" (robust if T ever gets padded)


def _layernorm(x, gamma, beta):
    # One-pass LayerNorm: var = E[x^2] - mean^2  (halves cross-lane reductions)
    mu = jnp.mean(x, axis=-1, keepdims=True)
    ms = jnp.mean(x * x, axis=-1, keepdims=True)
    var = ms - mu * mu
    return (x - mu) * lax.rsqrt(var + LN_EPS) * gamma + beta


def block_kernel(x_ref, wqkv_ref, wo_ref, w1_ref, w2_ref, vecs_ref, b1_ref,
                 out_ref):
    BB, T, C = x_ref.shape
    x = x_ref[...].reshape(BB * T, C)          # fold batch rows -> (BB*T, C)

    vecs = vecs_ref[...]                        # packed (6, C) vectors
    bo, b2 = vecs[0:1, :], vecs[1:2, :]
    g1, be1 = vecs[2:3, :], vecs[3:4, :]
    g2, be2 = vecs[4:5, :], vecs[5:6, :]

    # ---- self-attention branch: x + bo + sum_h attn_h(ln1(x)) @ wo_h ----
    xn = _layernorm(x, g1, be1)

    # single wide QKV projection: (BB*T, C) x (C, 3C)
    qkv = jnp.dot(xn, wqkv_ref[...], preferred_element_type=jnp.float32)
    q, k, v = qkv[:, :C], qkv[:, C:2 * C], qkv[:, 2 * C:]

    scale = jnp.float32(C) ** -0.5             # C**-0.5 with C = n_embd (ref)
    row = lax.broadcasted_iota(jnp.int32, (T, T), 0)
    col = lax.broadcasted_iota(jnp.int32, (T, T), 1)
    causal = col <= row

    wo = wo_ref[...]
    qk_dims = (((1,), (1,)), ((), ()))          # contract last dims, no k.T
    sa_rows = []
    for b in range(BB):                         # BB is a small compile-time const
        rs = slice(b * T, (b + 1) * T)
        sa_b = jnp.zeros((T, C), jnp.float32)
        for h in range(N_HEAD):
            cs = slice(h * HEAD_SIZE, (h + 1) * HEAD_SIZE)
            qh, kh, vh = q[rs, cs], k[rs, cs], v[rs, cs]
            wei = lax.dot_general(qh, kh, qk_dims,
                                  preferred_element_type=jnp.float32) * scale
            wei = jnp.where(causal, wei, NEG_INF)
            wei = wei - jnp.max(wei, axis=-1, keepdims=True)
            p = jnp.exp(wei)
            p = p * pl.reciprocal(jnp.sum(p, axis=-1, keepdims=True),
                                  approx=True)
            pv = jnp.dot(p, vh, preferred_element_type=jnp.float32)  # (T, HS)
            # accumulate into output projection (keeps N = 256 lane-dense)
            sa_b = sa_b + jnp.dot(pv, wo[cs, :],
                                  preferred_element_type=jnp.float32)
        sa_rows.append(sa_b)
    sa = sa_rows[0] if BB == 1 else jnp.concatenate(sa_rows, axis=0)
    # dropout -> identity (eval mode)
    x1 = x + sa + bo

    # ---- feed-forward branch: x1 + W2(relu(W1(ln2(x1)))) ----
    x1n = _layernorm(x1, g2, be2)
    hdn = jnp.dot(x1n, w1_ref[...], preferred_element_type=jnp.float32) + b1_ref[...]
    hdn = jnp.maximum(hdn, 0.0)
    ff = jnp.dot(hdn, w2_ref[...], preferred_element_type=jnp.float32) + b2
    # dropout -> identity (eval mode)
    out_ref[...] = (x1 + ff).reshape(BB, T, C)


def _choose_batch_block(B, T):
    """Fold batch rows per grid step but keep >=2 grid steps (v7x: 2 TCs)."""
    max_rows = 2048                      # cap per-step activation rows (~2 MB f32 @ C=256)
    bb = B // 2 if B >= 2 else 1
    bb = max(1, min(bb, max_rows // max(T, 1)))
    while bb > 1 and B % bb != 0:
        bb -= 1
    return bb


def transformer_block(x, p):
    B, T, C = x.shape
    assert C == N_EMBD
    bb = _choose_batch_block(B, T)
    grid_b = B // bb

    # fuse small parameter tensors once in the wrapper (cheap XLA concat)
    wqkv = jnp.concatenate([p["wq"], p["wk"], p["wv"]], axis=1)       # (C, 3C)
    vecs = jnp.concatenate([p["bo"], p["b2"], p["g1"], p["be1"],
                            p["g2"], p["be2"]], axis=0)               # (6, C)

    full2d = lambda shape: pl.BlockSpec(shape, lambda b: (0, 0))
    grid_spec = pltpu.PrefetchScalarGridSpec(
        num_scalar_prefetch=0,
        grid=(grid_b,),
        in_specs=[
            pl.BlockSpec((bb, T, C), lambda b: (b, 0, 0)),   # x
            full2d((C, 3 * C)),                              # wqkv
            full2d((C, C)),                                  # wo
            full2d((C, FF_HIDDEN)),                          # w1
            full2d((FF_HIDDEN, C)),                          # w2
            full2d((6, C)),                                  # packed vectors
            full2d((1, FF_HIDDEN)),                          # b1
        ],
        out_specs=pl.BlockSpec((bb, T, C), lambda b: (b, 0, 0)),
    )
    return pl.pallas_call(
        block_kernel,
        out_shape=jax.ShapeDtypeStruct((B, T, C), jnp.float32),
        grid_spec=grid_spec,
        compiler_params=pltpu.CompilerParams(
            dimension_semantics=("parallel",)),
    )(x, wqkv, p["wo"], p["w1"], p["w2"], vecs, p["b1"])


def ref_block(x, p):
    """Pure-JAX reference mirroring the PyTorch forward (eval mode)."""
    def ln(v, g, b):
        mu = v.mean(-1, keepdims=True)
        var = ((v - mu) ** 2).mean(-1, keepdims=True)
        return (v - mu) / jnp.sqrt(var + LN_EPS) * g + b

    B, T, C = x.shape
    xn = ln(x, p["g1"], p["be1"])
    causal = jnp.tril(jnp.ones((T, T), dtype=bool))
    outs = []
    for h in range(N_HEAD):
        sl = slice(h * HEAD_SIZE, (h + 1) * HEAD_SIZE)
        q = xn @ p["wq"][:, sl]
        k = xn @ p["wk"][:, sl]
        v = xn @ p["wv"][:, sl]
        wei = (q @ jnp.swapaxes(k, -1, -2)) * (C ** -0.5)
        wei = jnp.where(causal, wei, -jnp.inf)
        wei = jax.nn.softmax(wei, axis=-1)
        outs.append(wei @ v)
    sa = jnp.concatenate(outs, axis=-1) @ p["wo"] + p["bo"]
    x1 = x + sa
    x1n = ln(x1, p["g2"], p["be2"])
    ff = jnp.maximum(x1n @ p["w1"] + p["b1"], 0.0) @ p["w2"] + p["b2"]
    return x1 + ff


def init_params(key):
    ks = jax.random.split(key, 10)
    s = 0.02
    return {
        "wq": jax.random.normal(ks[0], (N_EMBD, N_EMBD), jnp.float32) * s,
        "wk": jax.random.normal(ks[1], (N_EMBD, N_EMBD), jnp.float32) * s,
        "wv": jax.random.normal(ks[2], (N_EMBD, N_EMBD), jnp.float32) * s,
        "wo": jax.random.normal(ks[3], (N_EMBD, N_EMBD), jnp.float32) * s,
        "bo": jax.random.normal(ks[4], (1, N_EMBD), jnp.float32) * s,
        "w1": jax.random.normal(ks[5], (N_EMBD, FF_HIDDEN), jnp.float32) * s,
        "b1": jax.random.normal(ks[6], (1, FF_HIDDEN), jnp.float32) * s,
        "w2": jax.random.normal(ks[7], (FF_HIDDEN, N_EMBD), jnp.float32) * s,
        "b2": jax.random.normal(ks[8], (1, N_EMBD), jnp.float32) * s,
        "g1": jnp.ones((1, N_EMBD), jnp.float32),
        "be1": jnp.zeros((1, N_EMBD), jnp.float32),
        "g2": jnp.ones((1, N_EMBD), jnp.float32),
        "be2": jnp.zeros((1, N_EMBD), jnp.float32),
    }


if __name__ == "__main__":
    key = jax.random.PRNGKey(0)
    kx, kp = jax.random.split(key)
    B, T = 2, 16                         # small shapes; T <= block_size (128)
    x = jax.random.normal(kx, (B, T, N_EMBD), jnp.float32)
    params = init_params(kp)

    out = transformer_block(x, params)
    out = jax.block_until_ready(out)

    ref = ref_block(x, params)
    assert out.shape == (B, T, N_EMBD)
    # tolerance 1e-3 leaves headroom for the approx (EUP) softmax reciprocal
    assert jnp.allclose(out, ref, rtol=1e-3, atol=1e-3), "mismatch vs JAX reference"
    print("KERNEL_OK")
</pallas_src>

<mosaic_0001>
module attributes {stable_mosaic.version = 11 : i64} {
  func.func @block_kernel(%arg0: i32, %arg1: memref<1x16x256xf32, #tpu.memory_space<vmem>>, %arg2: memref<256x768xf32, #tpu.memory_space<vmem>>, %arg3: memref<256x256xf32, #tpu.memory_space<vmem>>, %arg4: memref<256x1024xf32, #tpu.memory_space<vmem>>, %arg5: memref<1024x256xf32, #tpu.memory_space<vmem>>, %arg6: memref<6x256xf32, #tpu.memory_space<vmem>>, %arg7: memref<1x1024xf32, #tpu.memory_space<vmem>>, %arg8: memref<1x16x256xf32, #tpu.memory_space<vmem>>) attributes {dimension_semantics = [#tpu.dimension_semantics<parallel>], iteration_bounds = array<i64: 2>, scalar_prefetch = 0 : i64, scratch_operands = 0 : i64, tpu.core_type = #tpu.core_type<tc>, window_params = [{transform_indices = @transform_0, window_bounds = array<i64: 1, 16, 256>}, {pipeline_mode = #tpu.pipeline_mode<synchronous>, transform_indices = @transform_1, window_bounds = array<i64: 256, 768>}, {pipeline_mode = #tpu.pipeline_mode<synchronous>, transform_indices = @transform_2, window_bounds = array<i64: 256, 256>}, {pipeline_mode = #tpu.pipeline_mode<synchronous>, transform_indices = @transform_3, window_bounds = array<i64: 256, 1024>}, {pipeline_mode = #tpu.pipeline_mode<synchronous>, transform_indices = @transform_4, window_bounds = array<i64: 1024, 256>}, {pipeline_mode = #tpu.pipeline_mode<synchronous>, transform_indices = @transform_5, window_bounds = array<i64: 6, 256>}, {pipeline_mode = #tpu.pipeline_mode<synchronous>, transform_indices = @transform_6, window_bounds = array<i64: 1, 1024>}, {transform_indices = @transform_7, window_bounds = array<i64: 1, 16, 256>}]} {
    %c0 = arith.constant 0 : index
    %c0_0 = arith.constant 0 : index
    %c0_1 = arith.constant 0 : index
    %0 = vector.load %arg1[%c0, %c0_0, %c0_1] : memref<1x16x256xf32, #tpu.memory_space<vmem>>, vector<1x16x256xf32>
    %1 = vector.shape_cast %0 : vector<1x16x256xf32> to vector<16x256xf32>
    %c0_2 = arith.constant 0 : index
    %c0_3 = arith.constant 0 : index
    %2 = vector.load %arg6[%c0_2, %c0_3] : memref<6x256xf32, #tpu.memory_space<vmem>>, vector<6x256xf32>
    %3 = vector.extract_strided_slice %2 {offsets = [0, 0], sizes = [1, 256], strides = [1, 1]} : vector<6x256xf32> to vector<1x256xf32>
    %4 = vector.extract_strided_slice %2 {offsets = [1, 0], sizes = [1, 256], strides = [1, 1]} : vector<6x256xf32> to vector<1x256xf32>
    %5 = vector.extract_strided_slice %2 {offsets = [2, 0], sizes = [1, 256], strides = [1, 1]} : vector<6x256xf32> to vector<1x256xf32>
    %6 = vector.extract_strided_slice %2 {offsets = [3, 0], sizes = [1, 256], strides = [1, 1]} : vector<6x256xf32> to vector<1x256xf32>
    %7 = vector.extract_strided_slice %2 {offsets = [4, 0], sizes = [1, 256], strides = [1, 1]} : vector<6x256xf32> to vector<1x256xf32>
    %8 = vector.extract_strided_slice %2 {offsets = [5, 0], sizes = [1, 256], strides = [1, 1]} : vector<6x256xf32> to vector<1x256xf32>
    %cst = arith.constant dense<0.000000e+00> : vector<16xf32>
    %9 = vector.multi_reduction <add>, %1, %cst [1] : vector<16x256xf32> to vector<16xf32>
    %10 = vector.shape_cast %9 : vector<16xf32> to vector<16x1xf32>
    %cst_4 = arith.constant 2.560000e+02 : f32
    %11 = vector.broadcast %cst_4 : f32 to vector<16x1xf32>
    %12 = arith.divf %10, %11 : vector<16x1xf32>
    %13 = arith.mulf %1, %1 : vector<16x256xf32>
    %cst_5 = arith.constant dense<0.000000e+00> : vector<16xf32>
    %14 = vector.multi_reduction <add>, %13, %cst_5 [1] : vector<16x256xf32> to vector<16xf32>
    %15 = vector.shape_cast %14 : vector<16xf32> to vector<16x1xf32>
    %cst_6 = arith.constant 2.560000e+02 : f32
    %16 = vector.broadcast %cst_6 : f32 to vector<16x1xf32>
    %17 = arith.divf %15, %16 : vector<16x1xf32>
    %18 = arith.mulf %12, %12 : vector<16x1xf32>
    %19 = arith.subf %17, %18 : vector<16x1xf32>
    %20 = vector.broadcast %12 : vector<16x1xf32> to vector<16x256xf32>
    %21 = arith.subf %1, %20 : vector<16x256xf32>
    %cst_7 = arith.constant 9.99999974E-6 : f32
    %22 = vector.broadcast %cst_7 : f32 to vector<16x1xf32>
    %23 = arith.addf %19, %22 : vector<16x1xf32>
    %24 = math.rsqrt %23 : vector<16x1xf32>
    %25 = vector.broadcast %24 : vector<16x1xf32> to vector<16x256xf32>
    %26 = arith.mulf %21, %25 : vector<16x256xf32>
    %27 = vector.broadcast %5 : vector<1x256xf32> to vector<16x256xf32>
    %28 = arith.mulf %26, %27 : vector<16x256xf32>
    %29 = vector.broadcast %6 : vector<1x256xf32> to vector<16x256xf32>
    %30 = arith.addf %28, %29 : vector<16x256xf32>
    %c0_8 = arith.constant 0 : index
    %c0_9 = arith.constant 0 : index
    %31 = vector.load %arg2[%c0_8, %c0_9] : memref<256x768xf32, #tpu.memory_space<vmem>>, vector<256x768xf32>
    %cst_10 = arith.constant dense<0.000000e+00> : vector<16x768xf32>
    %32 = tpu.matmul %30, %31, %cst_10 {dimension_numbers = #tpu.dot_dimension_numbers<[1], [0], [0], [1], [0, 0, 1, 1], [], []>} : vector<16x256xf32>, vector<256x768xf32>, vector<16x768xf32> -> vector<16x768xf32>
    %33 = vector.extract_strided_slice %32 {offsets = [0, 0], sizes = [16, 256], strides = [1, 1]} : vector<16x768xf32> to vector<16x256xf32>
    %34 = vector.extract_strided_slice %32 {offsets = [0, 256], sizes = [16, 256], strides = [1, 1]} : vector<16x768xf32> to vector<16x256xf32>
    %35 = vector.extract_strided_slice %32 {offsets = [0, 512], sizes = [16, 256], strides = [1, 1]} : vector<16x768xf32> to vector<16x256xf32>
    %cst_11 = arith.constant 2.560000e+02 : f32
    %cst_12 = arith.constant -5.000000e-01 : f32
    %36 = math.powf %cst_11, %cst_12 : f32
    %37 = tpu.iota {dimensions = array<i32: 0>} : vector<16x16xi32>
    %38 = tpu.iota {dimensions = array<i32: 1>} : vector<16x16xi32>
    %39 = arith.cmpi sle, %38, %37 : vector<16x16xi32>
    %c0_13 = arith.constant 0 : index
    %c0_14 = arith.constant 0 : index
    %40 = vector.load %arg3[%c0_13, %c0_14] : memref<256x256xf32, #tpu.memory_space<vmem>>, vector<256x256xf32>
    %cst_15 = arith.constant 0.000000e+00 : f32
    %41 = vector.broadcast %cst_15 : f32 to vector<16x256xf32>
    %42 = vector.extract_strided_slice %33 {offsets = [0, 0], sizes = [16, 64], strides = [1, 1]} : vector<16x256xf32> to vector<16x64xf32>
    %43 = vector.extract_strided_slice %34 {offsets = [0, 0], sizes = [16, 64], strides = [1, 1]} : vector<16x256xf32> to vector<16x64xf32>
    %44 = vector.extract_strided_slice %35 {offsets = [0, 0], sizes = [16, 64], strides = [1, 1]} : vector<16x256xf32> to vector<16x64xf32>
    %cst_16 = arith.constant dense<0.000000e+00> : vector<16x16xf32>
    %45 = tpu.matmul %42, %43, %cst_16 {dimension_numbers = #tpu.dot_dimension_numbers<[1], [1], [0], [0], [0, 0, 1, 0], [], []>} : vector<16x64xf32>, vector<16x64xf32>, vector<16x16xf32> -> vector<16x16xf32>
    %46 = vector.broadcast %36 : f32 to vector<16x16xf32>
    %47 = arith.mulf %45, %46 : vector<16x16xf32>
    %cst_17 = arith.constant -1.000000e+30 : f32
    %48 = vector.broadcast %cst_17 : f32 to vector<16x16xf32>
    %49 = arith.select %39, %47, %48 : vector<16x16xi1>, vector<16x16xf32>
    %cst_18 = arith.constant dense<0xFF800000> : vector<16xf32>
    %50 = vector.multi_reduction <maximumf>, %49, %cst_18 [1] : vector<16x16xf32> to vector<16xf32>
    %51 = vector.shape_cast %50 : vector<16xf32> to vector<16x1xf32>
    %52 = vector.broadcast %51 : vector<16x1xf32> to vector<16x16xf32>
    %53 = arith.subf %49, %52 : vector<16x16xf32>
    %54 = math.exp %53 : vector<16x16xf32>
    %cst_19 = arith.constant dense<0.000000e+00> : vector<16xf32>
    %55 = vector.multi_reduction <add>, %54, %cst_19 [1] : vector<16x16xf32> to vector<16xf32>
    %56 = vector.shape_cast %55 : vector<16xf32> to vector<16x1xf32>
    %57 = tpu.reciprocal %56 {approx = true} : vector<16x1xf32> -> vector<16x1xf32>
    %58 = vector.broadcast %57 : vector<16x1xf32> to vector<16x16xf32>
    %59 = arith.mulf %54, %58 : vector<16x16xf32>
    %cst_20 = arith.constant dense<0.000000e+00> : vector<16x64xf32>
    %60 = tpu.matmul %59, %44, %cst_20 {dimension_numbers = #tpu.dot_dimension_numbers<[1], [0], [0], [1], [0, 0, 1, 1], [], []>} : vector<16x16xf32>, vector<16x64xf32>, vector<16x64xf32> -> vector<16x64xf32>
    %61 = vector.extract_strided_slice %40 {offsets = [0, 0], sizes = [64, 256], strides = [1, 1]} : vector<256x256xf32> to vector<64x256xf32>
    %cst_21 = arith.constant dense<0.000000e+00> : vector<16x256xf32>
    %62 = tpu.matmul %60, %61, %cst_21 {dimension_numbers = #tpu.dot_dimension_numbers<[1], [0], [0], [1], [0, 0, 1, 1], [], []>} : vector<16x64xf32>, vector<64x256xf32>, vector<16x256xf32> -> vector<16x256xf32>
    %63 = arith.addf %41, %62 : vector<16x256xf32>
    %64 = vector.extract_strided_slice %33 {offsets = [0, 64], sizes = [16, 64], strides = [1, 1]} : vector<16x256xf32> to vector<16x64xf32>
    %65 = vector.extract_strided_slice %34 {offsets = [0, 64], sizes = [16, 64], strides = [1, 1]} : vector<16x256xf32> to vector<16x64xf32>
    %66 = vector.extract_strided_slice %35 {offsets = [0, 64], sizes = [16, 64], strides = [1, 1]} : vector<16x256xf32> to vector<16x64xf32>
    %cst_22 = arith.constant dense<0.000000e+00> : vector<16x16xf32>
    %67 = tpu.matmul %64, %65, %cst_22 {dimension_numbers = #tpu.dot_dimension_numbers<[1], [1], [0], [0], [0, 0, 1, 0], [], []>} : vector<16x64xf32>, vector<16x64xf32>, vector<16x16xf32> -> vector<16x16xf32>
    %68 = vector.broadcast %36 : f32 to vector<16x16xf32>
    %69 = arith.mulf %67, %68 : vector<16x16xf32>
    %cst_23 = arith.constant -1.000000e+30 : f32
    %70 = vector.broadcast %cst_23 : f32 to vector<16x16xf32>
    %71 = arith.select %39, %69, %70 : vector<16x16xi1>, vector<16x16xf32>
    %cst_24 = arith.constant dense<0xFF800000> : vector<16xf32>
    %72 = vector.multi_reduction <maximumf>, %71, %cst_24 [1] : vector<16x16xf32> to vector<16xf32>
    %73 = vector.shape_cast %72 : vector<16xf32> to vector<16x1xf32>
    %74 = vector.broadcast %73 : vector<16x1xf32> to vector<16x16xf32>
    %75 = arith.subf %71, %74 : vector<16x16xf32>
    %76 = math.exp %75 : vector<16x16xf32>
    %cst_25 = arith.constant dense<0.000000e+00> : vector<16xf32>
    %77 = vector.multi_reduction <add>, %76, %cst_25 [1] : vector<16x16xf32> to vector<16xf32>
    %78 = vector.shape_cast %77 : vector<16xf32> to vector<16x1xf32>
    %79 = tpu.reciprocal %78 {approx = true} : vector<16x1xf32> -> vector<16x1xf32>
    %80 = vector.broadcast %79 : vector<16x1xf32> to vector<16x16xf32>
    %81 = arith.mulf %76, %80 : vector<16x16xf32>
    %cst_26 = arith.constant dense<0.000000e+00> : vector<16x64xf32>
    %82 = tpu.matmul %81, %66, %cst_26 {dimension_numbers = #tpu.dot_dimension_numbers<[1], [0], [0], [1], [0, 0, 1, 1], [], []>} : vector<16x16xf32>, vector<16x64xf32>, vector<16x64xf32> -> vector<16x64xf32>
    %83 = vector.extract_strided_slice %40 {offsets = [64, 0], sizes = [64, 256], strides = [1, 1]} : vector<256x256xf32> to vector<64x256xf32>
    %cst_27 = arith.constant dense<0.000000e+00> : vector<16x256xf32>
    %84 = tpu.matmul %82, %83, %cst_27 {dimension_numbers = #tpu.dot_dimension_numbers<[1], [0], [0], [1], [0, 0, 1, 1], [], []>} : vector<16x64xf32>, vector<64x256xf32>, vector<16x256xf32> -> vector<16x256xf32>
    %85 = arith.addf %63, %84 : vector<16x256xf32>
    %86 = vector.extract_strided_slice %33 {offsets = [0, 128], sizes = [16, 64], strides = [1, 1]} : vector<16x256xf32> to vector<16x64xf32>
    %87 = vector.extract_strided_slice %34 {offsets = [0, 128], sizes = [16, 64], strides = [1, 1]} : vector<16x256xf32> to vector<16x64xf32>
    %88 = vector.extract_strided_slice %35 {offsets = [0, 128], sizes = [16, 64], strides = [1, 1]} : vector<16x256xf32> to vector<16x64xf32>
    %cst_28 = arith.constant dense<0.000000e+00> : vector<16x16xf32>
    %89 = tpu.matmul %86, %87, %cst_28 {dimension_numbers = #tpu.dot_dimension_numbers<[1], [1], [0], [0], [0, 0, 1, 0], [], []>} : vector<16x64xf32>, vector<16x64xf32>, vector<16x16xf32> -> vector<16x16xf32>
    %90 = vector.broadcast %36 : f32 to vector<16x16xf32>
    %91 = arith.mulf %89, %90 : vector<16x16xf32>
    %cst_29 = arith.constant -1.000000e+30 : f32
    %92 = vector.broadcast %cst_29 : f32 to vector<16x16xf32>
    %93 = arith.select %39, %91, %92 : vector<16x16xi1>, vector<16x16xf32>
    %cst_30 = arith.constant dense<0xFF800000> : vector<16xf32>
    %94 = vector.multi_reduction <maximumf>, %93, %cst_30 [1] : vector<16x16xf32> to vector<16xf32>
    %95 = vector.shape_cast %94 : vector<16xf32> to vector<16x1xf32>
    %96 = vector.broadcast %95 : vector<16x1xf32> to vector<16x16xf32>
    %97 = arith.subf %93, %96 : vector<16x16xf32>
    %98 = math.exp %97 : vector<16x16xf32>
    %cst_31 = arith.constant dense<0.000000e+00> : vector<16xf32>
    %99 = vector.multi_reduction <add>, %98, %cst_31 [1] : vector<16x16xf32> to vector<16xf32>
    %100 = vector.shape_cast %99 : vector<16xf32> to vector<16x1xf32>
    %101 = tpu.reciprocal %100 {approx = true} : vector<16x1xf32> -> vector<16x1xf32>
    %102 = vector.broadcast %101 : vector<16x1xf32> to vector<16x16xf32>
    %103 = arith.mulf %98, %102 : vector<16x16xf32>
    %cst_32 = arith.constant dense<0.000000e+00> : vector<16x64xf32>
    %104 = tpu.matmul %103, %88, %cst_32 {dimension_numbers = #tpu.dot_dimension_numbers<[1], [0], [0], [1], [0, 0, 1, 1], [], []>} : vector<16x16xf32>, vector<16x64xf32>, vector<16x64xf32> -> vector<16x64xf32>
    %105 = vector.extract_strided_slice %40 {offsets = [128, 0], sizes = [64, 256], strides = [1, 1]} : vector<256x256xf32> to vector<64x256xf32>
    %cst_33 = arith.constant dense<0.000000e+00> : vector<16x256xf32>
    %106 = tpu.matmul %104, %105, %cst_33 {dimension_numbers = #tpu.dot_dimension_numbers<[1], [0], [0], [1], [0, 0, 1, 1], [], []>} : vector<16x64xf32>, vector<64x256xf32>, vector<16x256xf32> -> vector<16x256xf32>
    %107 = arith.addf %85, %106 : vector<16x256xf32>
    %108 = vector.extract_strided_slice %33 {offsets = [0, 192], sizes = [16, 64], strides = [1, 1]} : vector<16x256xf32> to vector<16x64xf32>
    %109 = vector.extract_strided_slice %34 {offsets = [0, 192], sizes = [16, 64], strides = [1, 1]} : vector<16x256xf32> to vector<16x64xf32>
    %110 = vector.extract_strided_slice %35 {offsets = [0, 192], sizes = [16, 64], strides = [1, 1]} : vector<16x256xf32> to vector<16x64xf32>
    %cst_34 = arith.constant dense<0.000000e+00> : vector<16x16xf32>
    %111 = tpu.matmul %108, %109, %cst_34 {dimension_numbers = #tpu.dot_dimension_numbers<[1], [1], [0], [0], [0, 0, 1, 0], [], []>} : vector<16x64xf32>, vector<16x64xf32>, vector<16x16xf32> -> vector<16x16xf32>
    %112 = vector.broadcast %36 : f32 to vector<16x16xf32>
    %113 = arith.mulf %111, %112 : vector<16x16xf32>
    %cst_35 = arith.constant -1.000000e+30 : f32
    %114 = vector.broadcast %cst_35 : f32 to vector<16x16xf32>
    %115 = arith.select %39, %113, %114 : vector<16x16xi1>, vector<16x16xf32>
    %cst_36 = arith.constant dense<0xFF800000> : vector<16xf32>
    %116 = vector.multi_reduction <maximumf>, %115, %cst_36 [1] : vector<16x16xf32> to vector<16xf32>
    %117 = vector.shape_cast %116 : vector<16xf32> to vector<16x1xf32>
    %118 = vector.broadcast %117 : vector<16x1xf32> to vector<16x16xf32>
    %119 = arith.subf %115, %118 : vector<16x16xf32>
    %120 = math.exp %119 : vector<16x16xf32>
    %cst_37 = arith.constant dense<0.000000e+00> : vector<16xf32>
    %121 = vector.multi_reduction <add>, %120, %cst_37 [1] : vector<16x16xf32> to vector<16xf32>
    %122 = vector.shape_cast %121 : vector<16xf32> to vector<16x1xf32>
    %123 = tpu.reciprocal %122 {approx = true} : vector<16x1xf32> -> vector<16x1xf32>
    %124 = vector.broadcast %123 : vector<16x1xf32> to vector<16x16xf32>
    %125 = arith.mulf %120, %124 : vector<16x16xf32>
    %cst_38 = arith.constant dense<0.000000e+00> : vector<16x64xf32>
    %126 = tpu.matmul %125, %110, %cst_38 {dimension_numbers = #tpu.dot_dimension_numbers<[1], [0], [0], [1], [0, 0, 1, 1], [], []>} : vector<16x16xf32>, vector<16x64xf32>, vector<16x64xf32> -> vector<16x64xf32>
    %127 = vector.extract_strided_slice %40 {offsets = [192, 0], sizes = [64, 256], strides = [1, 1]} : vector<256x256xf32> to vector<64x256xf32>
    %cst_39 = arith.constant dense<0.000000e+00> : vector<16x256xf32>
    %128 = tpu.matmul %126, %127, %cst_39 {dimension_numbers = #tpu.dot_dimension_numbers<[1], [0], [0], [1], [0, 0, 1, 1], [], []>} : vector<16x64xf32>, vector<64x256xf32>, vector<16x256xf32> -> vector<16x256xf32>
    %129 = arith.addf %107, %128 : vector<16x256xf32>
    %130 = arith.addf %1, %129 : vector<16x256xf32>
    %131 = vector.broadcast %3 : vector<1x256xf32> to vector<16x256xf32>
    %132 = arith.addf %130, %131 : vector<16x256xf32>
    %cst_40 = arith.constant dense<0.000000e+00> : vector<16xf32>
    %133 = vector.multi_reduction <add>, %132, %cst_40 [1] : vector<16x256xf32> to vector<16xf32>
    %134 = vector.shape_cast %133 : vector<16xf32> to vector<16x1xf32>
    %cst_41 = arith.constant 2.560000e+02 : f32
    %135 = vector.broadcast %cst_41 : f32 to vector<16x1xf32>
    %136 = arith.divf %134, %135 : vector<16x1xf32>
    %137 = arith.mulf %132, %132 : vector<16x256xf32>
    %cst_42 = arith.constant dense<0.000000e+00> : vector<16xf32>
    %138 = vector.multi_reduction <add>, %137, %cst_42 [1] : vector<16x256xf32> to vector<16xf32>
    %139 = vector.shape_cast %138 : vector<16xf32> to vector<16x1xf32>
    %cst_43 = arith.constant 2.560000e+02 : f32
    %140 = vector.broadcast %cst_43 : f32 to vector<16x1xf32>
    %141 = arith.divf %139, %140 : vector<16x1xf32>
    %142 = arith.mulf %136, %136 : vector<16x1xf32>
    %143 = arith.subf %141, %142 : vector<16x1xf32>
    %144 = vector.broadcast %136 : vector<16x1xf32> to vector<16x256xf32>
    %145 = arith.subf %132, %144 : vector<16x256xf32>
    %cst_44 = arith.constant 9.99999974E-6 : f32
    %146 = vector.broadcast %cst_44 : f32 to vector<16x1xf32>
    %147 = arith.addf %143, %146 : vector<16x1xf32>
    %148 = math.rsqrt %147 : vector<16x1xf32>
    %149 = vector.broadcast %148 : vector<16x1xf32> to vector<16x256xf32>
    %150 = arith.mulf %145, %149 : vector<16x256xf32>
    %151 = vector.broadcast %7 : vector<1x256xf32> to vector<16x256xf32>
    %152 = arith.mulf %150, %151 : vector<16x256xf32>
    %153 = vector.broadcast %8 : vector<1x256xf32> to vector<16x256xf32>
    %154 = arith.addf %152, %153 : vector<16x256xf32>
    %c0_45 = arith.constant 0 : index
    %c0_46 = arith.constant 0 : index
    %155 = vector.load %arg4[%c0_45, %c0_46] : memref<256x1024xf32, #tpu.memory_space<vmem>>, vector<256x1024xf32>
    %cst_47 = arith.constant dense<0.000000e+00> : vector<16x1024xf32>
    %156 = tpu.matmul %154, %155, %cst_47 {dimension_numbers = #tpu.dot_dimension_numbers<[1], [0], [0], [1], [0, 0, 1, 1], [], []>} : vector<16x256xf32>, vector<256x1024xf32>, vector<16x1024xf32> -> vector<16x1024xf32>
    %c0_48 = arith.constant 0 : index
    %c0_49 = arith.constant 0 : index
    %157 = vector.load %arg7[%c0_48, %c0_49] : memref<1x1024xf32, #tpu.memory_space<vmem>>, vector<1x1024xf32>
    %158 = vector.broadcast %157 : vector<1x1024xf32> to vector<16x1024xf32>
    %159 = arith.addf %156, %158 : vector<16x1024xf32>
    %cst_50 = arith.constant 0.000000e+00 : f32
    %160 = vector.broadcast %cst_50 : f32 to vector<16x1024xf32>
    %161 = arith.maximumf %159, %160 : vector<16x1024xf32>
    %c0_51 = arith.constant 0 : index
    %c0_52 = arith.constant 0 : index
    %162 = vector.load %arg5[%c0_51, %c0_52] : memref<1024x256xf32, #tpu.memory_space<vmem>>, vector<1024x256xf32>
    %cst_53 = arith.constant dense<0.000000e+00> : vector<16x256xf32>
    %163 = tpu.matmul %161, %162, %cst_53 {dimension_numbers = #tpu.dot_dimension_numbers<[1], [0], [0], [1], [0, 0, 1, 1], [], []>} : vector<16x1024xf32>, vector<1024x256xf32>, vector<16x256xf32> -> vector<16x256xf32>
    %164 = vector.broadcast %4 : vector<1x256xf32> to vector<16x256xf32>
    %165 = arith.addf %163, %164 : vector<16x256xf32>
    %166 = arith.addf %132, %165 : vector<16x256xf32>
    %167 = vector.shape_cast %166 : vector<16x256xf32> to vector<1x16x256xf32>
    %c0_54 = arith.constant 0 : index
    %c0_55 = arith.constant 0 : index
    %c0_56 = arith.constant 0 : index
    %168 = vector.load %arg8[%c0_54, %c0_55, %c0_56] : memref<1x16x256xf32, #tpu.memory_space<vmem>>, vector<1x16x256xf32>
    tpu.vector_store %arg8[%c0_54, %c0_55, %c0_56], %167 {strides = array<i32>} : memref<1x16x256xf32, #tpu.memory_space<vmem>>, vector<1x16x256xf32>,
    return
  }
  func.func @transform_0(%arg0: i32) -> (i32, i32, i32) {
    %c0_i32 = arith.constant 0 : i32
    %c0_i32_0 = arith.constant 0 : i32
    %c0_i32_1 = arith.constant 0 : i32
    return %arg0, %c0_i32, %c0_i32_0 : i32, i32, i32
  }
  func.func @transform_1(%arg0: i32) -> (i32, i32) {
    %c0_i32 = arith.constant 0 : i32
    %c0_i32_0 = arith.constant 0 : i32
    %c0_i32_1 = arith.constant 0 : i32
    return %c0_i32, %c0_i32_0 : i32, i32
  }
  func.func @transform_2(%arg0: i32) -> (i32, i32) {
    %c0_i32 = arith.constant 0 : i32
    %c0_i32_0 = arith.constant 0 : i32
    %c0_i32_1 = arith.constant 0 : i32
    return %c0_i32, %c0_i32_0 : i32, i32
  }
  func.func @transform_3(%arg0: i32) -> (i32, i32) {
    %c0_i32 = arith.constant 0 : i32
    %c0_i32_0 = arith.constant 0 : i32
    %c0_i32_1 = arith.constant 0 : i32
    return %c0_i32, %c0_i32_0 : i32, i32
  }
  func.func @transform_4(%arg0: i32) -> (i32, i32) {
    %c0_i32 = arith.constant 0 : i32
    %c0_i32_0 = arith.constant 0 : i32
    %c0_i32_1 = arith.constant 0 : i32
    return %c0_i32, %c0_i32_0 : i32, i32
  }
  func.func @transform_5(%arg0: i32) -> (i32, i32) {
    %c0_i32 = arith.constant 0 : i32
    %c0_i32_0 = arith.constant 0 : i32
    %c0_i32_1 = arith.constant 0 : i32
    return %c0_i32, %c0_i32_0 : i32, i32
  }
  func.func @transform_6(%arg0: i32) -> (i32, i32) {
    %c0_i32 = arith.constant 0 : i32
    %c0_i32_0 = arith.constant 0 : i32
    %c0_i32_1 = arith.constant 0 : i32
    return %c0_i32, %c0_i32_0 : i32, i32
  }
  func.func @transform_7(%arg0: i32) -> (i32, i32, i32) {
    %c0_i32 = arith.constant 0 : i32
    %c0_i32_0 = arith.constant 0 : i32
    %c0_i32_1 = arith.constant 0 : i32
    return %arg0, %c0_i32, %c0_i32_0 : i32, i32, i32
  }
}

</mosaic_0001>

<llo_original>
// kernel: tpu_custom_call.1
$region0: #{tpu_custom_call.1}
  #allocation0 [shape = 'u32[]', space=smem, size = 0x4, offset = 0x4, fixed_abs, tag = 'smem constant byte address 0x4 - core index']
  #allocation1 [shape = 'u32[72,128]{1,0:T(1,128)}', space=vmem, size = 0x9000, scoped, tag = 'internal scratch']
  %s0 = inlined_call_operand.hbm [shape: f32[2,16,256], index: 0, kind: input, shape index: {}]
  %s1 = inlined_call_operand.hbm [shape: f32[256,768], index: 1, kind: input, shape index: {}]
  %s2 = inlined_call_operand.hbm [shape: f32[256,256], index: 2, kind: input, shape index: {}]
  %s3 = inlined_call_operand.hbm [shape: f32[256,1024], index: 3, kind: input, shape index: {}]
  %s4 = inlined_call_operand.hbm [shape: f32[1024,256], index: 4, kind: input, shape index: {}]
  %s5 = inlined_call_operand.hbm [shape: f32[6,256], index: 5, kind: input, shape index: {}]
  %s6 = inlined_call_operand.hbm [shape: f32[1,1024], index: 6, kind: input, shape index: {}]
  %s7 = inlined_call_operand.hbm [shape: f32[2,16,256], index: 7, kind: output, shape index: {}]
  %s8 = sld [smem:[#allocation0]]
  $region89: #{tpu_custom_call.1} parent=0
    _
  %s10 = ssub.s32 1, %s8
  %s11 = scalar_select 0, %s10, %s8
  $region1: #{tpu_custom_call.1} parent=0
    #allocation2 [shape = 'u8[32768]{0}', space=vmem, size = 0x8000, scoped, tag = 'input window, operand 0']
    #allocation3 [shape = 's32[2]{0}', space=sflag, size = 0x8, scoped, tag = 'scoped memory for tpu_custom_call.1']
    #allocation4 [shape = 's32[2]{0}', space=sflag, size = 0x8, scoped, tag = 'scoped memory for tpu_custom_call.1']
    #allocation5 [shape = 'u8[786432]{0}', space=vmem, size = 0xc0000, scoped, tag = 'input window, operand 1, single buffered']
    #allocation6 [shape = 's32[1]{0}', space=sflag, size = 0x4, scoped, tag = 'scoped memory for tpu_custom_call.1']
    #allocation7 [shape = 'u8[262144]{0}', space=vmem, size = 0x40000, scoped, tag = 'input window, operand 2, single buffered']
    #allocation8 [shape = 'u8[1048576]{0}', space=vmem, size = 0x100000, scoped, tag = 'input window, operand 3, single buffered']
    #allocation9 [shape = 's32[1]{0}', space=sflag, size = 0x4, scoped, tag = 'scoped memory for tpu_custom_call.1']
    #allocation10 [shape = 'u8[1048576]{0}', space=vmem, size = 0x100000, scoped, tag = 'input window, operand 4, single buffered']
    #allocation11 [shape = 'u8[8192]{0}', space=vmem, size = 0x2000, scoped, tag = 'input window, operand 5, single buffered']
    #allocation12 [shape = 's32[1]{0}', space=sflag, size = 0x4, scoped, tag = 'scoped memory for tpu_custom_call.1']
    #allocation13 [shape = 'u8[4096]{0}', space=vmem, size = 0x1000, scoped, tag = 'input window, operand 6, single buffered']
    #allocation14 [shape = 'u8[32768]{0}', space=vmem, size = 0x8000, scoped, tag = 'output window, operand 0']
    %12 = vsyncpa [#allocation3], 0
    %s13 = scalar_lea.sflag [#allocation3], 1
    %14 = vsyncpa %s13, 0
    %15 = vsyncpa [#allocation6], 0
    %16 = vsyncpa [#allocation9], 0
    %17 = vsyncpa [#allocation12], 0
    %18 = vsyncpa [#allocation4], 0
    %s19 = scalar_lea.sflag [#allocation4], 1
    %20 = vsyncpa %s19, 0
    loop: start=0, step=1, limit=4
    $region2: #{tpu_custom_call.1} parent=1 // loop_pre_header
      _
    $region3: #{tpu_custom_call.1} parent=1 // loop_header
      %s22 = sphi 0, %s26
      %p23 = scmp.ge.s32.totalorder %s22, 4
      %s32 = sphi 0, %s34
      %s35 = sphi 0, %s32
      %s36 = sphi 0, %s35
      %s52 = sphi 0, %s36
      %s56 = sphi 0, %s56
      %s58 = sphi 0, %s56
      %s59 = sphi 0, %s58
      %s73 = sphi 0, %s59
      %s77 = sphi 0, %s77
      %s79 = sphi 0, %s77
      %s80 = sphi 0, %s79
      %s94 = sphi 0, %s80
      %s98 = sphi 0, %s98
      %s100 = sphi 0, %s98
      %s101 = sphi 0, %s100
      %s115 = sphi 0, %s101
      %s119 = sphi 0, %s119
      %s121 = sphi 0, %s119
      %s122 = sphi 0, %s121
      %s136 = sphi 0, %s122
      %s140 = sphi 0, %s140
      %s142 = sphi 0, %s140
      %s143 = sphi 0, %s142
      %s157 = sphi 0, %s143
      %s161 = sphi 0, %s161
      %s163 = sphi 0, %s161
      %s164 = sphi 0, %s163
      %s178 = sphi 0, %s164
      %s184 = sphi 0, %s186
      %s187 = sphi 0, %s184
      %s188 = sphi 0, %s187
      %s204 = sphi 0, %s188
    $region4: #{tpu_custom_call.1} parent=1 // loop_header_branch
      %25 = sbr.rel (%p23) target = $region8
    $region5: #{tpu_custom_call.1} parent=1 // loop_body
      %s27 = ssub.s32 %s22, 1
      %s28 = ssub.s32 %s22, 2
      %s29 = sadd.s32 %s22, 1
      %s30 = ssub.s32 %s22, %s29
      %p31 = scmp.eq.s32.totalorder %s30, 0
      %s33 = sadd.s32 %s32, 1
      %s34 = scalar_select %p31, %s32, %s33
      %p37 = pneg %p31
      %p38 = scmp.eq.s32.totalorder %s22, 1
      %p39 = por %p37, %p38
      %p40 = scmp.ne.s32.totalorder %s32, %s35
      %p41 = scmp.eq.s32.totalorder %s22, 0
      %p42 = por %p40, %p41
      %p43 = scmp.ne.s32.totalorder %s32, %s35
      %p44 = scmp.eq.s32.totalorder %s27, 1
      %p45 = por %p43, %p44
      %p46 = scmp.ne.s32.totalorder %s35, %s36
      %p47 = scmp.eq.s32.totalorder %s27, 0
      %p48 = por %p46, %p47
      %p49 = scmp.ne.s32.totalorder %s35, %s36
      %p50 = scmp.eq.s32.totalorder %s28, 1
      %p51 = por %p49, %p50
      %p53 = scmp.ne.s32.totalorder %s36, %s52
      %p54 = scmp.eq.s32.totalorder %s28, 0
      %p55 = por %p53, %p54
      %s57 = sadd.s32 %s56, 1
      %p60 = scmp.eq.s32.totalorder %s22, 1
      %p61 = scmp.ne.s32.totalorder %s56, %s58
      %p62 = scmp.eq.s32.totalorder %s22, 0
      %p63 = por %p61, %p62
      %p64 = scmp.ne.s32.totalorder %s56, %s58
      %p65 = scmp.eq.s32.totalorder %s27, 1
      %p66 = por %p64, %p65
      %p67 = scmp.ne.s32.totalorder %s58, %s59
      %p68 = scmp.eq.s32.totalorder %s27, 0
      %p69 = por %p67, %p68
      %p70 = scmp.ne.s32.totalorder %s58, %s59
      %p71 = scmp.eq.s32.totalorder %s28, 1
      %p72 = por %p70, %p71
      %p74 = scmp.ne.s32.totalorder %s59, %s73
      %p75 = scmp.eq.s32.totalorder %s28, 0
      %p76 = por %p74, %p75
      %s78 = sadd.s32 %s77, 1
      %p81 = scmp.eq.s32.totalorder %s22, 1
      %p82 = scmp.ne.s32.totalorder %s77, %s79
      %p83 = scmp.eq.s32.totalorder %s22, 0
      %p84 = por %p82, %p83
      %p85 = scmp.ne.s32.totalorder %s77, %s79
      %p86 = scmp.eq.s32.totalorder %s27, 1
      %p87 = por %p85, %p86
      %p88 = scmp.ne.s32.totalorder %s79, %s80
      %p89 = scmp.eq.s32.totalorder %s27, 0
      %p90 = por %p88, %p89
      %p91 = scmp.ne.s32.totalorder %s79, %s80
      %p92 = scmp.eq.s32.totalorder %s28, 1
      %p93 = por %p91, %p92
      %p95 = scmp.ne.s32.totalorder %s80, %s94
      %p96 = scmp.eq.s32.totalorder %s28, 0
      %p97 = por %p95, %p96
      %s99 = sadd.s32 %s98, 1
      %p102 = scmp.eq.s32.totalorder %s22, 1
      %p103 = scmp.ne.s32.totalorder %s98, %s100
      %p104 = scmp.eq.s32.totalorder %s22, 0
      %p105 = por %p103, %p104
      %p106 = scmp.ne.s32.totalorder %s98, %s100
      %p107 = scmp.eq.s32.totalorder %s27, 1
      %p108 = por %p106, %p107
      %p109 = scmp.ne.s32.totalorder %s100, %s101
      %p110 = scmp.eq.s32.totalorder %s27, 0
      %p111 = por %p109, %p110
      %p112 = scmp.ne.s32.totalorder %s100, %s101
      %p113 = scmp.eq.s32.totalorder %s28, 1
      %p114 = por %p112, %p113
      %p116 = scmp.ne.s32.totalorder %s101, %s115
      %p117 = scmp.eq.s32.totalorder %s28, 0
      %p118 = por %p116, %p117
      %s120 = sadd.s32 %s119, 1
      %p123 = scmp.eq.s32.totalorder %s22, 1
      %p124 = scmp.ne.s32.totalorder %s119, %s121
      %p125 = scmp.eq.s32.totalorder %s22, 0
      %p126 = por %p124, %p125
      %p127 = scmp.ne.s32.totalorder %s119, %s121
      %p128 = scmp.eq.s32.totalorder %s27, 1
      %p129 = por %p127, %p128
      %p130 = scmp.ne.s32.totalorder %s121, %s122
      %p131 = scmp.eq.s32.totalorder %s27, 0
      %p132 = por %p130, %p131
      %p133 = scmp.ne.s32.totalorder %s121, %s122
      %p134 = scmp.eq.s32.totalorder %s28, 1
      %p135 = por %p133, %p134
      %p137 = scmp.ne.s32.totalorder %s122, %s136
      %p138 = scmp.eq.s32.totalorder %s28, 0
      %p139 = por %p137, %p138
      %s141 = sadd.s32 %s140, 1
      %p144 = scmp.eq.s32.totalorder %s22, 1
      %p145 = scmp.ne.s32.totalorder %s140, %s142
      %p146 = scmp.eq.s32.totalorder %s22, 0
      %p147 = por %p145, %p146
      %p148 = scmp.ne.s32.totalorder %s140, %s142
      %p149 = scmp.eq.s32.totalorder %s27, 1
      %p150 = por %p148, %p149
      %p151 = scmp.ne.s32.totalorder %s142, %s143
      %p152 = scmp.eq.s32.totalorder %s27, 0
      %p153 = por %p151, %p152
      %p154 = scmp.ne.s32.totalorder %s142, %s143
      %p155 = scmp.eq.s32.totalorder %s28, 1
      %p156 = por %p154, %p155
      %p158 = scmp.ne.s32.totalorder %s143, %s157
      %p159 = scmp.eq.s32.totalorder %s28, 0
      %p160 = por %p158, %p159
      %s162 = sadd.s32 %s161, 1
      %p165 = scmp.eq.s32.totalorder %s22, 1
      %p166 = scmp.ne.s32.totalorder %s161, %s163
      %p167 = scmp.eq.s32.totalorder %s22, 0
      %p168 = por %p166, %p167
      %p169 = scmp.ne.s32.totalorder %s161, %s163
      %p170 = scmp.eq.s32.totalorder %s27, 1
      %p171 = por %p169, %p170
      %p172 = scmp.ne.s32.totalorder %s163, %s164
      %p173 = scmp.eq.s32.totalorder %s27, 0
      %p174 = por %p172, %p173
      %p175 = scmp.ne.s32.totalorder %s163, %s164
      %p176 = scmp.eq.s32.totalorder %s28, 1
      %p177 = por %p175, %p176
      %p179 = scmp.ne.s32.totalorder %s164, %s178
      %p180 = scmp.eq.s32.totalorder %s28, 0
      %p181 = por %p179, %p180
      %s182 = ssub.s32 %s22, %s29
      %p183 = scmp.eq.s32.totalorder %s182, 0
      %s185 = sadd.s32 %s184, 1
      %s186 = scalar_select %p183, %s184, %s185
      %p189 = pneg %p183
      %p190 = scmp.eq.s32.totalorder %s22, 1
      %p191 = por %p189, %p190
      %p192 = scmp.ne.s32.totalorder %s184, %s187
      %p193 = scmp.eq.s32.totalorder %s22, 0
      %p194 = por %p192, %p193
      %p195 = scmp.ne.s32.totalorder %s184, %s187
      %p196 = scmp.eq.s32.totalorder %s27, 1
      %p197 = por %p195, %p196
      %p198 = scmp.ne.s32.totalorder %s187, %s188
      %p199 = scmp.eq.s32.totalorder %s27, 0
      %p200 = por %p198, %p199
      %p201 = scmp.ne.s32.totalorder %s187, %s188
      %p202 = scmp.eq.s32.totalorder %s28, 1
      %p203 = por %p201, %p202
      %p205 = scmp.ne.s32.totalorder %s188, %s204
      %p206 = scmp.eq.s32.totalorder %s28, 0
      %p207 = por %p205, %p206
      %p208 = scmp.le.s32.totalorder 1, %s22
      %p209 = scmp.lt.s32.totalorder %s22, 3
      %p210 = pnand %p208, %p209
      %p211 = pneg %p210
      // Predicated region
      $region9: #{tpu_custom_call.1} parent=5 // pred_check
        _
      $region10: #{tpu_custom_call.1} parent=5 // pred_check_branch
        %213 = sbr.rel (%p210) target = $region12
      $region11: #{tpu_custom_call.1} parent=5 // pred_region
        %s214 = ssub.s32 %s22, 1
        // Predicated region
        $region13: #{tpu_custom_call.1} parent=11 // pred_check
          %p215 = pneg %p69
        $region14: #{tpu_custom_call.1} parent=11 // pred_check_branch
          %217 = sbr.rel (%p215) target = $region16
        $region15: #{tpu_custom_call.1} parent=11 // pred_region
          %219 = vsyncadd [#allocation6], 0
          %s220 = sshll.u32 %s1, 4
          %s221 = int_to_ptr.hbm [resolvable:$true] %s220
          %s222 = sshll.u32 [#allocation5], 4
          %s223 = int_to_ptr.vmem [resolvable:$true] %s222
          %228 = dma.hbm_to_vmem [thread:$0]  %s221, 24576, %s223, [#allocation6], 768, 768, 48
        $region16: #{tpu_custom_call.1} parent=11 // pred_fallthru
          _
        // Predicated region
        $region17: #{tpu_custom_call.1} parent=11 // pred_check
          %p229 = pneg %p90
        $region18: #{tpu_custom_call.1} parent=11 // pred_check_branch
          %231 = sbr.rel (%p229) target = $region20
        $region19: #{tpu_custom_call.1} parent=11 // pred_region
          %233 = vsyncadd [#allocation6], 0
          %s234 = sshll.u32 %s2, 4
          %s235 = int_to_ptr.hbm [resolvable:$true] %s234
          %s236 = sshll.u32 [#allocation7], 4
          %s237 = int_to_ptr.vmem [resolvable:$true] %s236
          %242 = dma.hbm_to_vmem [thread:$0]  %s235, 8192, %s237, [#allocation6], 256, 256, 16
        $region20: #{tpu_custom_call.1} parent=11 // pred_fallthru
          _
        // Predicated region
        $region21: #{tpu_custom_call.1} parent=11 // pred_check
          %p243 = pneg %p111
        $region22: #{tpu_custom_call.1} parent=11 // pred_check_branch
          %245 = sbr.rel (%p243) target = $region24
        $region23: #{tpu_custom_call.1} parent=11 // pred_region
          %247 = vsyncadd [#allocation9], 0
          %s248 = sshll.u32 %s3, 4
          %s249 = int_to_ptr.hbm [resolvable:$true] %s248
          %s250 = sshll.u32 [#allocation8], 4
          %s251 = int_to_ptr.vmem [resolvable:$true] %s250
          %256 = dma.hbm_to_vmem [thread:$0]  %s249, 32768, %s251, [#allocation9], 1024, 1024, 64
        $region24: #{tpu_custom_call.1} parent=11 // pred_fallthru
          _
        // Predicated region
        $region25: #{tpu_custom_call.1} parent=11 // pred_check
          %p257 = pneg %p132
        $region26: #{tpu_custom_call.1} parent=11 // pred_check_branch
          %259 = sbr.rel (%p257) target = $region28
        $region27: #{tpu_custom_call.1} parent=11 // pred_region
          %261 = vsyncadd [#allocation9], 0
          %s262 = sshll.u32 %s4, 4
          %s263 = int_to_ptr.hbm [resolvable:$true] %s262
          %s264 = sshll.u32 [#allocation10], 4
          %s265 = int_to_ptr.vmem [resolvable:$true] %s264
          %270 = dma.hbm_to_vmem [thread:$0]  %s263, 32768, %s265, [#allocation9], 256, 256, 16
        $region28: #{tpu_custom_call.1} parent=11 // pred_fallthru
          _
        // Predicated region
        $region29: #{tpu_custom_call.1} parent=11 // pred_check
          %p271 = pneg %p153
        $region30: #{tpu_custom_call.1} parent=11 // pred_check_branch
          %273 = sbr.rel (%p271) target = $region32
        $region31: #{tpu_custom_call.1} parent=11 // pred_region
          %275 = vsyncadd [#allocation12], 0
          %s277 = sshll.u32 %s5, 4
          %s278 = int_to_ptr.hbm [resolvable:$true] %s277
          %s279 = sshll.u32 [#allocation11], 4
          %s280 = int_to_ptr.vmem [resolvable:$true] %s279
          %282 = dma.hbm_to_vmem [thread:$0]  %s278, 256, %s280, [#allocation12]
        $region32: #{tpu_custom_call.1} parent=11 // pred_fallthru
          _
        // Predicated region
        $region33: #{tpu_custom_call.1} parent=11 // pred_check
          %p283 = pneg %p174
        $region34: #{tpu_custom_call.1} parent=11 // pred_check_branch
          %285 = sbr.rel (%p283) target = $region36
        $region35: #{tpu_custom_call.1} parent=11 // pred_region
          %287 = vsyncadd [#allocation12], 0
          %s289 = sshll.u32 %s6, 4
          %s290 = int_to_ptr.hbm [resolvable:$true] %s289
          %s291 = sshll.u32 [#allocation13], 4
          %s292 = int_to_ptr.vmem [resolvable:$true] %s291
          %294 = dma.hbm_to_vmem [thread:$0]  %s290, 128, %s292, [#allocation12]
        $region36: #{tpu_custom_call.1} parent=11 // pred_fallthru
          _
      $region12: #{tpu_custom_call.1} parent=5 // pred_fallthru
        _
      %p295 = scmp.lt.s32.totalorder %s22, 2
      // Predicated region
      $region37: #{tpu_custom_call.1} parent=5 // pred_check
        %p296 = pneg %p295
      $region38: #{tpu_custom_call.1} parent=5 // pred_check_branch
        %298 = sbr.rel (%p296) target = $region40
      $region39: #{tpu_custom_call.1} parent=5 // pred_region
        // Predicated region
        $region41: #{tpu_custom_call.1} parent=39 // pred_check
          %p299 = pneg %p42
        $region42: #{tpu_custom_call.1} parent=39 // pred_check_branch
          %301 = sbr.rel (%p299) target = $region44
        $region43: #{tpu_custom_call.1} parent=39 // pred_region
          %s302 = sand.u32 %s32, 1
          %s303 = scalar_lea.sflag [#allocation3], %s302
          %s304 = sand.u32 %s32, 1
          %s305 = smul.addr %s304, 32
          %s306 = scalar_lea.vmem [#allocation2], %s305
          %308 = vsyncadd %s303, 0
          %s309 = smul.addr %s22, 4
          %s310 = smul.addr %s309, 8
          %s311 = scalar_lea.hbm %s0, %s310
          %s312 = sshll.u32 %s311, 4
          %s313 = int_to_ptr.hbm [resolvable:$true] %s312
          %s314 = sshll.u32 %s306, 4
          %s315 = int_to_ptr.vmem [resolvable:$true] %s314
          %320 = dma.hbm_to_vmem [thread:$0]  %s313, 512, %s315, %s303, 256, 256, 16
        $region44: #{tpu_custom_call.1} parent=39 // pred_fallthru
          _
      $region40: #{tpu_custom_call.1} parent=5 // pred_fallthru
        _
      %p321 = scmp.le.s32.totalorder 1, %s22
      %p322 = scmp.lt.s32.totalorder %s22, 3
      %p323 = pnand %p321, %p322
      %p324 = pneg %p323
      // Predicated region
      $region45: #{tpu_custom_call.1} parent=5 // pred_check
        _
      $region46: #{tpu_custom_call.1} parent=5 // pred_check_branch
        %326 = sbr.rel (%p323) target = $region48
      $region47: #{tpu_custom_call.1} parent=5 // pred_region
        %s327 = ssub.s32 %s22, 1
        %s328 = sand.u32 %s35, 1
        %s329 = scalar_lea.sflag [#allocation3], %s328
        %s330 = sand.u32 %s35, 1
        %s331 = smul.addr %s330, 32
        %s332 = scalar_lea.vmem [#allocation2], %s331
        // Predicated region
        $region49: #{tpu_custom_call.1} parent=47 // pred_check
          %p333 = pneg %p48
        $region50: #{tpu_custom_call.1} parent=47 // pred_check_branch
          %335 = sbr.rel (%p333) target = $region52
        $region51: #{tpu_custom_call.1} parent=47 // pred_region
          %337 = dma.done %s329, 512
        $region52: #{tpu_custom_call.1} parent=47 // pred_fallthru
          _
        // Predicated region
        $region53: #{tpu_custom_call.1} parent=47 // pred_check
          %p338 = pneg %p69
        $region54: #{tpu_custom_call.1} parent=47 // pred_check_branch
          %340 = sbr.rel (%p338) target = $region56
        $region55: #{tpu_custom_call.1} parent=47 // pred_region
          %342 = dma.done [#allocation6], 24576
        $region56: #{tpu_custom_call.1} parent=47 // pred_fallthru
          _
        // Predicated region
        $region57: #{tpu_custom_call.1} parent=47 // pred_check
          %p343 = pneg %p90
        $region58: #{tpu_custom_call.1} parent=47 // pred_check_branch
          %345 = sbr.rel (%p343) target = $region60
        $region59: #{tpu_custom_call.1} parent=47 // pred_region
          %347 = dma.done [#allocation6], 8192
        $region60: #{tpu_custom_call.1} parent=47 // pred_fallthru
          _
        // Predicated region
        $region61: #{tpu_custom_call.1} parent=47 // pred_check
          %p348 = pneg %p111
        $region62: #{tpu_custom_call.1} parent=47 // pred_check_branch
          %350 = sbr.rel (%p348) target = $region64
        $region63: #{tpu_custom_call.1} parent=47 // pred_region
          %352 = dma.done [#allocation9], 32768
        $region64: #{tpu_custom_call.1} parent=47 // pred_fallthru
          _
        // Predicated region
        $region65: #{tpu_custom_call.1} parent=47 // pred_check
          %p353 = pneg %p132
        $region66: #{tpu_custom_call.1} parent=47 // pred_check_branch
          %355 = sbr.rel (%p353) target = $region68
        $region67: #{tpu_custom_call.1} parent=47 // pred_region
          %357 = dma.done [#allocation9], 32768
        $region68: #{tpu_custom_call.1} parent=47 // pred_fallthru
          _
        // Predicated region
        $region69: #{tpu_custom_call.1} parent=47 // pred_check
          %p358 = pneg %p153
        $region70: #{tpu_custom_call.1} parent=47 // pred_check_branch
          %360 = sbr.rel (%p358) target = $region72
        $region71: #{tpu_custom_call.1} parent=47 // pred_region
          %362 = dma.done [#allocation12], 256
        $region72: #{tpu_custom_call.1} parent=47 // pred_fallthru
          _
        // Predicated region
        $region73: #{tpu_custom_call.1} parent=47 // pred_check
          %p363 = pneg %p174
        $region74: #{tpu_custom_call.1} parent=47 // pred_check_branch
          %365 = sbr.rel (%p363) target = $region76
        $region75: #{tpu_custom_call.1} parent=47 // pred_region
          %367 = dma.done [#allocation12], 128
        $region76: #{tpu_custom_call.1} parent=47 // pred_fallthru
          _
        %s368 = sand.u32 %s35, 1
        %s369 = scalar_lea.sflag [#allocation3], %s368
        %s370 = sand.u32 %s35, 1
        %s371 = smul.addr %s370, 32
        %s372 = scalar_lea.vmem [#allocation2], %s371
        %p373 = pneg %p48
        %p374 = pneg %p45
        %p375 = pneg %p69
        %p376 = pneg %p66
        %p377 = pneg %p90
        %p378 = pneg %p87
        %p379 = pneg %p111
        %p380 = pneg %p108
        %p381 = pneg %p132
        %p382 = pneg %p129
        %p383 = pneg %p153
        %p384 = pneg %p150
        %p385 = pneg %p174
        %p386 = pneg %p171
        %p387 = pneg %p200
        %p388 = pneg %p197
        %s389 = sand.u32 %s187, 1
        %s390 = scalar_lea.sflag [#allocation4], %s389
        %s391 = sand.u32 %s187, 1
        %s392 = smul.addr %s391, 32
        %s393 = scalar_lea.vmem [#allocation14], %s392
        %v394 = vld [vmem:[%s332] sm:$0xff]
        %v395 = vld [vmem:[%s332 + $0x8] sm:$0xff]
        %v396 = vld [vmem:[%s332 + $0x10] sm:$0xff]
        %v397 = vld [vmem:[%s332 + $0x18] sm:$0xff]
        %v398 = vld [vmem:[#allocation11] sm:$0x3f]
        %v399 = vld [vmem:[#allocation11 + $0x8] sm:$0x3f]
        %v400 = vadd.f32 %v394, %v395
        %401 = vadd.xlane.f32.xlu0 %v400
        %v402 = vpop.xlane.xlu0 %401
        %v403 = vadd.f32 %v396, %v397
        %404 = vadd.xlane.f32.xlu0 %v403
        %v405 = vpop.xlane.xlu0 %404
        %v406 = vrcp.pop 256.0
        %v407 = vmul.f32 256.0, %v406
        %v408 = vsub.f32 1.0, %v407
        %v409 = vmul.f32 %v406, %v408
        %v410 = vadd.f32 %v406, %v409
        %vm411 = vweird.f32 %v406
        %v412 = vsel %vm411, %v406, %v410
        %v413 = vmul.f32 %v402, %v412
        %v414 = vmul.f32 %v405, %v412
        %v415 = vmul.f32 %v394, %v394
        %v416 = vmul.f32 %v395, %v395
        %v417 = vmul.f32 %v396, %v396
        %v418 = vmul.f32 %v397, %v397
        %v419 = vadd.f32 %v415, %v416
        %420 = vadd.xlane.f32.xlu0 %v419
        %v421 = vpop.xlane.xlu0 %420
        %v422 = vadd.f32 %v417, %v418
        %423 = vadd.xlane.f32.xlu0 %v422
        %v424 = vpop.xlane.xlu0 %423
        %v425 = vmul.f32 %v421, %v412
        %v426 = vmul.f32 %v424, %v412
        %v427 = vmul.f32 %v413, %v413
        %v428 = vmul.f32 %v414, %v414
        %v429 = vsub.f32 %v425, %v427
        %v430 = vsub.f32 %v426, %v428
        %v431 = vsub.f32 %v394, %v413
        %v432 = vsub.f32 %v395, %v413
        %v433 = vsub.f32 %v396, %v414
        %v434 = vsub.f32 %v397, %v414
        %v435 = vadd.f32 %v429, 1e-05
        %v436 = vadd.f32 %v430, 1e-05
        %v437 = vrsqrt.pop %v435
        %v438 = vmul.f32 %v437, %v435
        %v439 = vmul.f32 %v438, %v437
        %v440 = vmul.f32 0.5, %v439
        %v441 = vsub.f32 1.5, %v440
        %v442 = vmul.f32 %v437, %v441
        %vm443 = vweird.f32 %v435
        %vm444 = vweird.f32 %v437
        %vm445 = vmor %vm443, %vm444
        %v446 = vsel %vm445, %v437, %v442
        %v447 = vrsqrt.pop %v436
        %v448 = vmul.f32 %v447, %v436
        %v449 = vmul.f32 %v448, %v447
        %v450 = vmul.f32 0.5, %v449
        %v451 = vsub.f32 1.5, %v450
        %v452 = vmul.f32 %v447, %v451
        %vm453 = vweird.f32 %v436
        %vm454 = vweird.f32 %v447
        %vm455 = vmor %vm453, %vm454
        %v456 = vsel %vm455, %v447, %v452
        %v457 = vmul.f32 %v431, %v446
        %v458 = vmul.f32 %v432, %v446
        %v459 = vmul.f32 %v433, %v456
        %v460 = vmul.f32 %v434, %v456
        %v461 = vperm.slane %v398, 2
        %v462 = vperm.slane %v399, 2
        %v463 = vmul.f32 %v457, %v461
        %v464 = vmul.f32 %v458, %v462
        %v465 = vmul.f32 %v459, %v461
        %v466 = vmul.f32 %v460, %v462
        %v467 = vperm.slane %v398, 3
        %v468 = vperm.slane %v399, 3
        %v469 = vadd.f32 %v463, %v467
        %v470 = vadd.f32 %v464, %v468
        %v471 = vadd.f32 %v465, %v467
        %v472 = vadd.f32 %v466, %v468
        %v473 = vld [vmem:[#allocation5] sm:$0xff]
        %v474 = vld [vmem:[#allocation5 + $0x8] sm:$0xff]
        %v475 = vld [vmem:[#allocation5 + $0x10] sm:$0xff]
        %v476 = vld [vmem:[#allocation5 + $0x18] sm:$0xff]
        %v477 = vld [vmem:[#allocation5 + $0x20] sm:$0xff]
        %v478 = vld [vmem:[#allocation5 + $0x28] sm:$0xff]
        %v479 = vld [vmem:[#allocation5 + $0x30] sm:$0xff]
        %v480 = vld [vmem:[#allocation5 + $0x38] sm:$0xff]
        %v481 = vld [vmem:[#allocation5 + $0x40] sm:$0xff]
        %v482 = vld [vmem:[#allocation5 + $0x48] sm:$0xff]
        %v483 = vld [vmem:[#allocation5 + $0x50] sm:$0xff]
        %v484 = vld [vmem:[#allocation5 + $0x58] sm:$0xff]
        %v485 = vld [vmem:[#allocation5 + $0x60] sm:$0xff]
        %v486 = vld [vmem:[#allocation5 + $0x68] sm:$0xff]
        %v487 = vld [vmem:[#allocation5 + $0x70] sm:$0xff]
        %v488 = vld [vmem:[#allocation5 + $0x78] sm:$0xff]
        %v489 = vld [vmem:[#allocation5 + $0x80] sm:$0xff]
        %v490 = vld [vmem:[#allocation5 + $0x88] sm:$0xff]
        %v491 = vld [vmem:[#allocation5 + $0x90] sm:$0xff]
        %v492 = vld [vmem:[#allocation5 + $0x98] sm:$0xff]
        %v493 = vld [vmem:[#allocation5 + $0xa0] sm:$0xff]
        %v494 = vld [vmem:[#allocation5 + $0xa8] sm:$0xff]
        %v495 = vld [vmem:[#allocation5 + $0xb0] sm:$0xff]
        %v496 = vld [vmem:[#allocation5 + $0xb8] sm:$0xff]
        %v497 = vld [vmem:[#allocation5 + $0xc0] sm:$0xff]
        %v498 = vld [vmem:[#allocation5 + $0xc8] sm:$0xff]
        %v499 = vld [vmem:[#allocation5 + $0xd0] sm:$0xff]
        %v500 = vld [vmem:[#allocation5 + $0xd8] sm:$0xff]
        %v501 = vld [vmem:[#allocation5 + $0xe0] sm:$0xff]
        %v502 = vld [vmem:[#allocation5 + $0xe8] sm:$0xff]
        %v503 = vld [vmem:[#allocation5 + $0xf0] sm:$0xff]
        %v504 = vld [vmem:[#allocation5 + $0xf8] sm:$0xff]
        %v505 = vld [vmem:[#allocation5 + $0x100] sm:$0xff]
        %v506 = vld [vmem:[#allocation5 + $0x108] sm:$0xff]
        %v507 = vld [vmem:[#allocation5 + $0x110] sm:$0xff]
        %v508 = vld [vmem:[#allocation5 + $0x118] sm:$0xff]
        %v509 = vld [vmem:[#allocation5 + $0x120] sm:$0xff]
        %v510 = vld [vmem:[#allocation5 + $0x128] sm:$0xff]
        %v511 = vld [vmem:[#allocation5 + $0x130] sm:$0xff]
        %v512 = vld [vmem:[#allocation5 + $0x138] sm:$0xff]
        %v513 = vld [vmem:[#allocation5 + $0x140] sm:$0xff]
        %v514 = vld [vmem:[#allocation5 + $0x148] sm:$0xff]
        %v515 = vld [vmem:[#allocation5 + $0x150] sm:$0xff]
        %v516 = vld [vmem:[#allocation5 + $0x158] sm:$0xff]
        %v517 = vld [vmem:[#allocation5 + $0x160] sm:$0xff]
        %v518 = vld [vmem:[#allocation5 + $0x168] sm:$0xff]
        %v519 = vld [vmem:[#allocation5 + $0x170] sm:$0xff]
        %v520 = vld [vmem:[#allocation5 + $0x178] sm:$0xff]
        %v521 = vld [vmem:[#allocation5 + $0x180] sm:$0xff]
        %v522 = vld [vmem:[#allocation5 + $0x188] sm:$0xff]
        %v523 = vld [vmem:[#allocation5 + $0x190] sm:$0xff]
        %v524 = vld [vmem:[#allocation5 + $0x198] sm:$0xff]
        %v525 = vld [vmem:[#allocation5 + $0x1a0] sm:$0xff]
        %v526 = vld [vmem:[#allocation5 + $0x1a8] sm:$0xff]
        %v527 = vld [vmem:[#allocation5 + $0x1b0] sm:$0xff]
        %v528 = vld [vmem:[#allocation5 + $0x1b8] sm:$0xff]
        %v529 = vld [vmem:[#allocation5 + $0x1c0] sm:$0xff]
        %v530 = vld [vmem:[#allocation5 + $0x1c8] sm:$0xff]
        %v531 = vld [vmem:[#allocation5 + $0x1d0] sm:$0xff]
        %v532 = vld [vmem:[#allocation5 + $0x1d8] sm:$0xff]
        %v533 = vld [vmem:[#allocation5 + $0x1e0] sm:$0xff]
        %v534 = vld [vmem:[#allocation5 + $0x1e8] sm:$0xff]
        %v535 = vld [vmem:[#allocation5 + $0x1f0] sm:$0xff]
        %v536 = vld [vmem:[#allocation5 + $0x1f8] sm:$0xff]
        %v537 = vld [vmem:[#allocation5 + $0x200] sm:$0xff]
        %v538 = vld [vmem:[#allocation5 + $0x208] sm:$0xff]
        %v539 = vld [vmem:[#allocation5 + $0x210] sm:$0xff]
        %v540 = vld [vmem:[#allocation5 + $0x218] sm:$0xff]
        %v541 = vld [vmem:[#allocation5 + $0x220] sm:$0xff]
        %v542 = vld [vmem:[#allocation5 + $0x228] sm:$0xff]
        %v543 = vld [vmem:[#allocation5 + $0x230] sm:$0xff]
        %v544 = vld [vmem:[#allocation5 + $0x238] sm:$0xff]
        %v545 = vld [vmem:[#allocation5 + $0x240] sm:$0xff]
        %v546 = vld [vmem:[#allocation5 + $0x248] sm:$0xff]
        %v547 = vld [vmem:[#allocation5 + $0x250] sm:$0xff]
        %v548 = vld [vmem:[#allocation5 + $0x258] sm:$0xff]
        %v549 = vld [vmem:[#allocation5 + $0x260] sm:$0xff]
        %v550 = vld [vmem:[#allocation5 + $0x268] sm:$0xff]
        %v551 = vld [vmem:[#allocation5 + $0x270] sm:$0xff]
        %v552 = vld [vmem:[#allocation5 + $0x278] sm:$0xff]
        %v553 = vld [vmem:[#allocation5 + $0x280] sm:$0xff]
        %v554 = vld [vmem:[#allocation5 + $0x288] sm:$0xff]
        %v555 = vld [vmem:[#allocation5 + $0x290] sm:$0xff]
        %v556 = vld [vmem:[#allocation5 + $0x298] sm:$0xff]
        %v557 = vld [vmem:[#allocation5 + $0x2a0] sm:$0xff]
        %v558 = vld [vmem:[#allocation5 + $0x2a8] sm:$0xff]
        %v559 = vld [vmem:[#allocation5 + $0x2b0] sm:$0xff]
        %v560 = vld [vmem:[#allocation5 + $0x2b8] sm:$0xff]
        %v561 = vld [vmem:[#allocation5 + $0x2c0] sm:$0xff]
        %v562 = vld [vmem:[#allocation5 + $0x2c8] sm:$0xff]
        %v563 = vld [vmem:[#allocation5 + $0x2d0] sm:$0xff]
        %v564 = vld [vmem:[#allocation5 + $0x2d8] sm:$0xff]
        %v565 = vld [vmem:[#allocation5 + $0x2e0] sm:$0xff]
        %v566 = vld [vmem:[#allocation5 + $0x2e8] sm:$0xff]
        %v567 = vld [vmem:[#allocation5 + $0x2f0] sm:$0xff]
        %v568 = vld [vmem:[#allocation5 + $0x2f8] sm:$0xff]
        %v569 = vld [vmem:[#allocation5 + $0x300] sm:$0xff]
        %v570 = vld [vmem:[#allocation5 + $0x308] sm:$0xff]
        %v571 = vld [vmem:[#allocation5 + $0x310] sm:$0xff]
        %v572 = vld [vmem:[#allocation5 + $0x318] sm:$0xff]
        %v573 = vld [vmem:[#allocation5 + $0x320] sm:$0xff]
        %v574 = vld [vmem:[#allocation5 + $0x328] sm:$0xff]
        %v575 = vld [vmem:[#allocation5 + $0x330] sm:$0xff]
        %v576 = vld [vmem:[#allocation5 + $0x338] sm:$0xff]
        %v577 = vld [vmem:[#allocation5 + $0x340] sm:$0xff]
        %v578 = vld [vmem:[#allocation5 + $0x348] sm:$0xff]
        %v579 = vld [vmem:[#allocation5 + $0x350] sm:$0xff]
        %v580 = vld [vmem:[#allocation5 + $0x358] sm:$0xff]
        %v581 = vld [vmem:[#allocation5 + $0x360] sm:$0xff]
        %v582 = vld [vmem:[#allocation5 + $0x368] sm:$0xff]
        %v583 = vld [vmem:[#allocation5 + $0x370] sm:$0xff]
        %v584 = vld [vmem:[#allocation5 + $0x378] sm:$0xff]
        %v585 = vld [vmem:[#allocation5 + $0x380] sm:$0xff]
        %v586 = vld [vmem:[#allocation5 + $0x388] sm:$0xff]
        %v587 = vld [vmem:[#allocation5 + $0x390] sm:$0xff]
        %v588 = vld [vmem:[#allocation5 + $0x398] sm:$0xff]
        %v589 = vld [vmem:[#allocation5 + $0x3a0] sm:$0xff]
        %v590 = vld [vmem:[#allocation5 + $0x3a8] sm:$0xff]
        %v591 = vld [vmem:[#allocation5 + $0x3b0] sm:$0xff]
        %v592 = vld [vmem:[#allocation5 + $0x3b8] sm:$0xff]
        %v593 = vld [vmem:[#allocation5 + $0x3c0] sm:$0xff]
        %v594 = vld [vmem:[#allocation5 + $0x3c8] sm:$0xff]
        %v595 = vld [vmem:[#allocation5 + $0x3d0] sm:$0xff]
        %v596 = vld [vmem:[#allocation5 + $0x3d8] sm:$0xff]
        %v597 = vld [vmem:[#allocation5 + $0x3e0] sm:$0xff]
        %v598 = vld [vmem:[#allocation5 + $0x3e8] sm:$0xff]
        %v599 = vld [vmem:[#allocation5 + $0x3f0] sm:$0xff]
        %v600 = vld [vmem:[#allocation5 + $0x3f8] sm:$0xff]
        %v601 = vld [vmem:[#allocation5 + $0x400] sm:$0xff]
        %v602 = vld [vmem:[#allocation5 + $0x408] sm:$0xff]
        %v603 = vld [vmem:[#allocation5 + $0x410] sm:$0xff]
        %v604 = vld [vmem:[#allocation5 + $0x418] sm:$0xff]
        %v605 = vld [vmem:[#allocation5 + $0x420] sm:$0xff]
        %v606 = vld [vmem:[#allocation5 + $0x428] sm:$0xff]
        %v607 = vld [vmem:[#allocation5 + $0x430] sm:$0xff]
        %v608 = vld [vmem:[#allocation5 + $0x438] sm:$0xff]
        %v609 = vld [vmem:[#allocation5 + $0x440] sm:$0xff]
        %v610 = vld [vmem:[#allocation5 + $0x448] sm:$0xff]
        %v611 = vld [vmem:[#allocation5 + $0x450] sm:$0xff]
        %v612 = vld [vmem:[#allocation5 + $0x458] sm:$0xff]
        %v613 = vld [vmem:[#allocation5 + $0x460] sm:$0xff]
        %v614 = vld [vmem:[#allocation5 + $0x468] sm:$0xff]
        %v615 = vld [vmem:[#allocation5 + $0x470] sm:$0xff]
        %v616 = vld [vmem:[#allocation5 + $0x478] sm:$0xff]
        %v617 = vld [vmem:[#allocation5 + $0x480] sm:$0xff]
        %v618 = vld [vmem:[#allocation5 + $0x488] sm:$0xff]
        %v619 = vld [vmem:[#allocation5 + $0x490] sm:$0xff]
        %v620 = vld [vmem:[#allocation5 + $0x498] sm:$0xff]
        %v621 = vld [vmem:[#allocation5 + $0x4a0] sm:$0xff]
        %v622 = vld [vmem:[#allocation5 + $0x4a8] sm:$0xff]
        %v623 = vld [vmem:[#allocation5 + $0x4b0] sm:$0xff]
        %v624 = vld [vmem:[#allocation5 + $0x4b8] sm:$0xff]
        %v625 = vld [vmem:[#allocation5 + $0x4c0] sm:$0xff]
        %v626 = vld [vmem:[#allocation5 + $0x4c8] sm:$0xff]
        %v627 = vld [vmem:[#allocation5 + $0x4d0] sm:$0xff]
        %v628 = vld [vmem:[#allocation5 + $0x4d8] sm:$0xff]
        %v629 = vld [vmem:[#allocation5 + $0x4e0] sm:$0xff]
        %v630 = vld [vmem:[#allocation5 + $0x4e8] sm:$0xff]
        %v631 = vld [vmem:[#allocation5 + $0x4f0] sm:$0xff]
        %v632 = vld [vmem:[#allocation5 + $0x4f8] sm:$0xff]
        %v633 = vld [vmem:[#allocation5 + $0x500] sm:$0xff]
        %v634 = vld [vmem:[#allocation5 + $0x508] sm:$0xff]
        %v635 = vld [vmem:[#allocation5 + $0x510] sm:$0xff]
        %v636 = vld [vmem:[#allocation5 + $0x518] sm:$0xff]
        %v637 = vld [vmem:[#allocation5 + $0x520] sm:$0xff]
        %v638 = vld [vmem:[#allocation5 + $0x528] sm:$0xff]
        %v639 = vld [vmem:[#allocation5 + $0x530] sm:$0xff]
        %v640 = vld [vmem:[#allocation5 + $0x538] sm:$0xff]
        %v641 = vld [vmem:[#allocation5 + $0x540] sm:$0xff]
        %v642 = vld [vmem:[#allocation5 + $0x548] sm:$0xff]
        %v643 = vld [vmem:[#allocation5 + $0x550] sm:$0xff]
        %v644 = vld [vmem:[#allocation5 + $0x558] sm:$0xff]
        %v645 = vld [vmem:[#allocation5 + $0x560] sm:$0xff]
        %v646 = vld [vmem:[#allocation5 + $0x568] sm:$0xff]
        %v647 = vld [vmem:[#allocation5 + $0x570] sm:$0xff]
        %v648 = vld [vmem:[#allocation5 + $0x578] sm:$0xff]
        %v649 = vld [vmem:[#allocation5 + $0x580] sm:$0xff]
        %v650 = vld [vmem:[#allocation5 + $0x588] sm:$0xff]
        %v651 = vld [vmem:[#allocation5 + $0x590] sm:$0xff]
        %v652 = vld [vmem:[#allocation5 + $0x598] sm:$0xff]
        %v653 = vld [vmem:[#allocation5 + $0x5a0] sm:$0xff]
        %v654 = vld [vmem:[#allocation5 + $0x5a8] sm:$0xff]
        %v655 = vld [vmem:[#allocation5 + $0x5b0] sm:$0xff]
        %v656 = vld [vmem:[#allocation5 + $0x5b8] sm:$0xff]
        %v657 = vld [vmem:[#allocation5 + $0x5c0] sm:$0xff]
        %v658 = vld [vmem:[#allocation5 + $0x5c8] sm:$0xff]
        %v659 = vld [vmem:[#allocation5 + $0x5d0] sm:$0xff]
        %v660 = vld [vmem:[#allocation5 + $0x5d8] sm:$0xff]
        %v661 = vld [vmem:[#allocation5 + $0x5e0] sm:$0xff]
        %v662 = vld [vmem:[#allocation5 + $0x5e8] sm:$0xff]
        %v663 = vld [vmem:[#allocation5 + $0x5f0] sm:$0xff]
        %v664 = vld [vmem:[#allocation5 + $0x5f8] sm:$0xff]
        %665 = vmatpush.msra.mxu0 %v563
        %666 = vmatpush.msra.mxu0 %v557
        %667 = vmatpush.msra.mxu0 %v551
        %668 = vmatpush.msra.mxu0 %v545
        %669 = vmatpush.msra.mxu0 %v539
        %670 = vmatpush.msra.mxu0 %v533
        %671 = vmatpush.msra.mxu0 %v527
        %672 = vmatpush.msra.mxu0 %v521
        %673 = vmatpush.msra.mxu0 %v515
        %674 = vmatpush.msra.mxu0 %v509
        %675 = vmatpush.msra.mxu0 %v503
        %676 = vmatpush.msra.mxu0 %v497
        %677 = vmatpush.msra.mxu0 %v491
        %678 = vmatpush.msra.mxu0 %v485
        %679 = vmatpush.msra.mxu0 %v479
        %680 = vmatpush.msra.mxu0 %v473
        %681 = vmatmul.f32.gmra.mxu0 %v469
        %v682 = vpop.f32.mrf.mxu0
        %v683 = vadd.f32 0.0, %v682
        %684 = vmatmul.f32.gmra.mxu0 %v471
        %v685 = vpop.f32.mrf.mxu0
        %v686 = vadd.f32 0.0, %v685
        %687 = vdwg.mxu0
        %688 = vmatpush.msra.mxu0 %v659
        %689 = vmatpush.msra.mxu0 %v653
        %690 = vmatpush.msra.mxu0 %v647
        %691 = vmatpush.msra.mxu0 %v641
        %692 = vmatpush.msra.mxu0 %v635
        %693 = vmatpush.msra.mxu0 %v629
        %694 = vmatpush.msra.mxu0 %v623
        %695 = vmatpush.msra.mxu0 %v617
        %696 = vmatpush.msra.mxu0 %v611
        %697 = vmatpush.msra.mxu0 %v605
        %698 = vmatpush.msra.mxu0 %v599
        %699 = vmatpush.msra.mxu0 %v593
        %700 = vmatpush.msra.mxu0 %v587
        %701 = vmatpush.msra.mxu0 %v581
        %702 = vmatpush.msra.mxu0 %v575
        %703 = vmatpush.msra.mxu0 %v569
        %704 = vmatmul.f32.gmra.mxu0 %v470
        %v705 = vpop.f32.mrf.mxu0
        %v706 = vadd.f32 %v683, %v705
        %707 = vmatmul.f32.gmra.mxu0 %v472
        %v708 = vpop.f32.mrf.mxu0
        %v709 = vadd.f32 %v686, %v708
        %710 = vdwg.mxu0
        %711 = vmatpush.msra.mxu0 %v564
        %712 = vmatpush.msra.mxu0 %v558
        %713 = vmatpush.msra.mxu0 %v552
        %714 = vmatpush.msra.mxu0 %v546
        %715 = vmatpush.msra.mxu0 %v540
        %716 = vmatpush.msra.mxu0 %v534
        %717 = vmatpush.msra.mxu0 %v528
        %718 = vmatpush.msra.mxu0 %v522
        %719 = vmatpush.msra.mxu0 %v516
        %720 = vmatpush.msra.mxu0 %v510
        %721 = vmatpush.msra.mxu0 %v504
        %722 = vmatpush.msra.mxu0 %v498
        %723 = vmatpush.msra.mxu0 %v492
        %724 = vmatpush.msra.mxu0 %v486
        %725 = vmatpush.msra.mxu0 %v480
        %726 = vmatpush.msra.mxu0 %v474
        %727 = vmatmul.f32.gmra.mxu0 %v469
        %v728 = vpop.f32.mrf.mxu0
        %v729 = vadd.f32 0.0, %v728
        %730 = vmatmul.f32.gmra.mxu0 %v471
        %v731 = vpop.f32.mrf.mxu0
        %v732 = vadd.f32 0.0, %v731
        %733 = vdwg.mxu0
        %734 = vmatpush.msra.mxu0 %v660
        %735 = vmatpush.msra.mxu0 %v654
        %736 = vmatpush.msra.mxu0 %v648
        %737 = vmatpush.msra.mxu0 %v642
        %738 = vmatpush.msra.mxu0 %v636
        %739 = vmatpush.msra.mxu0 %v630
        %740 = vmatpush.msra.mxu0 %v624
        %741 = vmatpush.msra.mxu0 %v618
        %742 = vmatpush.msra.mxu0 %v612
        %743 = vmatpush.msra.mxu0 %v606
        %744 = vmatpush.msra.mxu0 %v600
        %745 = vmatpush.msra.mxu0 %v594
        %746 = vmatpush.msra.mxu0 %v588
        %747 = vmatpush.msra.mxu0 %v582
        %748 = vmatpush.msra.mxu0 %v576
        %749 = vmatpush.msra.mxu0 %v570
        %750 = vmatmul.f32.gmra.mxu0 %v470
        %v751 = vpop.f32.mrf.mxu0
        %v752 = vadd.f32 %v729, %v751
        %753 = vmatmul.f32.gmra.mxu0 %v472
        %v754 = vpop.f32.mrf.mxu0
        %v755 = vadd.f32 %v732, %v754
        %756 = vdwg.mxu0
        %757 = vmatpush.msra.mxu0 %v565
        %758 = vmatpush.msra.mxu0 %v559
        %759 = vmatpush.msra.mxu0 %v553
        %760 = vmatpush.msra.mxu0 %v547
        %761 = vmatpush.msra.mxu0 %v541
        %762 = vmatpush.msra.mxu0 %v535
        %763 = vmatpush.msra.mxu0 %v529
        %764 = vmatpush.msra.mxu0 %v523
        %765 = vmatpush.msra.mxu0 %v517
        %766 = vmatpush.msra.mxu0 %v511
        %767 = vmatpush.msra.mxu0 %v505
        %768 = vmatpush.msra.mxu0 %v499
        %769 = vmatpush.msra.mxu0 %v493
        %770 = vmatpush.msra.mxu0 %v487
        %771 = vmatpush.msra.mxu0 %v481
        %772 = vmatpush.msra.mxu0 %v475
        %773 = vmatmul.f32.gmra.mxu0 %v469
        %v774 = vpop.f32.mrf.mxu0
        %v775 = vadd.f32 0.0, %v774
        %776 = vmatmul.f32.gmra.mxu0 %v471
        %v777 = vpop.f32.mrf.mxu0
        %v778 = vadd.f32 0.0, %v777
        %779 = vdwg.mxu0
        %780 = vmatpush.msra.mxu0 %v661
        %781 = vmatpush.msra.mxu0 %v655
        %782 = vmatpush.msra.mxu0 %v649
        %783 = vmatpush.msra.mxu0 %v643
        %784 = vmatpush.msra.mxu0 %v637
        %785 = vmatpush.msra.mxu0 %v631
        %786 = vmatpush.msra.mxu0 %v625
        %787 = vmatpush.msra.mxu0 %v619
        %788 = vmatpush.msra.mxu0 %v613
        %789 = vmatpush.msra.mxu0 %v607
        %790 = vmatpush.msra.mxu0 %v601
        %791 = vmatpush.msra.mxu0 %v595
        %792 = vmatpush.msra.mxu0 %v589
        %793 = vmatpush.msra.mxu0 %v583
        %794 = vmatpush.msra.mxu0 %v577
        %795 = vmatpush.msra.mxu0 %v571
        %796 = vmatmul.f32.gmra.mxu0 %v470
        %v797 = vpop.f32.mrf.mxu0
        %v798 = vadd.f32 %v775, %v797
        %799 = vmatmul.f32.gmra.mxu0 %v472
        %v800 = vpop.f32.mrf.mxu0
        %v801 = vadd.f32 %v778, %v800
        %802 = vdwg.mxu0
        %803 = vmatpush.msra.mxu0 %v566
        %804 = vmatpush.msra.mxu0 %v560
        %805 = vmatpush.msra.mxu0 %v554
        %806 = vmatpush.msra.mxu0 %v548
        %807 = vmatpush.msra.mxu0 %v542
        %808 = vmatpush.msra.mxu0 %v536
        %809 = vmatpush.msra.mxu0 %v530
        %810 = vmatpush.msra.mxu0 %v524
        %811 = vmatpush.msra.mxu0 %v518
        %812 = vmatpush.msra.mxu0 %v512
        %813 = vmatpush.msra.mxu0 %v506
        %814 = vmatpush.msra.mxu0 %v500
        %815 = vmatpush.msra.mxu0 %v494
        %816 = vmatpush.msra.mxu0 %v488
        %817 = vmatpush.msra.mxu0 %v482
        %818 = vmatpush.msra.mxu0 %v476
        %819 = vmatmul.f32.gmra.mxu0 %v469
        %v820 = vpop.f32.mrf.mxu0
        %v821 = vadd.f32 0.0, %v820
        %822 = vmatmul.f32.gmra.mxu0 %v471
        %v823 = vpop.f32.mrf.mxu0
        %v824 = vadd.f32 0.0, %v823
        %825 = vdwg.mxu0
        %826 = vmatpush.msra.mxu0 %v662
        %827 = vmatpush.msra.mxu0 %v656
        %828 = vmatpush.msra.mxu0 %v650
        %829 = vmatpush.msra.mxu0 %v644
        %830 = vmatpush.msra.mxu0 %v638
        %831 = vmatpush.msra.mxu0 %v632
        %832 = vmatpush.msra.mxu0 %v626
        %833 = vmatpush.msra.mxu0 %v620
        %834 = vmatpush.msra.mxu0 %v614
        %835 = vmatpush.msra.mxu0 %v608
        %836 = vmatpush.msra.mxu0 %v602
        %837 = vmatpush.msra.mxu0 %v596
        %838 = vmatpush.msra.mxu0 %v590
        %839 = vmatpush.msra.mxu0 %v584
        %840 = vmatpush.msra.mxu0 %v578
        %841 = vmatpush.msra.mxu0 %v572
        %842 = vmatmul.f32.gmra.mxu0 %v470
        %v843 = vpop.f32.mrf.mxu0
        %v844 = vadd.f32 %v821, %v843
        %845 = vmatmul.f32.gmra.mxu0 %v472
        %v846 = vpop.f32.mrf.mxu0
        %v847 = vadd.f32 %v824, %v846
        %848 = vdwg.mxu0
        %849 = vmatpush.msra.mxu0 %v567
        %850 = vmatpush.msra.mxu0 %v561
        %851 = vmatpush.msra.mxu0 %v555
        %852 = vmatpush.msra.mxu0 %v549
        %853 = vmatpush.msra.mxu0 %v543
        %854 = vmatpush.msra.mxu0 %v537
        %855 = vmatpush.msra.mxu0 %v531
        %856 = vmatpush.msra.mxu0 %v525
        %857 = vmatpush.msra.mxu0 %v519
        %858 = vmatpush.msra.mxu0 %v513
        %859 = vmatpush.msra.mxu0 %v507
        %860 = vmatpush.msra.mxu0 %v501
        %861 = vmatpush.msra.mxu0 %v495
        %862 = vmatpush.msra.mxu0 %v489
        %863 = vmatpush.msra.mxu0 %v483
        %864 = vmatpush.msra.mxu0 %v477
        %865 = vmatmul.f32.gmra.mxu0 %v469
        %v866 = vpop.f32.mrf.mxu0
        %v867 = vadd.f32 0.0, %v866
        %868 = vmatmul.f32.gmra.mxu0 %v471
        %v869 = vpop.f32.mrf.mxu0
        %v870 = vadd.f32 0.0, %v869
        %871 = vdwg.mxu0
        %872 = vmatpush.msra.mxu0 %v663
        %873 = vmatpush.msra.mxu0 %v657
        %874 = vmatpush.msra.mxu0 %v651
        %875 = vmatpush.msra.mxu0 %v645
        %876 = vmatpush.msra.mxu0 %v639
        %877 = vmatpush.msra.mxu0 %v633
        %878 = vmatpush.msra.mxu0 %v627
        %879 = vmatpush.msra.mxu0 %v621
        %880 = vmatpush.msra.mxu0 %v615
        %881 = vmatpush.msra.mxu0 %v609
        %882 = vmatpush.msra.mxu0 %v603
        %883 = vmatpush.msra.mxu0 %v597
        %884 = vmatpush.msra.mxu0 %v591
        %885 = vmatpush.msra.mxu0 %v585
        %886 = vmatpush.msra.mxu0 %v579
        %887 = vmatpush.msra.mxu0 %v573
        %888 = vmatmul.f32.gmra.mxu0 %v470
        %v889 = vpop.f32.mrf.mxu0
        %v890 = vadd.f32 %v867, %v889
        %891 = vmatmul.f32.gmra.mxu0 %v472
        %v892 = vpop.f32.mrf.mxu0
        %v893 = vadd.f32 %v870, %v892
        %894 = vdwg.mxu0
        %895 = vmatpush.msra.mxu0 %v568
        %896 = vmatpush.msra.mxu0 %v562
        %897 = vmatpush.msra.mxu0 %v556
        %898 = vmatpush.msra.mxu0 %v550
        %899 = vmatpush.msra.mxu0 %v544
        %900 = vmatpush.msra.mxu0 %v538
        %901 = vmatpush.msra.mxu0 %v532
        %902 = vmatpush.msra.mxu0 %v526
        %903 = vmatpush.msra.mxu0 %v520
        %904 = vmatpush.msra.mxu0 %v514
        %905 = vmatpush.msra.mxu0 %v508
        %906 = vmatpush.msra.mxu0 %v502
        %907 = vmatpush.msra.mxu0 %v496
        %908 = vmatpush.msra.mxu0 %v490
        %909 = vmatpush.msra.mxu0 %v484
        %910 = vmatpush.msra.mxu0 %v478
        %911 = vmatmul.f32.gmra.mxu0 %v469
        %v912 = vpop.f32.mrf.mxu0
        %v913 = vadd.f32 0.0, %v912
        %914 = vmatmul.f32.gmra.mxu0 %v471
        %v915 = vpop.f32.mrf.mxu0
        %v916 = vadd.f32 0.0, %v915
        %917 = vdwg.mxu0
        %918 = vmatpush.msra.mxu0 %v664
        %919 = vmatpush.msra.mxu0 %v658
        %920 = vmatpush.msra.mxu0 %v652
        %921 = vmatpush.msra.mxu0 %v646
        %922 = vmatpush.msra.mxu0 %v640
        %923 = vmatpush.msra.mxu0 %v634
        %924 = vmatpush.msra.mxu0 %v628
        %925 = vmatpush.msra.mxu0 %v622
        %926 = vmatpush.msra.mxu0 %v616
        %927 = vmatpush.msra.mxu0 %v610
        %928 = vmatpush.msra.mxu0 %v604
        %929 = vmatpush.msra.mxu0 %v598
        %930 = vmatpush.msra.mxu0 %v592
        %931 = vmatpush.msra.mxu0 %v586
        %932 = vmatpush.msra.mxu0 %v580
        %933 = vmatpush.msra.mxu0 %v574
        %934 = vmatmul.f32.gmra.mxu0 %v470
        %v935 = vpop.f32.mrf.mxu0
        %v936 = vadd.f32 %v913, %v935
        %937 = vmatmul.f32.gmra.mxu0 %v472
        %v938 = vpop.f32.mrf.mxu0
        %v939 = vadd.f32 %v916, %v938
        %940 = vdwg.mxu0
        %v941 = vlaneseq
        %v942 = vshrl.u32 %v941, 7
        %v943 = vadd.s32 %v942, 8
        %v944 = vlaneseq
        %v945 = vand.u32 %v944, 127
        %vm946 = vcmp.le.s32.totalorder %v945, %v942
        %vm947 = vcmp.le.s32.totalorder %v945, %v943
        %v948 = vld [vmem:[#allocation7] sm:$0xff]
        %v949 = vld [vmem:[#allocation7 + $0x8] sm:$0xff]
        %v950 = vld [vmem:[#allocation7 + $0x10] sm:$0xff]
        %v951 = vld [vmem:[#allocation7 + $0x18] sm:$0xff]
        %v952 = vld [vmem:[#allocation7 + $0x20] sm:$0xff]
        %v953 = vld [vmem:[#allocation7 + $0x28] sm:$0xff]
        %v954 = vld [vmem:[#allocation7 + $0x30] sm:$0xff]
        %v955 = vld [vmem:[#allocation7 + $0x38] sm:$0xff]
        %v956 = vld [vmem:[#allocation7 + $0x40] sm:$0xff]
        %v957 = vld [vmem:[#allocation7 + $0x48] sm:$0xff]
        %v958 = vld [vmem:[#allocation7 + $0x50] sm:$0xff]
        %v959 = vld [vmem:[#allocation7 + $0x58] sm:$0xff]
        %v960 = vld [vmem:[#allocation7 + $0x60] sm:$0xff]
        %v961 = vld [vmem:[#allocation7 + $0x68] sm:$0xff]
        %v962 = vld [vmem:[#allocation7 + $0x70] sm:$0xff]
        %v963 = vld [vmem:[#allocation7 + $0x78] sm:$0xff]
        %v964 = vld [vmem:[#allocation7 + $0x80] sm:$0xff]
        %v965 = vld [vmem:[#allocation7 + $0x88] sm:$0xff]
        %v966 = vld [vmem:[#allocation7 + $0x90] sm:$0xff]
        %v967 = vld [vmem:[#allocation7 + $0x98] sm:$0xff]
        %v968 = vld [vmem:[#allocation7 + $0xa0] sm:$0xff]
        %v969 = vld [vmem:[#allocation7 + $0xa8] sm:$0xff]
        %v970 = vld [vmem:[#allocation7 + $0xb0] sm:$0xff]
        %v971 = vld [vmem:[#allocation7 + $0xb8] sm:$0xff]
        %v972 = vld [vmem:[#allocation7 + $0xc0] sm:$0xff]
        %v973 = vld [vmem:[#allocation7 + $0xc8] sm:$0xff]
        %v974 = vld [vmem:[#allocation7 + $0xd0] sm:$0xff]
        %v975 = vld [vmem:[#allocation7 + $0xd8] sm:$0xff]
        %v976 = vld [vmem:[#allocation7 + $0xe0] sm:$0xff]
        %v977 = vld [vmem:[#allocation7 + $0xe8] sm:$0xff]
        %v978 = vld [vmem:[#allocation7 + $0xf0] sm:$0xff]
        %v979 = vld [vmem:[#allocation7 + $0xf8] sm:$0xff]
        %v980 = vld [vmem:[#allocation7 + $0x100] sm:$0xff]
        %v981 = vld [vmem:[#allocation7 + $0x108] sm:$0xff]
        %v982 = vld [vmem:[#allocation7 + $0x110] sm:$0xff]
        %v983 = vld [vmem:[#allocation7 + $0x118] sm:$0xff]
        %v984 = vld [vmem:[#allocation7 + $0x120] sm:$0xff]
        %v985 = vld [vmem:[#allocation7 + $0x128] sm:$0xff]
        %v986 = vld [vmem:[#allocation7 + $0x130] sm:$0xff]
        %v987 = vld [vmem:[#allocation7 + $0x138] sm:$0xff]
        %v988 = vld [vmem:[#allocation7 + $0x140] sm:$0xff]
        %v989 = vld [vmem:[#allocation7 + $0x148] sm:$0xff]
        %v990 = vld [vmem:[#allocation7 + $0x150] sm:$0xff]
        %v991 = vld [vmem:[#allocation7 + $0x158] sm:$0xff]
        %v992 = vld [vmem:[#allocation7 + $0x160] sm:$0xff]
        %v993 = vld [vmem:[#allocation7 + $0x168] sm:$0xff]
        %v994 = vld [vmem:[#allocation7 + $0x170] sm:$0xff]
        %v995 = vld [vmem:[#allocation7 + $0x178] sm:$0xff]
        %v996 = vld [vmem:[#allocation7 + $0x180] sm:$0xff]
        %v997 = vld [vmem:[#allocation7 + $0x188] sm:$0xff]
        %v998 = vld [vmem:[#allocation7 + $0x190] sm:$0xff]
        %v999 = vld [vmem:[#allocation7 + $0x198] sm:$0xff]
        %v1000 = vld [vmem:[#allocation7 + $0x1a0] sm:$0xff]
        %v1001 = vld [vmem:[#allocation7 + $0x1a8] sm:$0xff]
        %v1002 = vld [vmem:[#allocation7 + $0x1b0] sm:$0xff]
        %v1003 = vld [vmem:[#allocation7 + $0x1b8] sm:$0xff]
        %v1004 = vld [vmem:[#allocation7 + $0x1c0] sm:$0xff]
        %v1005 = vld [vmem:[#allocation7 + $0x1c8] sm:$0xff]
        %v1006 = vld [vmem:[#allocation7 + $0x1d0] sm:$0xff]
        %v1007 = vld [vmem:[#allocation7 + $0x1d8] sm:$0xff]
        %v1008 = vld [vmem:[#allocation7 + $0x1e0] sm:$0xff]
        %v1009 = vld [vmem:[#allocation7 + $0x1e8] sm:$0xff]
        %v1010 = vld [vmem:[#allocation7 + $0x1f0] sm:$0xff]
        %v1011 = vld [vmem:[#allocation7 + $0x1f8] sm:$0xff]
        %vm1012 = vcmask 523264
        %v1014 = vsel %vm1012, %v706, 0
        %v1017 = vsel %vm1012, %v709, 0
        %v1020 = vsel %vm1012, %v798, 0
        %v1023 = vsel %vm1012, %v801, 0
        %1025 = vmatpush.xpose.msra.mxu0 0.0
        %1026 = vmatpush.xpose.msra.mxu0 0.0
        %1027 = vmatpush.xpose.msra.mxu0 0.0
        %1028 = vmatpush.xpose.msra.mxu0 0.0
        %1029 = vmatpush.xpose.msra.mxu0 0.0
        %1030 = vmatpush.xpose.msra.mxu0 0.0
        %1031 = vmatpush.xpose.msra.mxu0 0.0
        %1032 = vmatpush.xpose.msra.mxu0 0.0
        %1033 = vmatpush.xpose.msra.mxu0 0.0
        %1034 = vmatpush.xpose.msra.mxu0 0.0
        %1035 = vmatpush.xpose.msra.mxu0 0.0
        %1036 = vmatpush.xpose.msra.mxu0 0.0
        %1037 = vmatpush.xpose.msra.mxu0 0.0
        %1038 = vmatpush.xpose.msra.mxu0 0.0
        %1039 = vmatpush.xpose.msra.mxu0 %v1023
        %1040 = vmatpush.xpose.msra.mxu0 %v1020
        %1041 = vmatmul.f32.gmra.mxu0 %v1014
        %v1042 = vpop.f32.mrf.mxu0
        %v1043 = vadd.f32 0.0, %v1042
        %1044 = vmatmul.f32.gmra.mxu0 %v1017
        %v1045 = vpop.f32.mrf.mxu0
        %v1046 = vadd.f32 0.0, %v1045
        %1047 = vdwg.mxu0
        %v1048 = vmul.f32 %v1043, 0.0625
        %v1049 = vmul.f32 %v1046, 0.0625
        %v1050 = vsel %vm946, %v1048, -1e+30
        %v1051 = vsel %vm947, %v1049, -1e+30
        %vm1052 = vcmask 130048
        %v1053 = vsel %vm1052, %v1050, -inf
        %1054 = vmax.xlane.f32.xlu0 %v1053
        %v1055 = vpop.xlane.xlu0 %1054
        %v1056 = vsel %vm1052, %v1051, -inf
        %1057 = vmax.xlane.f32.xlu0 %v1056
        %v1058 = vpop.xlane.xlu0 %1057
        %v1059 = vsub.f32 %v1050, %v1055
        %v1060 = vsub.f32 %v1051, %v1058
        %v1061 = vmul.f32 %v1059, 1.442695
        %v1062 = vpow.pop %v1061
        %v1063 = vmul.f32 %v1060, 1.442695
        %v1064 = vpow.pop %v1063
        %v1065 = vsel %vm1052, %v1062, 0.0
        %1066 = vadd.xlane.f32.xlu0 %v1065
        %v1067 = vpop.xlane.xlu0 %1066
        %v1068 = vsel %vm1052, %v1064, 0.0
        %1069 = vadd.xlane.f32.xlu0 %v1068
        %v1070 = vpop.xlane.xlu0 %1069
        %v1071 = vrcp.pop %v1067
        %v1072 = vrcp.pop %v1070
        %v1073 = vmul.f32 %v1062, %v1071
        %v1074 = vmul.f32 %v1064, %v1072
        %v1076 = vsel %vm1052, %v1073, 0
        %v1079 = vsel %vm1052, %v1074, 0
        %1081 = vmatpush.msra.mxu0 0.0
        %1082 = vmatpush.msra.mxu0 0.0
        %1083 = vmatpush.msra.mxu0 0.0
        %1084 = vmatpush.msra.mxu0 0.0
        %1085 = vmatpush.msra.mxu0 0.0
        %1086 = vmatpush.msra.mxu0 0.0
        %1087 = vmatpush.msra.mxu0 0.0
        %1088 = vmatpush.msra.mxu0 0.0
        %1089 = vmatpush.msra.mxu0 0.0
        %1090 = vmatpush.msra.mxu0 0.0
        %1091 = vmatpush.msra.mxu0 0.0
        %1092 = vmatpush.msra.mxu0 0.0
        %1093 = vmatpush.msra.mxu0 0.0
        %1094 = vmatpush.msra.mxu0 0.0
        %1095 = vmatpush.msra.mxu0 %v893
        %1096 = vmatpush.msra.mxu0 %v890
        %1097 = vmatmul.f32.gmra.mxu0 %v1076
        %v1098 = vpop.f32.mrf.mxu0
        %v1099 = vadd.f32 0.0, %v1098
        %1100 = vmatmul.f32.gmra.mxu0 %v1079
        %v1101 = vpop.f32.mrf.mxu0
        %v1102 = vadd.f32 0.0, %v1101
        %1103 = vdwg.mxu0
        %1104 = vrot.lane.b32.xlu0 %v706, 64
        %v1105 = vpop.permute.xlu0 %1104
        %1106 = vrot.lane.b32.xlu0 %v709, 64
        %v1107 = vpop.permute.xlu0 %1106
        %1108 = vrot.lane.b32.xlu0 %v798, 64
        %v1109 = vpop.permute.xlu0 %1108
        %1110 = vrot.lane.b32.xlu0 %v801, 64
        %v1111 = vpop.permute.xlu0 %1110
        %v1112 = vsel %vm1012, %v1105, 0
        %v1114 = vsel %vm1012, %v1107, 0
        %v1116 = vsel %vm1012, %v1109, 0
        %v1118 = vsel %vm1012, %v1111, 0
        %1120 = vmatpush.xpose.msra.mxu0 0.0
        %1121 = vmatpush.xpose.msra.mxu0 0.0
        %1122 = vmatpush.xpose.msra.mxu0 0.0
        %1123 = vmatpush.xpose.msra.mxu0 0.0
        %1124 = vmatpush.xpose.msra.mxu0 0.0
        %1125 = vmatpush.xpose.msra.mxu0 0.0
        %1126 = vmatpush.xpose.msra.mxu0 0.0
        %1127 = vmatpush.xpose.msra.mxu0 0.0
        %1128 = vmatpush.xpose.msra.mxu0 0.0
        %1129 = vmatpush.xpose.msra.mxu0 0.0
        %1130 = vmatpush.xpose.msra.mxu0 0.0
        %1131 = vmatpush.xpose.msra.mxu0 0.0
        %1132 = vmatpush.xpose.msra.mxu0 0.0
        %1133 = vmatpush.xpose.msra.mxu0 0.0
        %1134 = vmatpush.xpose.msra.mxu0 %v1118
        %1135 = vmatpush.xpose.msra.mxu0 %v1116
        %1136 = vmatmul.f32.gmra.mxu0 %v1112
        %v1137 = vpop.f32.mrf.mxu0
        %v1138 = vadd.f32 0.0, %v1137
        %1139 = vmatmul.f32.gmra.mxu0 %v1114
        %v1140 = vpop.f32.mrf.mxu0
        %v1141 = vadd.f32 0.0, %v1140
        %1142 = vdwg.mxu0
        %v1143 = vmul.f32 %v1138, 0.0625
        %v1144 = vmul.f32 %v1141, 0.0625
        %v1145 = vsel %vm946, %v1143, -1e+30
        %v1146 = vsel %vm947, %v1144, -1e+30
        %v1147 = vsel %vm1052, %v1145, -inf
        %1148 = vmax.xlane.f32.xlu0 %v1147
        %v1149 = vpop.xlane.xlu0 %1148
        %v1150 = vsel %vm1052, %v1146, -inf
        %1151 = vmax.xlane.f32.xlu0 %v1150
        %v1152 = vpop.xlane.xlu0 %1151
        %v1153 = vsub.f32 %v1145, %v1149
        %v1154 = vsub.f32 %v1146, %v1152
        %v1155 = vmul.f32 %v1153, 1.442695
        %v1156 = vpow.pop %v1155
        %v1157 = vmul.f32 %v1154, 1.442695
        %v1158 = vpow.pop %v1157
        %v1159 = vsel %vm1052, %v1156, 0.0
        %1160 = vadd.xlane.f32.xlu0 %v1159
        %v1161 = vpop.xlane.xlu0 %1160
        %v1162 = vsel %vm1052, %v1158, 0.0
        %1163 = vadd.xlane.f32.xlu0 %v1162
        %v1164 = vpop.xlane.xlu0 %1163
        %v1165 = vrcp.pop %v1161
        %v1166 = vrcp.pop %v1164
        %v1167 = vmul.f32 %v1156, %v1165
        %v1168 = vmul.f32 %v1158, %v1166
        %1171 = vrot.lane.b32.xlu0 %v890, 64
        %v1172 = vpop.permute.xlu0 %1171
        %1173 = vrot.lane.b32.xlu0 %v893, 64
        %v1174 = vpop.permute.xlu0 %1173
        %v1178 = vsel %vm1052, %v1167, 0
        %v1181 = vsel %vm1052, %v1168, 0
        %1183 = vmatpush.msra.mxu0 0.0
        %1184 = vmatpush.msra.mxu0 0.0
        %1185 = vmatpush.msra.mxu0 0.0
        %1186 = vmatpush.msra.mxu0 0.0
        %1187 = vmatpush.msra.mxu0 0.0
        %1188 = vmatpush.msra.mxu0 0.0
        %1189 = vmatpush.msra.mxu0 0.0
        %1190 = vmatpush.msra.mxu0 0.0
        %1191 = vmatpush.msra.mxu0 0.0
        %1192 = vmatpush.msra.mxu0 0.0
        %1193 = vmatpush.msra.mxu0 0.0
        %1194 = vmatpush.msra.mxu0 0.0
        %1195 = vmatpush.msra.mxu0 0.0
        %1196 = vmatpush.msra.mxu0 0.0
        %1197 = vmatpush.msra.mxu0 %v1174
        %1198 = vmatpush.msra.mxu0 %v1172
        %1199 = vmatmul.f32.gmra.mxu0 %v1178
        %v1200 = vpop.f32.mrf.mxu0
        %v1201 = vadd.f32 0.0, %v1200
        %1202 = vmatmul.f32.gmra.mxu0 %v1181
        %v1203 = vpop.f32.mrf.mxu0
        %v1204 = vadd.f32 0.0, %v1203
        %1205 = vdwg.mxu0
        %v1207 = vsel %vm1012, %v1201, 0
        %v1210 = vsel %vm1012, %v1204, 0
        %1212 = vmatpush.msra.mxu0 0.0
        %1213 = vmatpush.msra.mxu0 0.0
        %1214 = vmatpush.msra.mxu0 0.0
        %1215 = vmatpush.msra.mxu0 0.0
        %1216 = vmatpush.msra.mxu0 0.0
        %1217 = vmatpush.msra.mxu0 0.0
        %1218 = vmatpush.msra.mxu0 0.0
        %1219 = vmatpush.msra.mxu0 0.0
        %1220 = vmatpush.msra.mxu0 %v978
        %1221 = vmatpush.msra.mxu0 %v976
        %1222 = vmatpush.msra.mxu0 %v974
        %1223 = vmatpush.msra.mxu0 %v972
        %1224 = vmatpush.msra.mxu0 %v970
        %1225 = vmatpush.msra.mxu0 %v968
        %1226 = vmatpush.msra.mxu0 %v966
        %1227 = vmatpush.msra.mxu0 %v964
        %1228 = vmatmul.f32.gmra.mxu0 %v1207
        %v1229 = vpop.f32.mrf.mxu0
        %v1230 = vadd.f32 0.0, %v1229
        %1231 = vmatmul.f32.gmra.mxu0 %v1210
        %v1232 = vpop.f32.mrf.mxu0
        %v1233 = vadd.f32 0.0, %v1232
        %1234 = vdwg.mxu0
        %1235 = vmatpush.msra.mxu0 0.0
        %1236 = vmatpush.msra.mxu0 0.0
        %1237 = vmatpush.msra.mxu0 0.0
        %1238 = vmatpush.msra.mxu0 0.0
        %1239 = vmatpush.msra.mxu0 0.0
        %1240 = vmatpush.msra.mxu0 0.0
        %1241 = vmatpush.msra.mxu0 0.0
        %1242 = vmatpush.msra.mxu0 0.0
        %1243 = vmatpush.msra.mxu0 %v979
        %1244 = vmatpush.msra.mxu0 %v977
        %1245 = vmatpush.msra.mxu0 %v975
        %1246 = vmatpush.msra.mxu0 %v973
        %1247 = vmatpush.msra.mxu0 %v971
        %1248 = vmatpush.msra.mxu0 %v969
        %1249 = vmatpush.msra.mxu0 %v967
        %1250 = vmatpush.msra.mxu0 %v965
        %1251 = vmatmul.f32.gmra.mxu0 %v1207
        %v1252 = vpop.f32.mrf.mxu0
        %v1253 = vadd.f32 0.0, %v1252
        %1254 = vmatmul.f32.gmra.mxu0 %v1210
        %v1255 = vpop.f32.mrf.mxu0
        %v1256 = vadd.f32 0.0, %v1255
        %1257 = vdwg.mxu0
        %v1259 = vsel %vm1012, %v1099, 0
        %v1262 = vsel %vm1012, %v1102, 0
        %1264 = vmatpush.msra.mxu0 0.0
        %1265 = vmatpush.msra.mxu0 0.0
        %1266 = vmatpush.msra.mxu0 0.0
        %1267 = vmatpush.msra.mxu0 0.0
        %1268 = vmatpush.msra.mxu0 0.0
        %1269 = vmatpush.msra.mxu0 0.0
        %1270 = vmatpush.msra.mxu0 0.0
        %1271 = vmatpush.msra.mxu0 0.0
        %1272 = vmatpush.msra.mxu0 %v962
        %1273 = vmatpush.msra.mxu0 %v960
        %1274 = vmatpush.msra.mxu0 %v958
        %1275 = vmatpush.msra.mxu0 %v956
        %1276 = vmatpush.msra.mxu0 %v954
        %1277 = vmatpush.msra.mxu0 %v952
        %1278 = vmatpush.msra.mxu0 %v950
        %1279 = vmatpush.msra.mxu0 %v948
        %1280 = vmatmul.f32.gmra.mxu0 %v1259
        %v1281 = vpop.f32.mrf.mxu0
        %v1282 = vadd.f32 %v1230, %v1281
        %1283 = vmatmul.f32.gmra.mxu0 %v1262
        %v1284 = vpop.f32.mrf.mxu0
        %v1285 = vadd.f32 %v1233, %v1284
        %1286 = vdwg.mxu0
        %1287 = vmatpush.msra.mxu0 0.0
        %1288 = vmatpush.msra.mxu0 0.0
        %1289 = vmatpush.msra.mxu0 0.0
        %1290 = vmatpush.msra.mxu0 0.0
        %1291 = vmatpush.msra.mxu0 0.0
        %1292 = vmatpush.msra.mxu0 0.0
        %1293 = vmatpush.msra.mxu0 0.0
        %1294 = vmatpush.msra.mxu0 0.0
        %1295 = vmatpush.msra.mxu0 %v963
        %1296 = vmatpush.msra.mxu0 %v961
        %1297 = vmatpush.msra.mxu0 %v959
        %1298 = vmatpush.msra.mxu0 %v957
        %1299 = vmatpush.msra.mxu0 %v955
        %1300 = vmatpush.msra.mxu0 %v953
        %1301 = vmatpush.msra.mxu0 %v951
        %1302 = vmatpush.msra.mxu0 %v949
        %1303 = vmatmul.f32.gmra.mxu0 %v1259
        %v1304 = vpop.f32.mrf.mxu0
        %v1305 = vadd.f32 %v1253, %v1304
        %1306 = vmatmul.f32.gmra.mxu0 %v1262
        %v1307 = vpop.f32.mrf.mxu0
        %v1308 = vadd.f32 %v1256, %v1307
        %1309 = vdwg.mxu0
        %v1311 = vsel %vm1012, %v752, 0
        %v1314 = vsel %vm1012, %v755, 0
        %v1317 = vsel %vm1012, %v844, 0
        %v1320 = vsel %vm1012, %v847, 0
        %1322 = vmatpush.xpose.msra.mxu0 0.0
        %1323 = vmatpush.xpose.msra.mxu0 0.0
        %1324 = vmatpush.xpose.msra.mxu0 0.0
        %1325 = vmatpush.xpose.msra.mxu0 0.0
        %1326 = vmatpush.xpose.msra.mxu0 0.0
        %1327 = vmatpush.xpose.msra.mxu0 0.0
        %1328 = vmatpush.xpose.msra.mxu0 0.0
        %1329 = vmatpush.xpose.msra.mxu0 0.0
        %1330 = vmatpush.xpose.msra.mxu0 0.0
        %1331 = vmatpush.xpose.msra.mxu0 0.0
        %1332 = vmatpush.xpose.msra.mxu0 0.0
        %1333 = vmatpush.xpose.msra.mxu0 0.0
        %1334 = vmatpush.xpose.msra.mxu0 0.0
        %1335 = vmatpush.xpose.msra.mxu0 0.0
        %1336 = vmatpush.xpose.msra.mxu0 %v1320
        %1337 = vmatpush.xpose.msra.mxu0 %v1317
        %1338 = vmatmul.f32.gmra.mxu0 %v1311
        %v1339 = vpop.f32.mrf.mxu0
        %v1340 = vadd.f32 0.0, %v1339
        %1341 = vmatmul.f32.gmra.mxu0 %v1314
        %v1342 = vpop.f32.mrf.mxu0
        %v1343 = vadd.f32 0.0, %v1342
        %1344 = vdwg.mxu0
        %v1345 = vmul.f32 %v1340, 0.0625
        %v1346 = vmul.f32 %v1343, 0.0625
        %v1347 = vsel %vm946, %v1345, -1e+30
        %v1348 = vsel %vm947, %v1346, -1e+30
        %v1349 = vsel %vm1052, %v1347, -inf
        %1350 = vmax.xlane.f32.xlu0 %v1349
        %v1351 = vpop.xlane.xlu0 %1350
        %v1352 = vsel %vm1052, %v1348, -inf
        %1353 = vmax.xlane.f32.xlu0 %v1352
        %v1354 = vpop.xlane.xlu0 %1353
        %v1355 = vsub.f32 %v1347, %v1351
        %v1356 = vsub.f32 %v1348, %v1354
        %v1357 = vmul.f32 %v1355, 1.442695
        %v1358 = vpow.pop %v1357
        %v1359 = vmul.f32 %v1356, 1.442695
        %v1360 = vpow.pop %v1359
        %v1361 = vsel %vm1052, %v1358, 0.0
        %1362 = vadd.xlane.f32.xlu0 %v1361
        %v1363 = vpop.xlane.xlu0 %1362
        %v1364 = vsel %vm1052, %v1360, 0.0
        %1365 = vadd.xlane.f32.xlu0 %v1364
        %v1366 = vpop.xlane.xlu0 %1365
        %v1367 = vrcp.pop %v1363
        %v1368 = vrcp.pop %v1366
        %v1369 = vmul.f32 %v1358, %v1367
        %v1370 = vmul.f32 %v1360, %v1368
        %v1372 = vsel %vm1052, %v1369, 0
        %v1375 = vsel %vm1052, %v1370, 0
        %1377 = vmatpush.msra.mxu0 0.0
        %1378 = vmatpush.msra.mxu0 0.0
        %1379 = vmatpush.msra.mxu0 0.0
        %1380 = vmatpush.msra.mxu0 0.0
        %1381 = vmatpush.msra.mxu0 0.0
        %1382 = vmatpush.msra.mxu0 0.0
        %1383 = vmatpush.msra.mxu0 0.0
        %1384 = vmatpush.msra.mxu0 0.0
        %1385 = vmatpush.msra.mxu0 0.0
        %1386 = vmatpush.msra.mxu0 0.0
        %1387 = vmatpush.msra.mxu0 0.0
        %1388 = vmatpush.msra.mxu0 0.0
        %1389 = vmatpush.msra.mxu0 0.0
        %1390 = vmatpush.msra.mxu0 0.0
        %1391 = vmatpush.msra.mxu0 %v939
        %1392 = vmatpush.msra.mxu0 %v936
        %1393 = vmatmul.f32.gmra.mxu0 %v1372
        %v1394 = vpop.f32.mrf.mxu0
        %v1395 = vadd.f32 0.0, %v1394
        %1396 = vmatmul.f32.gmra.mxu0 %v1375
        %v1397 = vpop.f32.mrf.mxu0
        %v1398 = vadd.f32 0.0, %v1397
        %1399 = vdwg.mxu0
        %v1401 = vsel %vm1012, %v1395, 0
        %v1404 = vsel %vm1012, %v1398, 0
        %1406 = vmatpush.msra.mxu0 0.0
        %1407 = vmatpush.msra.mxu0 0.0
        %1408 = vmatpush.msra.mxu0 0.0
        %1409 = vmatpush.msra.mxu0 0.0
        %1410 = vmatpush.msra.mxu0 0.0
        %1411 = vmatpush.msra.mxu0 0.0
        %1412 = vmatpush.msra.mxu0 0.0
        %1413 = vmatpush.msra.mxu0 0.0
        %1414 = vmatpush.msra.mxu0 %v994
        %1415 = vmatpush.msra.mxu0 %v992
        %1416 = vmatpush.msra.mxu0 %v990
        %1417 = vmatpush.msra.mxu0 %v988
        %1418 = vmatpush.msra.mxu0 %v986
        %1419 = vmatpush.msra.mxu0 %v984
        %1420 = vmatpush.msra.mxu0 %v982
        %1421 = vmatpush.msra.mxu0 %v980
        %1422 = vmatmul.f32.gmra.mxu0 %v1401
        %v1423 = vpop.f32.mrf.mxu0
        %v1424 = vadd.f32 0.0, %v1423
        %1425 = vmatmul.f32.gmra.mxu0 %v1404
        %v1426 = vpop.f32.mrf.mxu0
        %v1427 = vadd.f32 0.0, %v1426
        %1428 = vdwg.mxu0
        %1429 = vmatpush.msra.mxu0 0.0
        %1430 = vmatpush.msra.mxu0 0.0
        %1431 = vmatpush.msra.mxu0 0.0
        %1432 = vmatpush.msra.mxu0 0.0
        %1433 = vmatpush.msra.mxu0 0.0
        %1434 = vmatpush.msra.mxu0 0.0
        %1435 = vmatpush.msra.mxu0 0.0
        %1436 = vmatpush.msra.mxu0 0.0
        %1437 = vmatpush.msra.mxu0 %v995
        %1438 = vmatpush.msra.mxu0 %v993
        %1439 = vmatpush.msra.mxu0 %v991
        %1440 = vmatpush.msra.mxu0 %v989
        %1441 = vmatpush.msra.mxu0 %v987
        %1442 = vmatpush.msra.mxu0 %v985
        %1443 = vmatpush.msra.mxu0 %v983
        %1444 = vmatpush.msra.mxu0 %v981
        %1445 = vmatmul.f32.gmra.mxu0 %v1401
        %v1446 = vpop.f32.mrf.mxu0
        %v1447 = vadd.f32 0.0, %v1446
        %1448 = vmatmul.f32.gmra.mxu0 %v1404
        %v1449 = vpop.f32.mrf.mxu0
        %v1450 = vadd.f32 0.0, %v1449
        %1451 = vdwg.mxu0
        %v1452 = vadd.f32 %v1282, %v1424
        %v1453 = vadd.f32 %v1305, %v1447
        %v1454 = vadd.f32 %v1285, %v1427
        %v1455 = vadd.f32 %v1308, %v1450
        %1456 = vrot.lane.b32.xlu0 %v752, 64
        %v1457 = vpop.permute.xlu0 %1456
        %1458 = vrot.lane.b32.xlu0 %v755, 64
        %v1459 = vpop.permute.xlu0 %1458
        %1460 = vrot.lane.b32.xlu0 %v844, 64
        %v1461 = vpop.permute.xlu0 %1460
        %1462 = vrot.lane.b32.xlu0 %v847, 64
        %v1463 = vpop.permute.xlu0 %1462
        %v1464 = vsel %vm1012, %v1457, 0
        %v1466 = vsel %vm1012, %v1459, 0
        %v1468 = vsel %vm1012, %v1461, 0
        %v1470 = vsel %vm1012, %v1463, 0
        %1472 = vmatpush.xpose.msra.mxu0 0.0
        %1473 = vmatpush.xpose.msra.mxu0 0.0
        %1474 = vmatpush.xpose.msra.mxu0 0.0
        %1475 = vmatpush.xpose.msra.mxu0 0.0
        %1476 = vmatpush.xpose.msra.mxu0 0.0
        %1477 = vmatpush.xpose.msra.mxu0 0.0
        %1478 = vmatpush.xpose.msra.mxu0 0.0
        %1479 = vmatpush.xpose.msra.mxu0 0.0
        %1480 = vmatpush.xpose.msra.mxu0 0.0
        %1481 = vmatpush.xpose.msra.mxu0 0.0
        %1482 = vmatpush.xpose.msra.mxu0 0.0
        %1483 = vmatpush.xpose.msra.mxu0 0.0
        %1484 = vmatpush.xpose.msra.mxu0 0.0
        %1485 = vmatpush.xpose.msra.mxu0 0.0
        %1486 = vmatpush.xpose.msra.mxu0 %v1470
        %1487 = vmatpush.xpose.msra.mxu0 %v1468
        %1488 = vmatmul.f32.gmra.mxu0 %v1464
        %v1489 = vpop.f32.mrf.mxu0
        %v1490 = vadd.f32 0.0, %v1489
        %1491 = vmatmul.f32.gmra.mxu0 %v1466
        %v1492 = vpop.f32.mrf.mxu0
        %v1493 = vadd.f32 0.0, %v1492
        %1494 = vdwg.mxu0
        %v1495 = vmul.f32 %v1490, 0.0625
        %v1496 = vmul.f32 %v1493, 0.0625
        %v1497 = vsel %vm946, %v1495, -1e+30
        %v1498 = vsel %vm947, %v1496, -1e+30
        %v1499 = vsel %vm1052, %v1497, -inf
        %1500 = vmax.xlane.f32.xlu0 %v1499
        %v1501 = vpop.xlane.xlu0 %1500
        %v1502 = vsel %vm1052, %v1498, -inf
        %1503 = vmax.xlane.f32.xlu0 %v1502
        %v1504 = vpop.xlane.xlu0 %1503
        %v1505 = vsub.f32 %v1497, %v1501
        %v1506 = vsub.f32 %v1498, %v1504
        %v1507 = vmul.f32 %v1505, 1.442695
        %v1508 = vpow.pop %v1507
        %v1509 = vmul.f32 %v1506, 1.442695
        %v1510 = vpow.pop %v1509
        %v1511 = vsel %vm1052, %v1508, 0.0
        %1512 = vadd.xlane.f32.xlu0 %v1511
        %v1513 = vpop.xlane.xlu0 %1512
        %v1514 = vsel %vm1052, %v1510, 0.0
        %1515 = vadd.xlane.f32.xlu0 %v1514
        %v1516 = vpop.xlane.xlu0 %1515
        %v1517 = vrcp.pop %v1513
        %v1518 = vrcp.pop %v1516
        %v1519 = vmul.f32 %v1508, %v1517
        %v1520 = vmul.f32 %v1510, %v1518
        %1523 = vrot.lane.b32.xlu0 %v936, 64
        %v1524 = vpop.permute.xlu0 %1523
        %1525 = vrot.lane.b32.xlu0 %v939, 64
        %v1526 = vpop.permute.xlu0 %1525
        %v1530 = vsel %vm1052, %v1519, 0
        %v1533 = vsel %vm1052, %v1520, 0
        %1535 = vmatpush.msra.mxu0 0.0
        %1536 = vmatpush.msra.mxu0 0.0
        %1537 = vmatpush.msra.mxu0 0.0
        %1538 = vmatpush.msra.mxu0 0.0
        %1539 = vmatpush.msra.mxu0 0.0
        %1540 = vmatpush.msra.mxu0 0.0
        %1541 = vmatpush.msra.mxu0 0.0
        %1542 = vmatpush.msra.mxu0 0.0
        %1543 = vmatpush.msra.mxu0 0.0
        %1544 = vmatpush.msra.mxu0 0.0
        %1545 = vmatpush.msra.mxu0 0.0
        %1546 = vmatpush.msra.mxu0 0.0
        %1547 = vmatpush.msra.mxu0 0.0
        %1548 = vmatpush.msra.mxu0 0.0
        %1549 = vmatpush.msra.mxu0 %v1526
        %1550 = vmatpush.msra.mxu0 %v1524
        %1551 = vmatmul.f32.gmra.mxu0 %v1530
        %v1552 = vpop.f32.mrf.mxu0
        %v1553 = vadd.f32 0.0, %v1552
        %1554 = vmatmul.f32.gmra.mxu0 %v1533
        %v1555 = vpop.f32.mrf.mxu0
        %v1556 = vadd.f32 0.0, %v1555
        %1557 = vdwg.mxu0
        %v1559 = vsel %vm1012, %v1553, 0
        %v1562 = vsel %vm1012, %v1556, 0
        %1564 = vmatpush.msra.mxu0 0.0
        %1565 = vmatpush.msra.mxu0 0.0
        %1566 = vmatpush.msra.mxu0 0.0
        %1567 = vmatpush.msra.mxu0 0.0
        %1568 = vmatpush.msra.mxu0 0.0
        %1569 = vmatpush.msra.mxu0 0.0
        %1570 = vmatpush.msra.mxu0 0.0
        %1571 = vmatpush.msra.mxu0 0.0
        %1572 = vmatpush.msra.mxu0 %v1010
        %1573 = vmatpush.msra.mxu0 %v1008
        %1574 = vmatpush.msra.mxu0 %v1006
        %1575 = vmatpush.msra.mxu0 %v1004
        %1576 = vmatpush.msra.mxu0 %v1002
        %1577 = vmatpush.msra.mxu0 %v1000
        %1578 = vmatpush.msra.mxu0 %v998
        %1579 = vmatpush.msra.mxu0 %v996
        %1580 = vmatmul.f32.gmra.mxu0 %v1559
        %v1581 = vpop.f32.mrf.mxu0
        %v1582 = vadd.f32 0.0, %v1581
        %1583 = vmatmul.f32.gmra.mxu0 %v1562
        %v1584 = vpop.f32.mrf.mxu0
        %v1585 = vadd.f32 0.0, %v1584
        %1586 = vdwg.mxu0
        %1587 = vmatpush.msra.mxu0 0.0
        %1588 = vmatpush.msra.mxu0 0.0
        %1589 = vmatpush.msra.mxu0 0.0
        %1590 = vmatpush.msra.mxu0 0.0
        %1591 = vmatpush.msra.mxu0 0.0
        %1592 = vmatpush.msra.mxu0 0.0
        %1593 = vmatpush.msra.mxu0 0.0
        %1594 = vmatpush.msra.mxu0 0.0
        %1595 = vmatpush.msra.mxu0 %v1011
        %1596 = vmatpush.msra.mxu0 %v1009
        %1597 = vmatpush.msra.mxu0 %v1007
        %1598 = vmatpush.msra.mxu0 %v1005
        %1599 = vmatpush.msra.mxu0 %v1003
        %1600 = vmatpush.msra.mxu0 %v1001
        %1601 = vmatpush.msra.mxu0 %v999
        %1602 = vmatpush.msra.mxu0 %v997
        %1603 = vmatmul.f32.gmra.mxu0 %v1559
        %v1604 = vpop.f32.mrf.mxu0
        %v1605 = vadd.f32 0.0, %v1604
        %1606 = vmatmul.f32.gmra.mxu0 %v1562
        %v1607 = vpop.f32.mrf.mxu0
        %v1608 = vadd.f32 0.0, %v1607
        %1609 = vdwg.mxu0
        %v1610 = vadd.f32 %v1452, %v1582
        %v1611 = vadd.f32 %v1453, %v1605
        %v1612 = vadd.f32 %v1454, %v1585
        %v1613 = vadd.f32 %v1455, %v1608
        %v1614 = vadd.f32 %v394, %v1610
        %v1615 = vadd.f32 %v395, %v1611
        %v1616 = vadd.f32 %v396, %v1612
        %v1617 = vadd.f32 %v397, %v1613
        %v1618 = vperm.slane %v398, 0
        %v1619 = vperm.slane %v399, 0
        %v1620 = vadd.f32 %v1614, %v1618
        %v1621 = vadd.f32 %v1615, %v1619
        %v1622 = vadd.f32 %v1616, %v1618
        %v1623 = vadd.f32 %v1617, %v1619
        %v1624 = vadd.f32 %v1620, %v1621
        %1625 = vadd.xlane.f32.xlu0 %v1624
        %v1626 = vpop.xlane.xlu0 %1625
        %v1627 = vadd.f32 %v1622, %v1623
        %1628 = vadd.xlane.f32.xlu0 %v1627
        %v1629 = vpop.xlane.xlu0 %1628
        %v1630 = vmul.f32 %v1626, %v412
        %v1631 = vmul.f32 %v1629, %v412
        %v1632 = vmul.f32 %v1620, %v1620
        %v1633 = vmul.f32 %v1621, %v1621
        %v1634 = vmul.f32 %v1622, %v1622
        %v1635 = vmul.f32 %v1623, %v1623
        %v1636 = vadd.f32 %v1632, %v1633
        %1637 = vadd.xlane.f32.xlu0 %v1636
        %v1638 = vpop.xlane.xlu0 %1637
        %v1639 = vadd.f32 %v1634, %v1635
        %1640 = vadd.xlane.f32.xlu0 %v1639
        %v1641 = vpop.xlane.xlu0 %1640
        %v1642 = vmul.f32 %v1638, %v412
        %v1643 = vmul.f32 %v1641, %v412
        %v1644 = vmul.f32 %v1630, %v1630
        %v1645 = vmul.f32 %v1631, %v1631
        %v1646 = vsub.f32 %v1642, %v1644
        %v1647 = vsub.f32 %v1643, %v1645
        %v1648 = vsub.f32 %v1620, %v1630
        %v1649 = vsub.f32 %v1621, %v1630
        %v1650 = vsub.f32 %v1622, %v1631
        %v1651 = vsub.f32 %v1623, %v1631
        %v1652 = vadd.f32 %v1646, 1e-05
        %v1653 = vadd.f32 %v1647, 1e-05
        %v1654 = vrsqrt.pop %v1652
        %v1655 = vmul.f32 %v1654, %v1652
        %v1656 = vmul.f32 %v1655, %v1654
        %v1657 = vmul.f32 0.5, %v1656
        %v1658 = vsub.f32 1.5, %v1657
        %v1659 = vmul.f32 %v1654, %v1658
        %vm1660 = vweird.f32 %v1652
        %vm1661 = vweird.f32 %v1654
        %vm1662 = vmor %vm1660, %vm1661
        %v1663 = vsel %vm1662, %v1654, %v1659
        %v1664 = vrsqrt.pop %v1653
        %v1665 = vmul.f32 %v1664, %v1653
        %v1666 = vmul.f32 %v1665, %v1664
        %v1667 = vmul.f32 0.5, %v1666
        %v1668 = vsub.f32 1.5, %v1667
        %v1669 = vmul.f32 %v1664, %v1668
        %vm1670 = vweird.f32 %v1653
        %vm1671 = vweird.f32 %v1664
        %vm1672 = vmor %vm1670, %vm1671
        %v1673 = vsel %vm1672, %v1664, %v1669
        %v1674 = vmul.f32 %v1648, %v1663
        %v1675 = vmul.f32 %v1649, %v1663
        %v1676 = vmul.f32 %v1650, %v1673
        %v1677 = vmul.f32 %v1651, %v1673
        %v1678 = vperm.slane %v398, 4
        %v1679 = vperm.slane %v399, 4
        %v1680 = vmul.f32 %v1674, %v1678
        %v1681 = vmul.f32 %v1675, %v1679
        %v1682 = vmul.f32 %v1676, %v1678
        %v1683 = vmul.f32 %v1677, %v1679
        %v1684 = vperm.slane %v398, 5
        %v1685 = vperm.slane %v399, 5
        %v1686 = vadd.f32 %v1680, %v1684
        %v1687 = vadd.f32 %v1681, %v1685
        %v1688 = vadd.f32 %v1682, %v1684
        %v1689 = vadd.f32 %v1683, %v1685
        %v1690 = vld [vmem:[#allocation8] sm:$0xff]
        %v1691 = vld [vmem:[#allocation8 + $0x8] sm:$0xff]
        %v1692 = vld [vmem:[#allocation8 + $0x10] sm:$0xff]
        %v1693 = vld [vmem:[#allocation8 + $0x18] sm:$0xff]
        %v1694 = vld [vmem:[#allocation8 + $0x20] sm:$0xff]
        %v1695 = vld [vmem:[#allocation8 + $0x28] sm:$0xff]
        %v1696 = vld [vmem:[#allocation8 + $0x30] sm:$0xff]
        %v1697 = vld [vmem:[#allocation8 + $0x38] sm:$0xff]
        %v1698 = vld [vmem:[#allocation8 + $0x40] sm:$0xff]
        %v1699 = vld [vmem:[#allocation8 + $0x48] sm:$0xff]
        %v1700 = vld [vmem:[#allocation8 + $0x50] sm:$0xff]
        %v1701 = vld [vmem:[#allocation8 + $0x58] sm:$0xff]
        %v1702 = vld [vmem:[#allocation8 + $0x60] sm:$0xff]
        %v1703 = vld [vmem:[#allocation8 + $0x68] sm:$0xff]
        %v1704 = vld [vmem:[#allocation8 + $0x70] sm:$0xff]
        %v1705 = vld [vmem:[#allocation8 + $0x78] sm:$0xff]
        %v1706 = vld [vmem:[#allocation8 + $0x80] sm:$0xff]
        %v1707 = vld [vmem:[#allocation8 + $0x88] sm:$0xff]
        %v1708 = vld [vmem:[#allocation8 + $0x90] sm:$0xff]
        %v1709 = vld [vmem:[#allocation8 + $0x98] sm:$0xff]
        %v1710 = vld [vmem:[#allocation8 + $0xa0] sm:$0xff]
        %v1711 = vld [vmem:[#allocation8 + $0xa8] sm:$0xff]
        %v1712 = vld [vmem:[#allocation8 + $0xb0] sm:$0xff]
        %v1713 = vld [vmem:[#allocation8 + $0xb8] sm:$0xff]
        %v1714 = vld [vmem:[#allocation8 + $0xc0] sm:$0xff]
        %v1715 = vld [vmem:[#allocation8 + $0xc8] sm:$0xff]
        %v1716 = vld [vmem:[#allocation8 + $0xd0] sm:$0xff]
        %v1717 = vld [vmem:[#allocation8 + $0xd8] sm:$0xff]
        %v1718 = vld [vmem:[#allocation8 + $0xe0] sm:$0xff]
        %v1719 = vld [vmem:[#allocation8 + $0xe8] sm:$0xff]
        %v1720 = vld [vmem:[#allocation8 + $0xf0] sm:$0xff]
        %v1721 = vld [vmem:[#allocation8 + $0xf8] sm:$0xff]
        %v1722 = vld [vmem:[#allocation8 + $0x100] sm:$0xff]
        %v1723 = vld [vmem:[#allocation8 + $0x108] sm:$0xff]
        %v1724 = vld [vmem:[#allocation8 + $0x110] sm:$0xff]
        %v1725 = vld [vmem:[#allocation8 + $0x118] sm:$0xff]
        %v1726 = vld [vmem:[#allocation8 + $0x120] sm:$0xff]
        %v1727 = vld [vmem:[#allocation8 + $0x128] sm:$0xff]
        %v1728 = vld [vmem:[#allocation8 + $0x130] sm:$0xff]
        %v1729 = vld [vmem:[#allocation8 + $0x138] sm:$0xff]
        %v1730 = vld [vmem:[#allocation8 + $0x140] sm:$0xff]
        %v1731 = vld [vmem:[#allocation8 + $0x148] sm:$0xff]
        %v1732 = vld [vmem:[#allocation8 + $0x150] sm:$0xff]
        %v1733 = vld [vmem:[#allocation8 + $0x158] sm:$0xff]
        %v1734 = vld [vmem:[#allocation8 + $0x160] sm:$0xff]
        %v1735 = vld [vmem:[#allocation8 + $0x168] sm:$0xff]
        %v1736 = vld [vmem:[#allocation8 + $0x170] sm:$0xff]
        %v1737 = vld [vmem:[#allocation8 + $0x178] sm:$0xff]
        %v1738 = vld [vmem:[#allocation8 + $0x180] sm:$0xff]
        %v1739 = vld [vmem:[#allocation8 + $0x188] sm:$0xff]
        %v1740 = vld [vmem:[#allocation8 + $0x190] sm:$0xff]
        %v1741 = vld [vmem:[#allocation8 + $0x198] sm:$0xff]
        %v1742 = vld [vmem:[#allocation8 + $0x1a0] sm:$0xff]
        %v1743 = vld [vmem:[#allocation8 + $0x1a8] sm:$0xff]
        %v1744 = vld [vmem:[#allocation8 + $0x1b0] sm:$0xff]
        %v1745 = vld [vmem:[#allocation8 + $0x1b8] sm:$0xff]
        %v1746 = vld [vmem:[#allocation8 + $0x1c0] sm:$0xff]
        %v1747 = vld [vmem:[#allocation8 + $0x1c8] sm:$0xff]
        %v1748 = vld [vmem:[#allocation8 + $0x1d0] sm:$0xff]
        %v1749 = vld [vmem:[#allocation8 + $0x1d8] sm:$0xff]
        %v1750 = vld [vmem:[#allocation8 + $0x1e0] sm:$0xff]
        %v1751 = vld [vmem:[#allocation8 + $0x1e8] sm:$0xff]
        %v1752 = vld [vmem:[#allocation8 + $0x1f0] sm:$0xff]
        %v1753 = vld [vmem:[#allocation8 + $0x1f8] sm:$0xff]
        %v1754 = vld [vmem:[#allocation8 + $0x200] sm:$0xff]
        %v1755 = vld [vmem:[#allocation8 + $0x208] sm:$0xff]
        %v1756 = vld [vmem:[#allocation8 + $0x210] sm:$0xff]
        %v1757 = vld [vmem:[#allocation8 + $0x218] sm:$0xff]
        %v1758 = vld [vmem:[#allocation8 + $0x220] sm:$0xff]
        %v1759 = vld [vmem:[#allocation8 + $0x228] sm:$0xff]
        %v1760 = vld [vmem:[#allocation8 + $0x230] sm:$0xff]
        %v1761 = vld [vmem:[#allocation8 + $0x238] sm:$0xff]
        %v1762 = vld [vmem:[#allocation8 + $0x240] sm:$0xff]
        %v1763 = vld [vmem:[#allocation8 + $0x248] sm:$0xff]
        %v1764 = vld [vmem:[#allocation8 + $0x250] sm:$0xff]
        %v1765 = vld [vmem:[#allocation8 + $0x258] sm:$0xff]
        %v1766 = vld [vmem:[#allocation8 + $0x260] sm:$0xff]
        %v1767 = vld [vmem:[#allocation8 + $0x268] sm:$0xff]
        %v1768 = vld [vmem:[#allocation8 + $0x270] sm:$0xff]
        %v1769 = vld [vmem:[#allocation8 + $0x278] sm:$0xff]
        %v1770 = vld [vmem:[#allocation8 + $0x280] sm:$0xff]
        %v1771 = vld [vmem:[#allocation8 + $0x288] sm:$0xff]
        %v1772 = vld [vmem:[#allocation8 + $0x290] sm:$0xff]
        %v1773 = vld [vmem:[#allocation8 + $0x298] sm:$0xff]
        %v1774 = vld [vmem:[#allocation8 + $0x2a0] sm:$0xff]
        %v1775 = vld [vmem:[#allocation8 + $0x2a8] sm:$0xff]
        %v1776 = vld [vmem:[#allocation8 + $0x2b0] sm:$0xff]
        %v1777 = vld [vmem:[#allocation8 + $0x2b8] sm:$0xff]
        %v1778 = vld [vmem:[#allocation8 + $0x2c0] sm:$0xff]
        %v1779 = vld [vmem:[#allocation8 + $0x2c8] sm:$0xff]
        %v1780 = vld [vmem:[#allocation8 + $0x2d0] sm:$0xff]
        %v1781 = vld [vmem:[#allocation8 + $0x2d8] sm:$0xff]
        %v1782 = vld [vmem:[#allocation8 + $0x2e0] sm:$0xff]
        %v1783 = vld [vmem:[#allocation8 + $0x2e8] sm:$0xff]
        %v1784 = vld [vmem:[#allocation8 + $0x2f0] sm:$0xff]
        %v1785 = vld [vmem:[#allocation8 + $0x2f8] sm:$0xff]
        %v1786 = vld [vmem:[#allocation8 + $0x300] sm:$0xff]
        %v1787 = vld [vmem:[#allocation8 + $0x308] sm:$0xff]
        %v1788 = vld [vmem:[#allocation8 + $0x310] sm:$0xff]
        %v1789 = vld [vmem:[#allocation8 + $0x318] sm:$0xff]
        %v1790 = vld [vmem:[#allocation8 + $0x320] sm:$0xff]
        %v1791 = vld [vmem:[#allocation8 + $0x328] sm:$0xff]
        %v1792 = vld [vmem:[#allocation8 + $0x330] sm:$0xff]
        %v1793 = vld [vmem:[#allocation8 + $0x338] sm:$0xff]
        %v1794 = vld [vmem:[#allocation8 + $0x340] sm:$0xff]
        %v1795 = vld [vmem:[#allocation8 + $0x348] sm:$0xff]
        %v1796 = vld [vmem:[#allocation8 + $0x350] sm:$0xff]
        %v1797 = vld [vmem:[#allocation8 + $0x358] sm:$0xff]
        %v1798 = vld [vmem:[#allocation8 + $0x360] sm:$0xff]
        %v1799 = vld [vmem:[#allocation8 + $0x368] sm:$0xff]
        %v1800 = vld [vmem:[#allocation8 + $0x370] sm:$0xff]
        %v1801 = vld [vmem:[#allocation8 + $0x378] sm:$0xff]
        %v1802 = vld [vmem:[#allocation8 + $0x380] sm:$0xff]
        %v1803 = vld [vmem:[#allocation8 + $0x388] sm:$0xff]
        %v1804 = vld [vmem:[#allocation8 + $0x390] sm:$0xff]
        %v1805 = vld [vmem:[#allocation8 + $0x398] sm:$0xff]
        %v1806 = vld [vmem:[#allocation8 + $0x3a0] sm:$0xff]
        %v1807 = vld [vmem:[#allocation8 + $0x3a8] sm:$0xff]
        %v1808 = vld [vmem:[#allocation8 + $0x3b0] sm:$0xff]
        %v1809 = vld [vmem:[#allocation8 + $0x3b8] sm:$0xff]
        %v1810 = vld [vmem:[#allocation8 + $0x3c0] sm:$0xff]
        %v1811 = vld [vmem:[#allocation8 + $0x3c8] sm:$0xff]
        %v1812 = vld [vmem:[#allocation8 + $0x3d0] sm:$0xff]
        %v1813 = vld [vmem:[#allocation8 + $0x3d8] sm:$0xff]
        %v1814 = vld [vmem:[#allocation8 + $0x3e0] sm:$0xff]
        %v1815 = vld [vmem:[#allocation8 + $0x3e8] sm:$0xff]
        %v1816 = vld [vmem:[#allocation8 + $0x3f0] sm:$0xff]
        %v1817 = vld [vmem:[#allocation8 + $0x3f8] sm:$0xff]
        %v1818 = vld [vmem:[#allocation8 + $0x400] sm:$0xff]
        %v1819 = vld [vmem:[#allocation8 + $0x408] sm:$0xff]
        %v1820 = vld [vmem:[#allocation8 + $0x410] sm:$0xff]
        %v1821 = vld [vmem:[#allocation8 + $0x418] sm:$0xff]
        %v1822 = vld [vmem:[#allocation8 + $0x420] sm:$0xff]
        %v1823 = vld [vmem:[#allocation8 + $0x428] sm:$0xff]
        %v1824 = vld [vmem:[#allocation8 + $0x430] sm:$0xff]
        %v1825 = vld [vmem:[#allocation8 + $0x438] sm:$0xff]
        %v1826 = vld [vmem:[#allocation8 + $0x440] sm:$0xff]
        %v1827 = vld [vmem:[#allocation8 + $0x448] sm:$0xff]
        %v1828 = vld [vmem:[#allocation8 + $0x450] sm:$0xff]
        %v1829 = vld [vmem:[#allocation8 + $0x458] sm:$0xff]
        %v1830 = vld [vmem:[#allocation8 + $0x460] sm:$0xff]
        %v1831 = vld [vmem:[#allocation8 + $0x468] sm:$0xff]
        %v1832 = vld [vmem:[#allocation8 + $0x470] sm:$0xff]
        %v1833 = vld [vmem:[#allocation8 + $0x478] sm:$0xff]
        %v1834 = vld [vmem:[#allocation8 + $0x480] sm:$0xff]
        %v1835 = vld [vmem:[#allocation8 + $0x488] sm:$0xff]
        %v1836 = vld [vmem:[#allocation8 + $0x490] sm:$0xff]
        %v1837 = vld [vmem:[#allocation8 + $0x498] sm:$0xff]
        %v1838 = vld [vmem:[#allocation8 + $0x4a0] sm:$0xff]
        %v1839 = vld [vmem:[#allocation8 + $0x4a8] sm:$0xff]
        %v1840 = vld [vmem:[#allocation8 + $0x4b0] sm:$0xff]
        %v1841 = vld [vmem:[#allocation8 + $0x4b8] sm:$0xff]
        %v1842 = vld [vmem:[#allocation8 + $0x4c0] sm:$0xff]
        %v1843 = vld [vmem:[#allocation8 + $0x4c8] sm:$0xff]
        %v1844 = vld [vmem:[#allocation8 + $0x4d0] sm:$0xff]
        %v1845 = vld [vmem:[#allocation8 + $0x4d8] sm:$0xff]
        %v1846 = vld [vmem:[#allocation8 + $0x4e0] sm:$0xff]
        %v1847 = vld [vmem:[#allocation8 + $0x4e8] sm:$0xff]
        %v1848 = vld [vmem:[#allocation8 + $0x4f0] sm:$0xff]
        %v1849 = vld [vmem:[#allocation8 + $0x4f8] sm:$0xff]
        %v1850 = vld [vmem:[#allocation8 + $0x500] sm:$0xff]
        %v1851 = vld [vmem:[#allocation8 + $0x508] sm:$0xff]
        %v1852 = vld [vmem:[#allocation8 + $0x510] sm:$0xff]
        %v1853 = vld [vmem:[#allocation8 + $0x518] sm:$0xff]
        %v1854 = vld [vmem:[#allocation8 + $0x520] sm:$0xff]
        %v1855 = vld [vmem:[#allocation8 + $0x528] sm:$0xff]
        %v1856 = vld [vmem:[#allocation8 + $0x530] sm:$0xff]
        %v1857 = vld [vmem:[#allocation8 + $0x538] sm:$0xff]
        %v1858 = vld [vmem:[#allocation8 + $0x540] sm:$0xff]
        %v1859 = vld [vmem:[#allocation8 + $0x548] sm:$0xff]
        %v1860 = vld [vmem:[#allocation8 + $0x550] sm:$0xff]
        %v1861 = vld [vmem:[#allocation8 + $0x558] sm:$0xff]
        %v1862 = vld [vmem:[#allocation8 + $0x560] sm:$0xff]
        %v1863 = vld [vmem:[#allocation8 + $0x568] sm:$0xff]
        %v1864 = vld [vmem:[#allocation8 + $0x570] sm:$0xff]
        %v1865 = vld [vmem:[#allocation8 + $0x578] sm:$0xff]
        %v1866 = vld [vmem:[#allocation8 + $0x580] sm:$0xff]
        %v1867 = vld [vmem:[#allocation8 + $0x588] sm:$0xff]
        %v1868 = vld [vmem:[#allocation8 + $0x590] sm:$0xff]
        %v1869 = vld [vmem:[#allocation8 + $0x598] sm:$0xff]
        %v1870 = vld [vmem:[#allocation8 + $0x5a0] sm:$0xff]
        %v1871 = vld [vmem:[#allocation8 + $0x5a8] sm:$0xff]
        %v1872 = vld [vmem:[#allocation8 + $0x5b0] sm:$0xff]
        %v1873 = vld [vmem:[#allocation8 + $0x5b8] sm:$0xff]
        %v1874 = vld [vmem:[#allocation8 + $0x5c0] sm:$0xff]
        %v1875 = vld [vmem:[#allocation8 + $0x5c8] sm:$0xff]
        %v1876 = vld [vmem:[#allocation8 + $0x5d0] sm:$0xff]
        %v1877 = vld [vmem:[#allocation8 + $0x5d8] sm:$0xff]
        %v1878 = vld [vmem:[#allocation8 + $0x5e0] sm:$0xff]
        %v1879 = vld [vmem:[#allocation8 + $0x5e8] sm:$0xff]
        %v1880 = vld [vmem:[#allocation8 + $0x5f0] sm:$0xff]
        %v1881 = vld [vmem:[#allocation8 + $0x5f8] sm:$0xff]
        %v1882 = vld [vmem:[#allocation8 + $0x600] sm:$0xff]
        %v1883 = vld [vmem:[#allocation8 + $0x608] sm:$0xff]
        %v1884 = vld [vmem:[#allocation8 + $0x610] sm:$0xff]
        %v1885 = vld [vmem:[#allocation8 + $0x618] sm:$0xff]
        %v1886 = vld [vmem:[#allocation8 + $0x620] sm:$0xff]
        %v1887 = vld [vmem:[#allocation8 + $0x628] sm:$0xff]
        %v1888 = vld [vmem:[#allocation8 + $0x630] sm:$0xff]
        %v1889 = vld [vmem:[#allocation8 + $0x638] sm:$0xff]
        %v1890 = vld [vmem:[#allocation8 + $0x640] sm:$0xff]
        %v1891 = vld [vmem:[#allocation8 + $0x648] sm:$0xff]
        %v1892 = vld [vmem:[#allocation8 + $0x650] sm:$0xff]
        %v1893 = vld [vmem:[#allocation8 + $0x658] sm:$0xff]
        %v1894 = vld [vmem:[#allocation8 + $0x660] sm:$0xff]
        %v1895 = vld [vmem:[#allocation8 + $0x668] sm:$0xff]
        %v1896 = vld [vmem:[#allocation8 + $0x670] sm:$0xff]
        %v1897 = vld [vmem:[#allocation8 + $0x678] sm:$0xff]
        %v1898 = vld [vmem:[#allocation8 + $0x680] sm:$0xff]
        %v1899 = vld [vmem:[#allocation8 + $0x688] sm:$0xff]
        %v1900 = vld [vmem:[#allocation8 + $0x690] sm:$0xff]
        %v1901 = vld [vmem:[#allocation8 + $0x698] sm:$0xff]
        %v1902 = vld [vmem:[#allocation8 + $0x6a0] sm:$0xff]
        %v1903 = vld [vmem:[#allocation8 + $0x6a8] sm:$0xff]
        %v1904 = vld [vmem:[#allocation8 + $0x6b0] sm:$0xff]
        %v1905 = vld [vmem:[#allocation8 + $0x6b8] sm:$0xff]
        %v1906 = vld [vmem:[#allocation8 + $0x6c0] sm:$0xff]
        %v1907 = vld [vmem:[#allocation8 + $0x6c8] sm:$0xff]
        %v1908 = vld [vmem:[#allocation8 + $0x6d0] sm:$0xff]
        %v1909 = vld [vmem:[#allocation8 + $0x6d8] sm:$0xff]
        %v1910 = vld [vmem:[#allocation8 + $0x6e0] sm:$0xff]
        %v1911 = vld [vmem:[#allocation8 + $0x6e8] sm:$0xff]
        %v1912 = vld [vmem:[#allocation8 + $0x6f0] sm:$0xff]
        %v1913 = vld [vmem:[#allocation8 + $0x6f8] sm:$0xff]
        %v1914 = vld [vmem:[#allocation8 + $0x700] sm:$0xff]
        %v1915 = vld [vmem:[#allocation8 + $0x708] sm:$0xff]
        %v1916 = vld [vmem:[#allocation8 + $0x710] sm:$0xff]
        %v1917 = vld [vmem:[#allocation8 + $0x718] sm:$0xff]
        %v1918 = vld [vmem:[#allocation8 + $0x720] sm:$0xff]
        %v1919 = vld [vmem:[#allocation8 + $0x728] sm:$0xff]
        %v1920 = vld [vmem:[#allocation8 + $0x730] sm:$0xff]
        %v1921 = vld [vmem:[#allocation8 + $0x738] sm:$0xff]
        %v1922 = vld [vmem:[#allocation8 + $0x740] sm:$0xff]
        %v1923 = vld [vmem:[#allocation8 + $0x748] sm:$0xff]
        %v1924 = vld [vmem:[#allocation8 + $0x750] sm:$0xff]
        %v1925 = vld [vmem:[#allocation8 + $0x758] sm:$0xff]
        %v1926 = vld [vmem:[#allocation8 + $0x760] sm:$0xff]
        %v1927 = vld [vmem:[#allocation8 + $0x768] sm:$0xff]
        %v1928 = vld [vmem:[#allocation8 + $0x770] sm:$0xff]
        %v1929 = vld [vmem:[#allocation8 + $0x778] sm:$0xff]
        %v1930 = vld [vmem:[#allocation8 + $0x780] sm:$0xff]
        %v1931 = vld [vmem:[#allocation8 + $0x788] sm:$0xff]
        %v1932 = vld [vmem:[#allocation8 + $0x790] sm:$0xff]
        %v1933 = vld [vmem:[#allocation8 + $0x798] sm:$0xff]
        %v1934 = vld [vmem:[#allocation8 + $0x7a0] sm:$0xff]
        %v1935 = vld [vmem:[#allocation8 + $0x7a8] sm:$0xff]
        %v1936 = vld [vmem:[#allocation8 + $0x7b0] sm:$0xff]
        %v1937 = vld [vmem:[#allocation8 + $0x7b8] sm:$0xff]
        %v1938 = vld [vmem:[#allocation8 + $0x7c0] sm:$0xff]
        %v1939 = vld [vmem:[#allocation8 + $0x7c8] sm:$0xff]
        %v1940 = vld [vmem:[#allocation8 + $0x7d0] sm:$0xff]
        %v1941 = vld [vmem:[#allocation8 + $0x7d8] sm:$0xff]
        %v1942 = vld [vmem:[#allocation8 + $0x7e0] sm:$0xff]
        %v1943 = vld [vmem:[#allocation8 + $0x7e8] sm:$0xff]
        %v1944 = vld [vmem:[#allocation8 + $0x7f0] sm:$0xff]
        %v1945 = vld [vmem:[#allocation8 + $0x7f8] sm:$0xff]
        %v1946 = vld [vmem:[#allocation13] sm:$0xff]
        %v1948 = vperm.slane %v1946, 0
        %v1949 = vperm.slane %v1946, 1
        %v1950 = vperm.slane %v1946, 2
        %v1951 = vperm.slane %v1946, 3
        %v1952 = vperm.slane %v1946, 4
        %v1953 = vperm.slane %v1946, 5
        %v1954 = vperm.slane %v1946, 6
        %v1955 = vperm.slane %v1946, 7
        %1964 = vmatpush.msra.mxu0 %v1810
        %1965 = vmatpush.msra.mxu0 %v1802
        %1966 = vmatpush.msra.mxu0 %v1794
        %1967 = vmatpush.msra.mxu0 %v1786
        %1968 = vmatpush.msra.mxu0 %v1778
        %1969 = vmatpush.msra.mxu0 %v1770
        %1970 = vmatpush.msra.mxu0 %v1762
        %1971 = vmatpush.msra.mxu0 %v1754
        %1972 = vmatpush.msra.mxu0 %v1746
        %1973 = vmatpush.msra.mxu0 %v1738
        %1974 = vmatpush.msra.mxu0 %v1730
        %1975 = vmatpush.msra.mxu0 %v1722
        %1976 = vmatpush.msra.mxu0 %v1714
        %1977 = vmatpush.msra.mxu0 %v1706
        %1978 = vmatpush.msra.mxu0 %v1698
        %1979 = vmatpush.msra.mxu0 %v1690
        %1980 = vmatmul.f32.gmra.mxu0 %v1686
        %v1981 = vpop.f32.mrf.mxu0
        %v1982 = vadd.f32 %v1948, %v1981
        %1983 = vmatmul.f32.gmra.mxu0 %v1688
        %v1984 = vpop.f32.mrf.mxu0
        %v1985 = vadd.f32 %v1948, %v1984
        %1986 = vdwg.mxu0
        %1987 = vmatpush.msra.mxu0 %v1938
        %1988 = vmatpush.msra.mxu0 %v1930
        %1989 = vmatpush.msra.mxu0 %v1922
        %1990 = vmatpush.msra.mxu0 %v1914
        %1991 = vmatpush.msra.mxu0 %v1906
        %1992 = vmatpush.msra.mxu0 %v1898
        %1993 = vmatpush.msra.mxu0 %v1890
        %1994 = vmatpush.msra.mxu0 %v1882
        %1995 = vmatpush.msra.mxu0 %v1874
        %1996 = vmatpush.msra.mxu0 %v1866
        %1997 = vmatpush.msra.mxu0 %v1858
        %1998 = vmatpush.msra.mxu0 %v1850
        %1999 = vmatpush.msra.mxu0 %v1842
        %2000 = vmatpush.msra.mxu0 %v1834
        %2001 = vmatpush.msra.mxu0 %v1826
        %2002 = vmatpush.msra.mxu0 %v1818
        %2003 = vmatmul.f32.gmra.mxu0 %v1687
        %v2004 = vpop.f32.mrf.mxu0
        %v2005 = vadd.f32 %v1982, %v2004
        %2006 = vmatmul.f32.gmra.mxu0 %v1689
        %v2007 = vpop.f32.mrf.mxu0
        %v2008 = vadd.f32 %v1985, %v2007
        %2009 = vdwg.mxu0
        %2010 = vmatpush.msra.mxu0 %v1811
        %2011 = vmatpush.msra.mxu0 %v1803
        %2012 = vmatpush.msra.mxu0 %v1795
        %2013 = vmatpush.msra.mxu0 %v1787
        %2014 = vmatpush.msra.mxu0 %v1779
        %2015 = vmatpush.msra.mxu0 %v1771
        %2016 = vmatpush.msra.mxu0 %v1763
        %2017 = vmatpush.msra.mxu0 %v1755
        %2018 = vmatpush.msra.mxu0 %v1747
        %2019 = vmatpush.msra.mxu0 %v1739
        %2020 = vmatpush.msra.mxu0 %v1731
        %2021 = vmatpush.msra.mxu0 %v1723
        %2022 = vmatpush.msra.mxu0 %v1715
        %2023 = vmatpush.msra.mxu0 %v1707
        %2024 = vmatpush.msra.mxu0 %v1699
        %2025 = vmatpush.msra.mxu0 %v1691
        %2026 = vmatmul.f32.gmra.mxu0 %v1686
        %v2027 = vpop.f32.mrf.mxu0
        %v2028 = vadd.f32 %v1949, %v2027
        %2029 = vmatmul.f32.gmra.mxu0 %v1688
        %v2030 = vpop.f32.mrf.mxu0
        %v2031 = vadd.f32 %v1949, %v2030
        %2032 = vdwg.mxu0
        %2033 = vmatpush.msra.mxu0 %v1939
        %2034 = vmatpush.msra.mxu0 %v1931
        %2035 = vmatpush.msra.mxu0 %v1923
        %2036 = vmatpush.msra.mxu0 %v1915
        %2037 = vmatpush.msra.mxu0 %v1907
        %2038 = vmatpush.msra.mxu0 %v1899
        %2039 = vmatpush.msra.mxu0 %v1891
        %2040 = vmatpush.msra.mxu0 %v1883
        %2041 = vmatpush.msra.mxu0 %v1875
        %2042 = vmatpush.msra.mxu0 %v1867
        %2043 = vmatpush.msra.mxu0 %v1859
        %2044 = vmatpush.msra.mxu0 %v1851
        %2045 = vmatpush.msra.mxu0 %v1843
        %2046 = vmatpush.msra.mxu0 %v1835
        %2047 = vmatpush.msra.mxu0 %v1827
        %2048 = vmatpush.msra.mxu0 %v1819
        %2049 = vmatmul.f32.gmra.mxu0 %v1687
        %v2050 = vpop.f32.mrf.mxu0
        %v2051 = vadd.f32 %v2028, %v2050
        %2052 = vmatmul.f32.gmra.mxu0 %v1689
        %v2053 = vpop.f32.mrf.mxu0
        %v2054 = vadd.f32 %v2031, %v2053
        %2055 = vdwg.mxu0
        %2056 = vmatpush.msra.mxu0 %v1812
        %2057 = vmatpush.msra.mxu0 %v1804
        %2058 = vmatpush.msra.mxu0 %v1796
        %2059 = vmatpush.msra.mxu0 %v1788
        %2060 = vmatpush.msra.mxu0 %v1780
        %2061 = vmatpush.msra.mxu0 %v1772
        %2062 = vmatpush.msra.mxu0 %v1764
        %2063 = vmatpush.msra.mxu0 %v1756
        %2064 = vmatpush.msra.mxu0 %v1748
        %2065 = vmatpush.msra.mxu0 %v1740
        %2066 = vmatpush.msra.mxu0 %v1732
        %2067 = vmatpush.msra.mxu0 %v1724
        %2068 = vmatpush.msra.mxu0 %v1716
        %2069 = vmatpush.msra.mxu0 %v1708
        %2070 = vmatpush.msra.mxu0 %v1700
        %2071 = vmatpush.msra.mxu0 %v1692
        %2072 = vmatmul.f32.gmra.mxu0 %v1686
        %v2073 = vpop.f32.mrf.mxu0
        %v2074 = vadd.f32 %v1950, %v2073
        %2075 = vmatmul.f32.gmra.mxu0 %v1688
        %v2076 = vpop.f32.mrf.mxu0
        %v2077 = vadd.f32 %v1950, %v2076
        %2078 = vdwg.mxu0
        %2079 = vmatpush.msra.mxu0 %v1940
        %2080 = vmatpush.msra.mxu0 %v1932
        %2081 = vmatpush.msra.mxu0 %v1924
        %2082 = vmatpush.msra.mxu0 %v1916
        %2083 = vmatpush.msra.mxu0 %v1908
        %2084 = vmatpush.msra.mxu0 %v1900
        %2085 = vmatpush.msra.mxu0 %v1892
        %2086 = vmatpush.msra.mxu0 %v1884
        %2087 = vmatpush.msra.mxu0 %v1876
        %2088 = vmatpush.msra.mxu0 %v1868
        %2089 = vmatpush.msra.mxu0 %v1860
        %2090 = vmatpush.msra.mxu0 %v1852
        %2091 = vmatpush.msra.mxu0 %v1844
        %2092 = vmatpush.msra.mxu0 %v1836
        %2093 = vmatpush.msra.mxu0 %v1828
        %2094 = vmatpush.msra.mxu0 %v1820
        %2095 = vmatmul.f32.gmra.mxu0 %v1687
        %v2096 = vpop.f32.mrf.mxu0
        %v2097 = vadd.f32 %v2074, %v2096
        %2098 = vmatmul.f32.gmra.mxu0 %v1689
        %v2099 = vpop.f32.mrf.mxu0
        %v2100 = vadd.f32 %v2077, %v2099
        %2101 = vdwg.mxu0
        %2102 = vmatpush.msra.mxu0 %v1813
        %2103 = vmatpush.msra.mxu0 %v1805
        %2104 = vmatpush.msra.mxu0 %v1797
        %2105 = vmatpush.msra.mxu0 %v1789
        %2106 = vmatpush.msra.mxu0 %v1781
        %2107 = vmatpush.msra.mxu0 %v1773
        %2108 = vmatpush.msra.mxu0 %v1765
        %2109 = vmatpush.msra.mxu0 %v1757
        %2110 = vmatpush.msra.mxu0 %v1749
        %2111 = vmatpush.msra.mxu0 %v1741
        %2112 = vmatpush.msra.mxu0 %v1733
        %2113 = vmatpush.msra.mxu0 %v1725
        %2114 = vmatpush.msra.mxu0 %v1717
        %2115 = vmatpush.msra.mxu0 %v1709
        %2116 = vmatpush.msra.mxu0 %v1701
        %2117 = vmatpush.msra.mxu0 %v1693
        %2118 = vmatmul.f32.gmra.mxu0 %v1686
        %v2119 = vpop.f32.mrf.mxu0
        %v2120 = vadd.f32 %v1951, %v2119
        %2121 = vmatmul.f32.gmra.mxu0 %v1688
        %v2122 = vpop.f32.mrf.mxu0
        %v2123 = vadd.f32 %v1951, %v2122
        %2124 = vdwg.mxu0
        %2125 = vmatpush.msra.mxu0 %v1941
        %2126 = vmatpush.msra.mxu0 %v1933
        %2127 = vmatpush.msra.mxu0 %v1925
        %2128 = vmatpush.msra.mxu0 %v1917
        %2129 = vmatpush.msra.mxu0 %v1909
        %2130 = vmatpush.msra.mxu0 %v1901
        %2131 = vmatpush.msra.mxu0 %v1893
        %2132 = vmatpush.msra.mxu0 %v1885
        %2133 = vmatpush.msra.mxu0 %v1877
        %2134 = vmatpush.msra.mxu0 %v1869
        %2135 = vmatpush.msra.mxu0 %v1861
        %2136 = vmatpush.msra.mxu0 %v1853
        %2137 = vmatpush.msra.mxu0 %v1845
        %2138 = vmatpush.msra.mxu0 %v1837
        %2139 = vmatpush.msra.mxu0 %v1829
        %2140 = vmatpush.msra.mxu0 %v1821
        %2141 = vmatmul.f32.gmra.mxu0 %v1687
        %v2142 = vpop.f32.mrf.mxu0
        %v2143 = vadd.f32 %v2120, %v2142
        %2144 = vmatmul.f32.gmra.mxu0 %v1689
        %v2145 = vpop.f32.mrf.mxu0
        %v2146 = vadd.f32 %v2123, %v2145
        %2147 = vdwg.mxu0
        %2148 = vmatpush.msra.mxu0 %v1814
        %2149 = vmatpush.msra.mxu0 %v1806
        %2150 = vmatpush.msra.mxu0 %v1798
        %2151 = vmatpush.msra.mxu0 %v1790
        %2152 = vmatpush.msra.mxu0 %v1782
        %2153 = vmatpush.msra.mxu0 %v1774
        %2154 = vmatpush.msra.mxu0 %v1766
        %2155 = vmatpush.msra.mxu0 %v1758
        %2156 = vmatpush.msra.mxu0 %v1750
        %2157 = vmatpush.msra.mxu0 %v1742
        %2158 = vmatpush.msra.mxu0 %v1734
        %2159 = vmatpush.msra.mxu0 %v1726
        %2160 = vmatpush.msra.mxu0 %v1718
        %2161 = vmatpush.msra.mxu0 %v1710
        %2162 = vmatpush.msra.mxu0 %v1702
        %2163 = vmatpush.msra.mxu0 %v1694
        %2164 = vmatmul.f32.gmra.mxu0 %v1686
        %v2165 = vpop.f32.mrf.mxu0
        %v2166 = vadd.f32 %v1952, %v2165
        %2167 = vmatmul.f32.gmra.mxu0 %v1688
        %v2168 = vpop.f32.mrf.mxu0
        %v2169 = vadd.f32 %v1952, %v2168
        %2170 = vdwg.mxu0
        %2171 = vmatpush.msra.mxu0 %v1942
        %2172 = vmatpush.msra.mxu0 %v1934
        %2173 = vmatpush.msra.mxu0 %v1926
        %2174 = vmatpush.msra.mxu0 %v1918
        %2175 = vmatpush.msra.mxu0 %v1910
        %2176 = vmatpush.msra.mxu0 %v1902
        %2177 = vmatpush.msra.mxu0 %v1894
        %2178 = vmatpush.msra.mxu0 %v1886
        %2179 = vmatpush.msra.mxu0 %v1878
        %2180 = vmatpush.msra.mxu0 %v1870
        %2181 = vmatpush.msra.mxu0 %v1862
        %2182 = vmatpush.msra.mxu0 %v1854
        %2183 = vmatpush.msra.mxu0 %v1846
        %2184 = vmatpush.msra.mxu0 %v1838
        %2185 = vmatpush.msra.mxu0 %v1830
        %2186 = vmatpush.msra.mxu0 %v1822
        %2187 = vmatmul.f32.gmra.mxu0 %v1687
        %v2188 = vpop.f32.mrf.mxu0
        %v2189 = vadd.f32 %v2166, %v2188
        %2190 = vmatmul.f32.gmra.mxu0 %v1689
        %v2191 = vpop.f32.mrf.mxu0
        %v2192 = vadd.f32 %v2169, %v2191
        %2193 = vdwg.mxu0
        %2194 = vmatpush.msra.mxu0 %v1815
        %2195 = vmatpush.msra.mxu0 %v1807
        %2196 = vmatpush.msra.mxu0 %v1799
        %2197 = vmatpush.msra.mxu0 %v1791
        %2198 = vmatpush.msra.mxu0 %v1783
        %2199 = vmatpush.msra.mxu0 %v1775
        %2200 = vmatpush.msra.mxu0 %v1767
        %2201 = vmatpush.msra.mxu0 %v1759
        %2202 = vmatpush.msra.mxu0 %v1751
        %2203 = vmatpush.msra.mxu0 %v1743
        %2204 = vmatpush.msra.mxu0 %v1735
        %2205 = vmatpush.msra.mxu0 %v1727
        %2206 = vmatpush.msra.mxu0 %v1719
        %2207 = vmatpush.msra.mxu0 %v1711
        %2208 = vmatpush.msra.mxu0 %v1703
        %2209 = vmatpush.msra.mxu0 %v1695
        %2210 = vmatmul.f32.gmra.mxu0 %v1686
        %v2211 = vpop.f32.mrf.mxu0
        %v2212 = vadd.f32 %v1953, %v2211
        %2213 = vmatmul.f32.gmra.mxu0 %v1688
        %v2214 = vpop.f32.mrf.mxu0
        %v2215 = vadd.f32 %v1953, %v2214
        %2216 = vdwg.mxu0
        %2217 = vmatpush.msra.mxu0 %v1943
        %2218 = vmatpush.msra.mxu0 %v1935
        %2219 = vmatpush.msra.mxu0 %v1927
        %2220 = vmatpush.msra.mxu0 %v1919
        %2221 = vmatpush.msra.mxu0 %v1911
        %2222 = vmatpush.msra.mxu0 %v1903
        %2223 = vmatpush.msra.mxu0 %v1895
        %2224 = vmatpush.msra.mxu0 %v1887
        %2225 = vmatpush.msra.mxu0 %v1879
        %2226 = vmatpush.msra.mxu0 %v1871
        %2227 = vmatpush.msra.mxu0 %v1863
        %2228 = vmatpush.msra.mxu0 %v1855
        %2229 = vmatpush.msra.mxu0 %v1847
        %2230 = vmatpush.msra.mxu0 %v1839
        %2231 = vmatpush.msra.mxu0 %v1831
        %2232 = vmatpush.msra.mxu0 %v1823
        %2233 = vmatmul.f32.gmra.mxu0 %v1687
        %v2234 = vpop.f32.mrf.mxu0
        %v2235 = vadd.f32 %v2212, %v2234
        %2236 = vmatmul.f32.gmra.mxu0 %v1689
        %v2237 = vpop.f32.mrf.mxu0
        %v2238 = vadd.f32 %v2215, %v2237
        %2239 = vdwg.mxu0
        %2240 = vmatpush.msra.mxu0 %v1816
        %2241 = vmatpush.msra.mxu0 %v1808
        %2242 = vmatpush.msra.mxu0 %v1800
        %2243 = vmatpush.msra.mxu0 %v1792
        %2244 = vmatpush.msra.mxu0 %v1784
        %2245 = vmatpush.msra.mxu0 %v1776
        %2246 = vmatpush.msra.mxu0 %v1768
        %2247 = vmatpush.msra.mxu0 %v1760
        %2248 = vmatpush.msra.mxu0 %v1752
        %2249 = vmatpush.msra.mxu0 %v1744
        %2250 = vmatpush.msra.mxu0 %v1736
        %2251 = vmatpush.msra.mxu0 %v1728
        %2252 = vmatpush.msra.mxu0 %v1720
        %2253 = vmatpush.msra.mxu0 %v1712
        %2254 = vmatpush.msra.mxu0 %v1704
        %2255 = vmatpush.msra.mxu0 %v1696
        %2256 = vmatmul.f32.gmra.mxu0 %v1686
        %v2257 = vpop.f32.mrf.mxu0
        %v2258 = vadd.f32 %v1954, %v2257
        %2259 = vmatmul.f32.gmra.mxu0 %v1688
        %v2260 = vpop.f32.mrf.mxu0
        %v2261 = vadd.f32 %v1954, %v2260
        %2262 = vdwg.mxu0
        %2263 = vmatpush.msra.mxu0 %v1944
        %2264 = vmatpush.msra.mxu0 %v1936
        %2265 = vmatpush.msra.mxu0 %v1928
        %2266 = vmatpush.msra.mxu0 %v1920
        %2267 = vmatpush.msra.mxu0 %v1912
        %2268 = vmatpush.msra.mxu0 %v1904
        %2269 = vmatpush.msra.mxu0 %v1896
        %2270 = vmatpush.msra.mxu0 %v1888
        %2271 = vmatpush.msra.mxu0 %v1880
        %2272 = vmatpush.msra.mxu0 %v1872
        %2273 = vmatpush.msra.mxu0 %v1864
        %2274 = vmatpush.msra.mxu0 %v1856
        %2275 = vmatpush.msra.mxu0 %v1848
        %2276 = vmatpush.msra.mxu0 %v1840
        %2277 = vmatpush.msra.mxu0 %v1832
        %2278 = vmatpush.msra.mxu0 %v1824
        %2279 = vmatmul.f32.gmra.mxu0 %v1687
        %v2280 = vpop.f32.mrf.mxu0
        %v2281 = vadd.f32 %v2258, %v2280
        %2282 = vmatmul.f32.gmra.mxu0 %v1689
        %v2283 = vpop.f32.mrf.mxu0
        %v2284 = vadd.f32 %v2261, %v2283
        %2285 = vdwg.mxu0
        %2286 = vmatpush.msra.mxu0 %v1817
        %2287 = vmatpush.msra.mxu0 %v1809
        %2288 = vmatpush.msra.mxu0 %v1801
        %2289 = vmatpush.msra.mxu0 %v1793
        %2290 = vmatpush.msra.mxu0 %v1785
        %2291 = vmatpush.msra.mxu0 %v1777
        %2292 = vmatpush.msra.mxu0 %v1769
        %2293 = vmatpush.msra.mxu0 %v1761
        %2294 = vmatpush.msra.mxu0 %v1753
        %2295 = vmatpush.msra.mxu0 %v1745
        %2296 = vmatpush.msra.mxu0 %v1737
        %2297 = vmatpush.msra.mxu0 %v1729
        %2298 = vmatpush.msra.mxu0 %v1721
        %2299 = vmatpush.msra.mxu0 %v1713
        %2300 = vmatpush.msra.mxu0 %v1705
        %2301 = vmatpush.msra.mxu0 %v1697
        %2302 = vmatmul.f32.gmra.mxu0 %v1686
        %v2303 = vpop.f32.mrf.mxu0
        %v2304 = vadd.f32 %v1955, %v2303
        %2305 = vmatmul.f32.gmra.mxu0 %v1688
        %v2306 = vpop.f32.mrf.mxu0
        %v2307 = vadd.f32 %v1955, %v2306
        %2308 = vdwg.mxu0
        %2309 = vmatpush.msra.mxu0 %v1945
        %2310 = vmatpush.msra.mxu0 %v1937
        %2311 = vmatpush.msra.mxu0 %v1929
        %2312 = vmatpush.msra.mxu0 %v1921
        %2313 = vmatpush.msra.mxu0 %v1913
        %2314 = vmatpush.msra.mxu0 %v1905
        %2315 = vmatpush.msra.mxu0 %v1897
        %2316 = vmatpush.msra.mxu0 %v1889
        %2317 = vmatpush.msra.mxu0 %v1881
        %2318 = vmatpush.msra.mxu0 %v1873
        %2319 = vmatpush.msra.mxu0 %v1865
        %2320 = vmatpush.msra.mxu0 %v1857
        %2321 = vmatpush.msra.mxu0 %v1849
        %2322 = vmatpush.msra.mxu0 %v1841
        %2323 = vmatpush.msra.mxu0 %v1833
        %2324 = vmatpush.msra.mxu0 %v1825
        %2325 = vmatmul.f32.gmra.mxu0 %v1687
        %v2326 = vpop.f32.mrf.mxu0
        %v2327 = vadd.f32 %v2304, %v2326
        %2328 = vmatmul.f32.gmra.mxu0 %v1689
        %v2329 = vpop.f32.mrf.mxu0
        %v2330 = vadd.f32 %v2307, %v2329
        %2331 = vdwg.mxu0
        %v2332 = vmax.f32 %v2005, 0.0
        %v2333 = vmax.f32 %v2051, 0.0
        %v2334 = vmax.f32 %v2097, 0.0
        %v2335 = vmax.f32 %v2143, 0.0
        %v2336 = vmax.f32 %v2189, 0.0
        %v2337 = vmax.f32 %v2235, 0.0
        %v2338 = vmax.f32 %v2281, 0.0
        %v2339 = vmax.f32 %v2327, 0.0
        %v2340 = vmax.f32 %v2008, 0.0
        %v2341 = vmax.f32 %v2054, 0.0
        %v2342 = vmax.f32 %v2100, 0.0
        %v2343 = vmax.f32 %v2146, 0.0
        %v2344 = vmax.f32 %v2192, 0.0
        %v2345 = vmax.f32 %v2238, 0.0
        %v2346 = vmax.f32 %v2284, 0.0
        %v2347 = vmax.f32 %v2330, 0.0
        %v2348 = vld [vmem:[#allocation10] sm:$0xff]
        %v2349 = vld [vmem:[#allocation10 + $0x8] sm:$0xff]
        %v2350 = vld [vmem:[#allocation10 + $0x10] sm:$0xff]
        %v2351 = vld [vmem:[#allocation10 + $0x18] sm:$0xff]
        %v2352 = vld [vmem:[#allocation10 + $0x20] sm:$0xff]
        %v2353 = vld [vmem:[#allocation10 + $0x28] sm:$0xff]
        %v2354 = vld [vmem:[#allocation10 + $0x30] sm:$0xff]
        %v2355 = vld [vmem:[#allocation10 + $0x38] sm:$0xff]
        %v2356 = vld [vmem:[#allocation10 + $0x40] sm:$0xff]
        %v2357 = vld [vmem:[#allocation10 + $0x48] sm:$0xff]
        %v2358 = vld [vmem:[#allocation10 + $0x50] sm:$0xff]
        %v2359 = vld [vmem:[#allocation10 + $0x58] sm:$0xff]
        %v2360 = vld [vmem:[#allocation10 + $0x60] sm:$0xff]
        %v2361 = vld [vmem:[#allocation10 + $0x68] sm:$0xff]
        %v2362 = vld [vmem:[#allocation10 + $0x70] sm:$0xff]
        %v2363 = vld [vmem:[#allocation10 + $0x78] sm:$0xff]
        %v2364 = vld [vmem:[#allocation10 + $0x80] sm:$0xff]
        %v2365 = vld [vmem:[#allocation10 + $0x88] sm:$0xff]
        %v2366 = vld [vmem:[#allocation10 + $0x90] sm:$0xff]
        %v2367 = vld [vmem:[#allocation10 + $0x98] sm:$0xff]
        %v2368 = vld [vmem:[#allocation10 + $0xa0] sm:$0xff]
        %v2369 = vld [vmem:[#allocation10 + $0xa8] sm:$0xff]
        %v2370 = vld [vmem:[#allocation10 + $0xb0] sm:$0xff]
        %v2371 = vld [vmem:[#allocation10 + $0xb8] sm:$0xff]
        %v2372 = vld [vmem:[#allocation10 + $0xc0] sm:$0xff]
        %v2373 = vld [vmem:[#allocation10 + $0xc8] sm:$0xff]
        %v2374 = vld [vmem:[#allocation10 + $0xd0] sm:$0xff]
        %v2375 = vld [vmem:[#allocation10 + $0xd8] sm:$0xff]
        %v2376 = vld [vmem:[#allocation10 + $0xe0] sm:$0xff]
        %v2377 = vld [vmem:[#allocation10 + $0xe8] sm:$0xff]
        %v2378 = vld [vmem:[#allocation10 + $0xf0] sm:$0xff]
        %v2379 = vld [vmem:[#allocation10 + $0xf8] sm:$0xff]
        %v2380 = vld [vmem:[#allocation10 + $0x100] sm:$0xff]
        %v2381 = vld [vmem:[#allocation10 + $0x108] sm:$0xff]
        %v2382 = vld [vmem:[#allocation10 + $0x110] sm:$0xff]
        %v2383 = vld [vmem:[#allocation10 + $0x118] sm:$0xff]
        %v2384 = vld [vmem:[#allocation10 + $0x120] sm:$0xff]
        %v2385 = vld [vmem:[#allocation10 + $0x128] sm:$0xff]
        %v2386 = vld [vmem:[#allocation10 + $0x130] sm:$0xff]
        %v2387 = vld [vmem:[#allocation10 + $0x138] sm:$0xff]
        %v2388 = vld [vmem:[#allocation10 + $0x140] sm:$0xff]
        %v2389 = vld [vmem:[#allocation10 + $0x148] sm:$0xff]
        %v2390 = vld [vmem:[#allocation10 + $0x150] sm:$0xff]
        %v2391 = vld [vmem:[#allocation10 + $0x158] sm:$0xff]
        %v2392 = vld [vmem:[#allocation10 + $0x160] sm:$0xff]
        %v2393 = vld [vmem:[#allocation10 + $0x168] sm:$0xff]
        %v2394 = vld [vmem:[#allocation10 + $0x170] sm:$0xff]
        %v2395 = vld [vmem:[#allocation10 + $0x178] sm:$0xff]
        %v2396 = vld [vmem:[#allocation10 + $0x180] sm:$0xff]
        %v2397 = vld [vmem:[#allocation10 + $0x188] sm:$0xff]
        %v2398 = vld [vmem:[#allocation10 + $0x190] sm:$0xff]
        %v2399 = vld [vmem:[#allocation10 + $0x198] sm:$0xff]
        %v2400 = vld [vmem:[#allocation10 + $0x1a0] sm:$0xff]
        %v2401 = vld [vmem:[#allocation10 + $0x1a8] sm:$0xff]
        %v2402 = vld [vmem:[#allocation10 + $0x1b0] sm:$0xff]
        %v2403 = vld [vmem:[#allocation10 + $0x1b8] sm:$0xff]
        %v2404 = vld [vmem:[#allocation10 + $0x1c0] sm:$0xff]
        %v2405 = vld [vmem:[#allocation10 + $0x1c8] sm:$0xff]
        %v2406 = vld [vmem:[#allocation10 + $0x1d0] sm:$0xff]
        %v2407 = vld [vmem:[#allocation10 + $0x1d8] sm:$0xff]
        %v2408 = vld [vmem:[#allocation10 + $0x1e0] sm:$0xff]
        %v2409 = vld [vmem:[#allocation10 + $0x1e8] sm:$0xff]
        %v2410 = vld [vmem:[#allocation10 + $0x1f0] sm:$0xff]
        %v2411 = vld [vmem:[#allocation10 + $0x1f8] sm:$0xff]
        %v2412 = vld [vmem:[#allocation10 + $0x200] sm:$0xff]
        %v2413 = vld [vmem:[#allocation10 + $0x208] sm:$0xff]
        %v2414 = vld [vmem:[#allocation10 + $0x210] sm:$0xff]
        %v2415 = vld [vmem:[#allocation10 + $0x218] sm:$0xff]
        %v2416 = vld [vmem:[#allocation10 + $0x220] sm:$0xff]
        %v2417 = vld [vmem:[#allocation10 + $0x228] sm:$0xff]
        %v2418 = vld [vmem:[#allocation10 + $0x230] sm:$0xff]
        %v2419 = vld [vmem:[#allocation10 + $0x238] sm:$0xff]
        %v2420 = vld [vmem:[#allocation10 + $0x240] sm:$0xff]
        %v2421 = vld [vmem:[#allocation10 + $0x248] sm:$0xff]
        %v2422 = vld [vmem:[#allocation10 + $0x250] sm:$0xff]
        %v2423 = vld [vmem:[#allocation10 + $0x258] sm:$0xff]
        %v2424 = vld [vmem:[#allocation10 + $0x260] sm:$0xff]
        %v2425 = vld [vmem:[#allocation10 + $0x268] sm:$0xff]
        %v2426 = vld [vmem:[#allocation10 + $0x270] sm:$0xff]
        %v2427 = vld [vmem:[#allocation10 + $0x278] sm:$0xff]
        %v2428 = vld [vmem:[#allocation10 + $0x280] sm:$0xff]
        %v2429 = vld [vmem:[#allocation10 + $0x288] sm:$0xff]
        %v2430 = vld [vmem:[#allocation10 + $0x290] sm:$0xff]
        %v2431 = vld [vmem:[#allocation10 + $0x298] sm:$0xff]
        %v2432 = vld [vmem:[#allocation10 + $0x2a0] sm:$0xff]
        %v2433 = vld [vmem:[#allocation10 + $0x2a8] sm:$0xff]
        %v2434 = vld [vmem:[#allocation10 + $0x2b0] sm:$0xff]
        %v2435 = vld [vmem:[#allocation10 + $0x2b8] sm:$0xff]
        %v2436 = vld [vmem:[#allocation10 + $0x2c0] sm:$0xff]
        %v2437 = vld [vmem:[#allocation10 + $0x2c8] sm:$0xff]
        %v2438 = vld [vmem:[#allocation10 + $0x2d0] sm:$0xff]
        %v2439 = vld [vmem:[#allocation10 + $0x2d8] sm:$0xff]
        %v2440 = vld [vmem:[#allocation10 + $0x2e0] sm:$0xff]
        %v2441 = vld [vmem:[#allocation10 + $0x2e8] sm:$0xff]
        %v2442 = vld [vmem:[#allocation10 + $0x2f0] sm:$0xff]
        %v2443 = vld [vmem:[#allocation10 + $0x2f8] sm:$0xff]
        %v2444 = vld [vmem:[#allocation10 + $0x300] sm:$0xff]
        %v2445 = vld [vmem:[#allocation10 + $0x308] sm:$0xff]
        %v2446 = vld [vmem:[#allocation10 + $0x310] sm:$0xff]
        %v2447 = vld [vmem:[#allocation10 + $0x318] sm:$0xff]
        %v2448 = vld [vmem:[#allocation10 + $0x320] sm:$0xff]
        %v2449 = vld [vmem:[#allocation10 + $0x328] sm:$0xff]
        %v2450 = vld [vmem:[#allocation10 + $0x330] sm:$0xff]
        %v2451 = vld [vmem:[#allocation10 + $0x338] sm:$0xff]
        %v2452 = vld [vmem:[#allocation10 + $0x340] sm:$0xff]
        %v2453 = vld [vmem:[#allocation10 + $0x348] sm:$0xff]
        %v2454 = vld [vmem:[#allocation10 + $0x350] sm:$0xff]
        %v2455 = vld [vmem:[#allocation10 + $0x358] sm:$0xff]
        %v2456 = vld [vmem:[#allocation10 + $0x360] sm:$0xff]
        %v2457 = vld [vmem:[#allocation10 + $0x368] sm:$0xff]
        %v2458 = vld [vmem:[#allocation10 + $0x370] sm:$0xff]
        %v2459 = vld [vmem:[#allocation10 + $0x378] sm:$0xff]
        %v2460 = vld [vmem:[#allocation10 + $0x380] sm:$0xff]
        %v2461 = vld [vmem:[#allocation10 + $0x388] sm:$0xff]
        %v2462 = vld [vmem:[#allocation10 + $0x390] sm:$0xff]
        %v2463 = vld [vmem:[#allocation10 + $0x398] sm:$0xff]
        %v2464 = vld [vmem:[#allocation10 + $0x3a0] sm:$0xff]
        %v2465 = vld [vmem:[#allocation10 + $0x3a8] sm:$0xff]
        %v2466 = vld [vmem:[#allocation10 + $0x3b0] sm:$0xff]
        %v2467 = vld [vmem:[#allocation10 + $0x3b8] sm:$0xff]
        %v2468 = vld [vmem:[#allocation10 + $0x3c0] sm:$0xff]
        %v2469 = vld [vmem:[#allocation10 + $0x3c8] sm:$0xff]
        %v2470 = vld [vmem:[#allocation10 + $0x3d0] sm:$0xff]
        %v2471 = vld [vmem:[#allocation10 + $0x3d8] sm:$0xff]
        %v2472 = vld [vmem:[#allocation10 + $0x3e0] sm:$0xff]
        %v2473 = vld [vmem:[#allocation10 + $0x3e8] sm:$0xff]
        %v2474 = vld [vmem:[#allocation10 + $0x3f0] sm:$0xff]
        %v2475 = vld [vmem:[#allocation10 + $0x3f8] sm:$0xff]
        %v2476 = vld [vmem:[#allocation10 + $0x400] sm:$0xff]
        %v2477 = vld [vmem:[#allocation10 + $0x408] sm:$0xff]
        %v2478 = vld [vmem:[#allocation10 + $0x410] sm:$0xff]
        %v2479 = vld [vmem:[#allocation10 + $0x418] sm:$0xff]
        %v2480 = vld [vmem:[#allocation10 + $0x420] sm:$0xff]
        %v2481 = vld [vmem:[#allocation10 + $0x428] sm:$0xff]
        %v2482 = vld [vmem:[#allocation10 + $0x430] sm:$0xff]
        %v2483 = vld [vmem:[#allocation10 + $0x438] sm:$0xff]
        %v2484 = vld [vmem:[#allocation10 + $0x440] sm:$0xff]
        %v2485 = vld [vmem:[#allocation10 + $0x448] sm:$0xff]
        %v2486 = vld [vmem:[#allocation10 + $0x450] sm:$0xff]
        %v2487 = vld [vmem:[#allocation10 + $0x458] sm:$0xff]
        %v2488 = vld [vmem:[#allocation10 + $0x460] sm:$0xff]
        %v2489 = vld [vmem:[#allocation10 + $0x468] sm:$0xff]
        %v2490 = vld [vmem:[#allocation10 + $0x470] sm:$0xff]
        %v2491 = vld [vmem:[#allocation10 + $0x478] sm:$0xff]
        %v2492 = vld [vmem:[#allocation10 + $0x480] sm:$0xff]
        %v2493 = vld [vmem:[#allocation10 + $0x488] sm:$0xff]
        %v2494 = vld [vmem:[#allocation10 + $0x490] sm:$0xff]
        %v2495 = vld [vmem:[#allocation10 + $0x498] sm:$0xff]
        %v2496 = vld [vmem:[#allocation10 + $0x4a0] sm:$0xff]
        %v2497 = vld [vmem:[#allocation10 + $0x4a8] sm:$0xff]
        %v2498 = vld [vmem:[#allocation10 + $0x4b0] sm:$0xff]
        %v2499 = vld [vmem:[#allocation10 + $0x4b8] sm:$0xff]
        %v2500 = vld [vmem:[#allocation10 + $0x4c0] sm:$0xff]
        %v2501 = vld [vmem:[#allocation10 + $0x4c8] sm:$0xff]
        %v2502 = vld [vmem:[#allocation10 + $0x4d0] sm:$0xff]
        %v2503 = vld [vmem:[#allocation10 + $0x4d8] sm:$0xff]
        %v2504 = vld [vmem:[#allocation10 + $0x4e0] sm:$0xff]
        %v2505 = vld [vmem:[#allocation10 + $0x4e8] sm:$0xff]
        %v2506 = vld [vmem:[#allocation10 + $0x4f0] sm:$0xff]
        %v2507 = vld [vmem:[#allocation10 + $0x4f8] sm:$0xff]
        %v2508 = vld [vmem:[#allocation10 + $0x500] sm:$0xff]
        %v2509 = vld [vmem:[#allocation10 + $0x508] sm:$0xff]
        %v2510 = vld [vmem:[#allocation10 + $0x510] sm:$0xff]
        %v2511 = vld [vmem:[#allocation10 + $0x518] sm:$0xff]
        %v2512 = vld [vmem:[#allocation10 + $0x520] sm:$0xff]
        %v2513 = vld [vmem:[#allocation10 + $0x528] sm:$0xff]
        %v2514 = vld [vmem:[#allocation10 + $0x530] sm:$0xff]
        %v2515 = vld [vmem:[#allocation10 + $0x538] sm:$0xff]
        %v2516 = vld [vmem:[#allocation10 + $0x540] sm:$0xff]
        %v2517 = vld [vmem:[#allocation10 + $0x548] sm:$0xff]
        %v2518 = vld [vmem:[#allocation10 + $0x550] sm:$0xff]
        %v2519 = vld [vmem:[#allocation10 + $0x558] sm:$0xff]
        %v2520 = vld [vmem:[#allocation10 + $0x560] sm:$0xff]
        %v2521 = vld [vmem:[#allocation10 + $0x568] sm:$0xff]
        %v2522 = vld [vmem:[#allocation10 + $0x570] sm:$0xff]
        %v2523 = vld [vmem:[#allocation10 + $0x578] sm:$0xff]
        %v2524 = vld [vmem:[#allocation10 + $0x580] sm:$0xff]
        %v2525 = vld [vmem:[#allocation10 + $0x588] sm:$0xff]
        %v2526 = vld [vmem:[#allocation10 + $0x590] sm:$0xff]
        %v2527 = vld [vmem:[#allocation10 + $0x598] sm:$0xff]
        %v2528 = vld [vmem:[#allocation10 + $0x5a0] sm:$0xff]
        %v2529 = vld [vmem:[#allocation10 + $0x5a8] sm:$0xff]
        %v2530 = vld [vmem:[#allocation10 + $0x5b0] sm:$0xff]
        %v2531 = vld [vmem:[#allocation10 + $0x5b8] sm:$0xff]
        %v2532 = vld [vmem:[#allocation10 + $0x5c0] sm:$0xff]
        %v2533 = vld [vmem:[#allocation10 + $0x5c8] sm:$0xff]
        %v2534 = vld [vmem:[#allocation10 + $0x5d0] sm:$0xff]
        %v2535 = vld [vmem:[#allocation10 + $0x5d8] sm:$0xff]
        %v2536 = vld [vmem:[#allocation10 + $0x5e0] sm:$0xff]
        %v2537 = vld [vmem:[#allocation10 + $0x5e8] sm:$0xff]
        %v2538 = vld [vmem:[#allocation10 + $0x5f0] sm:$0xff]
        %v2539 = vld [vmem:[#allocation10 + $0x5f8] sm:$0xff]
        %v2540 = vld [vmem:[#allocation10 + $0x600] sm:$0xff]
        %v2541 = vld [vmem:[#allocation10 + $0x608] sm:$0xff]
        %v2542 = vld [vmem:[#allocation10 + $0x610] sm:$0xff]
        %v2543 = vld [vmem:[#allocation10 + $0x618] sm:$0xff]
        %v2544 = vld [vmem:[#allocation10 + $0x620] sm:$0xff]
        %v2545 = vld [vmem:[#allocation10 + $0x628] sm:$0xff]
        %v2546 = vld [vmem:[#allocation10 + $0x630] sm:$0xff]
        %v2547 = vld [vmem:[#allocation10 + $0x638] sm:$0xff]
        %v2548 = vld [vmem:[#allocation10 + $0x640] sm:$0xff]
        %v2549 = vld [vmem:[#allocation10 + $0x648] sm:$0xff]
        %v2550 = vld [vmem:[#allocation10 + $0x650] sm:$0xff]
        %v2551 = vld [vmem:[#allocation10 + $0x658] sm:$0xff]
        %v2552 = vld [vmem:[#allocation10 + $0x660] sm:$0xff]
        %v2553 = vld [vmem:[#allocation10 + $0x668] sm:$0xff]
        %v2554 = vld [vmem:[#allocation10 + $0x670] sm:$0xff]
        %v2555 = vld [vmem:[#allocation10 + $0x678] sm:$0xff]
        %v2556 = vld [vmem:[#allocation10 + $0x680] sm:$0xff]
        %v2557 = vld [vmem:[#allocation10 + $0x688] sm:$0xff]
        %v2558 = vld [vmem:[#allocation10 + $0x690] sm:$0xff]
        %v2559 = vld [vmem:[#allocation10 + $0x698] sm:$0xff]
        %v2560 = vld [vmem:[#allocation10 + $0x6a0] sm:$0xff]
        %v2561 = vld [vmem:[#allocation10 + $0x6a8] sm:$0xff]
        %v2562 = vld [vmem:[#allocation10 + $0x6b0] sm:$0xff]
        %v2563 = vld [vmem:[#allocation10 + $0x6b8] sm:$0xff]
        %v2564 = vld [vmem:[#allocation10 + $0x6c0] sm:$0xff]
        %v2565 = vld [vmem:[#allocation10 + $0x6c8] sm:$0xff]
        %v2566 = vld [vmem:[#allocation10 + $0x6d0] sm:$0xff]
        %v2567 = vld [vmem:[#allocation10 + $0x6d8] sm:$0xff]
        %v2568 = vld [vmem:[#allocation10 + $0x6e0] sm:$0xff]
        %v2569 = vld [vmem:[#allocation10 + $0x6e8] sm:$0xff]
        %v2570 = vld [vmem:[#allocation10 + $0x6f0] sm:$0xff]
        %v2571 = vld [vmem:[#allocation10 + $0x6f8] sm:$0xff]
        %v2572 = vld [vmem:[#allocation10 + $0x700] sm:$0xff]
        %v2573 = vld [vmem:[#allocation10 + $0x708] sm:$0xff]
        %v2574 = vld [vmem:[#allocation10 + $0x710] sm:$0xff]
        %v2575 = vld [vmem:[#allocation10 + $0x718] sm:$0xff]
        %v2576 = vld [vmem:[#allocation10 + $0x720] sm:$0xff]
        %v2577 = vld [vmem:[#allocation10 + $0x728] sm:$0xff]
        %v2578 = vld [vmem:[#allocation10 + $0x730] sm:$0xff]
        %v2579 = vld [vmem:[#allocation10 + $0x738] sm:$0xff]
        %v2580 = vld [vmem:[#allocation10 + $0x740] sm:$0xff]
        %v2581 = vld [vmem:[#allocation10 + $0x748] sm:$0xff]
        %v2582 = vld [vmem:[#allocation10 + $0x750] sm:$0xff]
        %v2583 = vld [vmem:[#allocation10 + $0x758] sm:$0xff]
        %v2584 = vld [vmem:[#allocation10 + $0x760] sm:$0xff]
        %v2585 = vld [vmem:[#allocation10 + $0x768] sm:$0xff]
        %v2586 = vld [vmem:[#allocation10 + $0x770] sm:$0xff]
        %v2587 = vld [vmem:[#allocation10 + $0x778] sm:$0xff]
        %v2588 = vld [vmem:[#allocation10 + $0x780] sm:$0xff]
        %v2589 = vld [vmem:[#allocation10 + $0x788] sm:$0xff]
        %v2590 = vld [vmem:[#allocation10 + $0x790] sm:$0xff]
        %v2591 = vld [vmem:[#allocation10 + $0x798] sm:$0xff]
        %v2592 = vld [vmem:[#allocation10 + $0x7a0] sm:$0xff]
        %v2593 = vld [vmem:[#allocation10 + $0x7a8] sm:$0xff]
        %v2594 = vld [vmem:[#allocation10 + $0x7b0] sm:$0xff]
        %v2595 = vld [vmem:[#allocation10 + $0x7b8] sm:$0xff]
        %v2596 = vld [vmem:[#allocation10 + $0x7c0] sm:$0xff]
        %v2597 = vld [vmem:[#allocation10 + $0x7c8] sm:$0xff]
        %v2598 = vld [vmem:[#allocation10 + $0x7d0] sm:$0xff]
        %v2599 = vld [vmem:[#allocation10 + $0x7d8] sm:$0xff]
        %v2600 = vld [vmem:[#allocation10 + $0x7e0] sm:$0xff]
        %v2601 = vld [vmem:[#allocation10 + $0x7e8] sm:$0xff]
        %v2602 = vld [vmem:[#allocation10 + $0x7f0] sm:$0xff]
        %v2603 = vld [vmem:[#allocation10 + $0x7f8] sm:$0xff]
        %v2604 = vperm.slane %v398, 1
        %v2605 = vperm.slane %v399, 1
        %2606 = vmatpush.msra.mxu0 %v2378
        %2607 = vmatpush.msra.mxu0 %v2376
        %2608 = vmatpush.msra.mxu0 %v2374
        %2609 = vmatpush.msra.mxu0 %v2372
        %2610 = vmatpush.msra.mxu0 %v2370
        %2611 = vmatpush.msra.mxu0 %v2368
        %2612 = vmatpush.msra.mxu0 %v2366
        %2613 = vmatpush.msra.mxu0 %v2364
        %2614 = vmatpush.msra.mxu0 %v2362
        %2615 = vmatpush.msra.mxu0 %v2360
        %2616 = vmatpush.msra.mxu0 %v2358
        %2617 = vmatpush.msra.mxu0 %v2356
        %2618 = vmatpush.msra.mxu0 %v2354
        %2619 = vmatpush.msra.mxu0 %v2352
        %2620 = vmatpush.msra.mxu0 %v2350
        %2621 = vmatpush.msra.mxu0 %v2348
        %2622 = vmatmul.f32.gmra.mxu0 %v2332
        %v2623 = vpop.f32.mrf.mxu0
        %v2624 = vadd.f32 %v2604, %v2623
        %2625 = vmatmul.f32.gmra.mxu0 %v2340
        %v2626 = vpop.f32.mrf.mxu0
        %v2627 = vadd.f32 %v2604, %v2626
        %2628 = vdwg.mxu0
        %2629 = vmatpush.msra.mxu0 %v2410
        %2630 = vmatpush.msra.mxu0 %v2408
        %2631 = vmatpush.msra.mxu0 %v2406
        %2632 = vmatpush.msra.mxu0 %v2404
        %2633 = vmatpush.msra.mxu0 %v2402
        %2634 = vmatpush.msra.mxu0 %v2400
        %2635 = vmatpush.msra.mxu0 %v2398
        %2636 = vmatpush.msra.mxu0 %v2396
        %2637 = vmatpush.msra.mxu0 %v2394
        %2638 = vmatpush.msra.mxu0 %v2392
        %2639 = vmatpush.msra.mxu0 %v2390
        %2640 = vmatpush.msra.mxu0 %v2388
        %2641 = vmatpush.msra.mxu0 %v2386
        %2642 = vmatpush.msra.mxu0 %v2384
        %2643 = vmatpush.msra.mxu0 %v2382
        %2644 = vmatpush.msra.mxu0 %v2380
        %2645 = vmatmul.f32.gmra.mxu0 %v2333
        %v2646 = vpop.f32.mrf.mxu0
        %v2647 = vadd.f32 %v2624, %v2646
        %2648 = vmatmul.f32.gmra.mxu0 %v2341
        %v2649 = vpop.f32.mrf.mxu0
        %v2650 = vadd.f32 %v2627, %v2649
        %2651 = vdwg.mxu0
        %2652 = vmatpush.msra.mxu0 %v2442
        %2653 = vmatpush.msra.mxu0 %v2440
        %2654 = vmatpush.msra.mxu0 %v2438
        %2655 = vmatpush.msra.mxu0 %v2436
        %2656 = vmatpush.msra.mxu0 %v2434
        %2657 = vmatpush.msra.mxu0 %v2432
        %2658 = vmatpush.msra.mxu0 %v2430
        %2659 = vmatpush.msra.mxu0 %v2428
        %2660 = vmatpush.msra.mxu0 %v2426
        %2661 = vmatpush.msra.mxu0 %v2424
        %2662 = vmatpush.msra.mxu0 %v2422
        %2663 = vmatpush.msra.mxu0 %v2420
        %2664 = vmatpush.msra.mxu0 %v2418
        %2665 = vmatpush.msra.mxu0 %v2416
        %2666 = vmatpush.msra.mxu0 %v2414
        %2667 = vmatpush.msra.mxu0 %v2412
        %2668 = vmatmul.f32.gmra.mxu0 %v2334
        %v2669 = vpop.f32.mrf.mxu0
        %v2670 = vadd.f32 %v2647, %v2669
        %2671 = vmatmul.f32.gmra.mxu0 %v2342
        %v2672 = vpop.f32.mrf.mxu0
        %v2673 = vadd.f32 %v2650, %v2672
        %2674 = vdwg.mxu0
        %2675 = vmatpush.msra.mxu0 %v2474
        %2676 = vmatpush.msra.mxu0 %v2472
        %2677 = vmatpush.msra.mxu0 %v2470
        %2678 = vmatpush.msra.mxu0 %v2468
        %2679 = vmatpush.msra.mxu0 %v2466
        %2680 = vmatpush.msra.mxu0 %v2464
        %2681 = vmatpush.msra.mxu0 %v2462
        %2682 = vmatpush.msra.mxu0 %v2460
        %2683 = vmatpush.msra.mxu0 %v2458
        %2684 = vmatpush.msra.mxu0 %v2456
        %2685 = vmatpush.msra.mxu0 %v2454
        %2686 = vmatpush.msra.mxu0 %v2452
        %2687 = vmatpush.msra.mxu0 %v2450
        %2688 = vmatpush.msra.mxu0 %v2448
        %2689 = vmatpush.msra.mxu0 %v2446
        %2690 = vmatpush.msra.mxu0 %v2444
        %2691 = vmatmul.f32.gmra.mxu0 %v2335
        %v2692 = vpop.f32.mrf.mxu0
        %v2693 = vadd.f32 %v2670, %v2692
        %2694 = vmatmul.f32.gmra.mxu0 %v2343
        %v2695 = vpop.f32.mrf.mxu0
        %v2696 = vadd.f32 %v2673, %v2695
        %2697 = vdwg.mxu0
        %2698 = vmatpush.msra.mxu0 %v2506
        %2699 = vmatpush.msra.mxu0 %v2504
        %2700 = vmatpush.msra.mxu0 %v2502
        %2701 = vmatpush.msra.mxu0 %v2500
        %2702 = vmatpush.msra.mxu0 %v2498
        %2703 = vmatpush.msra.mxu0 %v2496
        %2704 = vmatpush.msra.mxu0 %v2494
        %2705 = vmatpush.msra.mxu0 %v2492
        %2706 = vmatpush.msra.mxu0 %v2490
        %2707 = vmatpush.msra.mxu0 %v2488
        %2708 = vmatpush.msra.mxu0 %v2486
        %2709 = vmatpush.msra.mxu0 %v2484
        %2710 = vmatpush.msra.mxu0 %v2482
        %2711 = vmatpush.msra.mxu0 %v2480
        %2712 = vmatpush.msra.mxu0 %v2478
        %2713 = vmatpush.msra.mxu0 %v2476
        %2714 = vmatmul.f32.gmra.mxu0 %v2336
        %v2715 = vpop.f32.mrf.mxu0
        %v2716 = vadd.f32 %v2693, %v2715
        %2717 = vmatmul.f32.gmra.mxu0 %v2344
        %v2718 = vpop.f32.mrf.mxu0
        %v2719 = vadd.f32 %v2696, %v2718
        %2720 = vdwg.mxu0
        %2721 = vmatpush.msra.mxu0 %v2538
        %2722 = vmatpush.msra.mxu0 %v2536
        %2723 = vmatpush.msra.mxu0 %v2534
        %2724 = vmatpush.msra.mxu0 %v2532
        %2725 = vmatpush.msra.mxu0 %v2530
        %2726 = vmatpush.msra.mxu0 %v2528
        %2727 = vmatpush.msra.mxu0 %v2526
        %2728 = vmatpush.msra.mxu0 %v2524
        %2729 = vmatpush.msra.mxu0 %v2522
        %2730 = vmatpush.msra.mxu0 %v2520
        %2731 = vmatpush.msra.mxu0 %v2518
        %2732 = vmatpush.msra.mxu0 %v2516
        %2733 = vmatpush.msra.mxu0 %v2514
        %2734 = vmatpush.msra.mxu0 %v2512
        %2735 = vmatpush.msra.mxu0 %v2510
        %2736 = vmatpush.msra.mxu0 %v2508
        %2737 = vmatmul.f32.gmra.mxu0 %v2337
        %v2738 = vpop.f32.mrf.mxu0
        %v2739 = vadd.f32 %v2716, %v2738
        %2740 = vmatmul.f32.gmra.mxu0 %v2345
        %v2741 = vpop.f32.mrf.mxu0
        %v2742 = vadd.f32 %v2719, %v2741
        %2743 = vdwg.mxu0
        %2744 = vmatpush.msra.mxu0 %v2570
        %2745 = vmatpush.msra.mxu0 %v2568
        %2746 = vmatpush.msra.mxu0 %v2566
        %2747 = vmatpush.msra.mxu0 %v2564
        %2748 = vmatpush.msra.mxu0 %v2562
        %2749 = vmatpush.msra.mxu0 %v2560
        %2750 = vmatpush.msra.mxu0 %v2558
        %2751 = vmatpush.msra.mxu0 %v2556
        %2752 = vmatpush.msra.mxu0 %v2554
        %2753 = vmatpush.msra.mxu0 %v2552
        %2754 = vmatpush.msra.mxu0 %v2550
        %2755 = vmatpush.msra.mxu0 %v2548
        %2756 = vmatpush.msra.mxu0 %v2546
        %2757 = vmatpush.msra.mxu0 %v2544
        %2758 = vmatpush.msra.mxu0 %v2542
        %2759 = vmatpush.msra.mxu0 %v2540
        %2760 = vmatmul.f32.gmra.mxu0 %v2338
        %v2761 = vpop.f32.mrf.mxu0
        %v2762 = vadd.f32 %v2739, %v2761
        %2763 = vmatmul.f32.gmra.mxu0 %v2346
        %v2764 = vpop.f32.mrf.mxu0
        %v2765 = vadd.f32 %v2742, %v2764
        %2766 = vdwg.mxu0
        %2767 = vmatpush.msra.mxu0 %v2602
        %2768 = vmatpush.msra.mxu0 %v2600
        %2769 = vmatpush.msra.mxu0 %v2598
        %2770 = vmatpush.msra.mxu0 %v2596
        %2771 = vmatpush.msra.mxu0 %v2594
        %2772 = vmatpush.msra.mxu0 %v2592
        %2773 = vmatpush.msra.mxu0 %v2590
        %2774 = vmatpush.msra.mxu0 %v2588
        %2775 = vmatpush.msra.mxu0 %v2586
        %2776 = vmatpush.msra.mxu0 %v2584
        %2777 = vmatpush.msra.mxu0 %v2582
        %2778 = vmatpush.msra.mxu0 %v2580
        %2779 = vmatpush.msra.mxu0 %v2578
        %2780 = vmatpush.msra.mxu0 %v2576
        %2781 = vmatpush.msra.mxu0 %v2574
        %2782 = vmatpush.msra.mxu0 %v2572
        %2783 = vmatmul.f32.gmra.mxu0 %v2339
        %v2784 = vpop.f32.mrf.mxu0
        %v2785 = vadd.f32 %v2762, %v2784
        %2786 = vmatmul.f32.gmra.mxu0 %v2347
        %v2787 = vpop.f32.mrf.mxu0
        %v2788 = vadd.f32 %v2765, %v2787
        %2789 = vdwg.mxu0
        %2790 = vmatpush.msra.mxu0 %v2379
        %2791 = vmatpush.msra.mxu0 %v2377
        %2792 = vmatpush.msra.mxu0 %v2375
        %2793 = vmatpush.msra.mxu0 %v2373
        %2794 = vmatpush.msra.mxu0 %v2371
        %2795 = vmatpush.msra.mxu0 %v2369
        %2796 = vmatpush.msra.mxu0 %v2367
        %2797 = vmatpush.msra.mxu0 %v2365
        %2798 = vmatpush.msra.mxu0 %v2363
        %2799 = vmatpush.msra.mxu0 %v2361
        %2800 = vmatpush.msra.mxu0 %v2359
        %2801 = vmatpush.msra.mxu0 %v2357
        %2802 = vmatpush.msra.mxu0 %v2355
        %2803 = vmatpush.msra.mxu0 %v2353
        %2804 = vmatpush.msra.mxu0 %v2351
        %2805 = vmatpush.msra.mxu0 %v2349
        %2806 = vmatmul.f32.gmra.mxu0 %v2332
        %v2807 = vpop.f32.mrf.mxu0
        %v2808 = vadd.f32 %v2605, %v2807
        %2809 = vmatmul.f32.gmra.mxu0 %v2340
        %v2810 = vpop.f32.mrf.mxu0
        %v2811 = vadd.f32 %v2605, %v2810
        %2812 = vdwg.mxu0
        %2813 = vmatpush.msra.mxu0 %v2411
        %2814 = vmatpush.msra.mxu0 %v2409
        %2815 = vmatpush.msra.mxu0 %v2407
        %2816 = vmatpush.msra.mxu0 %v2405
        %2817 = vmatpush.msra.mxu0 %v2403
        %2818 = vmatpush.msra.mxu0 %v2401
        %2819 = vmatpush.msra.mxu0 %v2399
        %2820 = vmatpush.msra.mxu0 %v2397
        %2821 = vmatpush.msra.mxu0 %v2395
        %2822 = vmatpush.msra.mxu0 %v2393
        %2823 = vmatpush.msra.mxu0 %v2391
        %2824 = vmatpush.msra.mxu0 %v2389
        %2825 = vmatpush.msra.mxu0 %v2387
        %2826 = vmatpush.msra.mxu0 %v2385
        %2827 = vmatpush.msra.mxu0 %v2383
        %2828 = vmatpush.msra.mxu0 %v2381
        %2829 = vmatmul.f32.gmra.mxu0 %v2333
        %v2830 = vpop.f32.mrf.mxu0
        %v2831 = vadd.f32 %v2808, %v2830
        %2832 = vmatmul.f32.gmra.mxu0 %v2341
        %v2833 = vpop.f32.mrf.mxu0
        %v2834 = vadd.f32 %v2811, %v2833
        %2835 = vdwg.mxu0
        %2836 = vmatpush.msra.mxu0 %v2443
        %2837 = vmatpush.msra.mxu0 %v2441
        %2838 = vmatpush.msra.mxu0 %v2439
        %2839 = vmatpush.msra.mxu0 %v2437
        %2840 = vmatpush.msra.mxu0 %v2435
        %2841 = vmatpush.msra.mxu0 %v2433
        %2842 = vmatpush.msra.mxu0 %v2431
        %2843 = vmatpush.msra.mxu0 %v2429
        %2844 = vmatpush.msra.mxu0 %v2427
        %2845 = vmatpush.msra.mxu0 %v2425
        %2846 = vmatpush.msra.mxu0 %v2423
        %2847 = vmatpush.msra.mxu0 %v2421
        %2848 = vmatpush.msra.mxu0 %v2419
        %2849 = vmatpush.msra.mxu0 %v2417
        %2850 = vmatpush.msra.mxu0 %v2415
        %2851 = vmatpush.msra.mxu0 %v2413
        %2852 = vmatmul.f32.gmra.mxu0 %v2334
        %v2853 = vpop.f32.mrf.mxu0
        %v2854 = vadd.f32 %v2831, %v2853
        %2855 = vmatmul.f32.gmra.mxu0 %v2342
        %v2856 = vpop.f32.mrf.mxu0
        %v2857 = vadd.f32 %v2834, %v2856
        %2858 = vdwg.mxu0
        %2859 = vmatpush.msra.mxu0 %v2475
        %2860 = vmatpush.msra.mxu0 %v2473
        %2861 = vmatpush.msra.mxu0 %v2471
        %2862 = vmatpush.msra.mxu0 %v2469
        %2863 = vmatpush.msra.mxu0 %v2467
        %2864 = vmatpush.msra.mxu0 %v2465
        %2865 = vmatpush.msra.mxu0 %v2463
        %2866 = vmatpush.msra.mxu0 %v2461
        %2867 = vmatpush.msra.mxu0 %v2459
        %2868 = vmatpush.msra.mxu0 %v2457
        %2869 = vmatpush.msra.mxu0 %v2455
        %2870 = vmatpush.msra.mxu0 %v2453
        %2871 = vmatpush.msra.mxu0 %v2451
        %2872 = vmatpush.msra.mxu0 %v2449
        %2873 = vmatpush.msra.mxu0 %v2447
        %2874 = vmatpush.msra.mxu0 %v2445
        %2875 = vmatmul.f32.gmra.mxu0 %v2335
        %v2876 = vpop.f32.mrf.mxu0
        %v2877 = vadd.f32 %v2854, %v2876
        %2878 = vmatmul.f32.gmra.mxu0 %v2343
        %v2879 = vpop.f32.mrf.mxu0
        %v2880 = vadd.f32 %v2857, %v2879
        %2881 = vdwg.mxu0
        %2882 = vmatpush.msra.mxu0 %v2507
        %2883 = vmatpush.msra.mxu0 %v2505
        %2884 = vmatpush.msra.mxu0 %v2503
        %2885 = vmatpush.msra.mxu0 %v2501
        %2886 = vmatpush.msra.mxu0 %v2499
        %2887 = vmatpush.msra.mxu0 %v2497
        %2888 = vmatpush.msra.mxu0 %v2495
        %2889 = vmatpush.msra.mxu0 %v2493
        %2890 = vmatpush.msra.mxu0 %v2491
        %2891 = vmatpush.msra.mxu0 %v2489
        %2892 = vmatpush.msra.mxu0 %v2487
        %2893 = vmatpush.msra.mxu0 %v2485
        %2894 = vmatpush.msra.mxu0 %v2483
        %2895 = vmatpush.msra.mxu0 %v2481
        %2896 = vmatpush.msra.mxu0 %v2479
        %2897 = vmatpush.msra.mxu0 %v2477
        %2898 = vmatmul.f32.gmra.mxu0 %v2336
        %v2899 = vpop.f32.mrf.mxu0
        %v2900 = vadd.f32 %v2877, %v2899
        %2901 = vmatmul.f32.gmra.mxu0 %v2344
        %v2902 = vpop.f32.mrf.mxu0
        %v2903 = vadd.f32 %v2880, %v2902
        %2904 = vdwg.mxu0
        %2905 = vmatpush.msra.mxu0 %v2539
        %2906 = vmatpush.msra.mxu0 %v2537
        %2907 = vmatpush.msra.mxu0 %v2535
        %2908 = vmatpush.msra.mxu0 %v2533
        %2909 = vmatpush.msra.mxu0 %v2531
        %2910 = vmatpush.msra.mxu0 %v2529
        %2911 = vmatpush.msra.mxu0 %v2527
        %2912 = vmatpush.msra.mxu0 %v2525
        %2913 = vmatpush.msra.mxu0 %v2523
        %2914 = vmatpush.msra.mxu0 %v2521
        %2915 = vmatpush.msra.mxu0 %v2519
        %2916 = vmatpush.msra.mxu0 %v2517
        %2917 = vmatpush.msra.mxu0 %v2515
        %2918 = vmatpush.msra.mxu0 %v2513
        %2919 = vmatpush.msra.mxu0 %v2511
        %2920 = vmatpush.msra.mxu0 %v2509
        %2921 = vmatmul.f32.gmra.mxu0 %v2337
        %v2922 = vpop.f32.mrf.mxu0
        %v2923 = vadd.f32 %v2900, %v2922
        %2924 = vmatmul.f32.gmra.mxu0 %v2345
        %v2925 = vpop.f32.mrf.mxu0
        %v2926 = vadd.f32 %v2903, %v2925
        %2927 = vdwg.mxu0
        %2928 = vmatpush.msra.mxu0 %v2571
        %2929 = vmatpush.msra.mxu0 %v2569
        %2930 = vmatpush.msra.mxu0 %v2567
        %2931 = vmatpush.msra.mxu0 %v2565
        %2932 = vmatpush.msra.mxu0 %v2563
        %2933 = vmatpush.msra.mxu0 %v2561
        %2934 = vmatpush.msra.mxu0 %v2559
        %2935 = vmatpush.msra.mxu0 %v2557
        %2936 = vmatpush.msra.mxu0 %v2555
        %2937 = vmatpush.msra.mxu0 %v2553
        %2938 = vmatpush.msra.mxu0 %v2551
        %2939 = vmatpush.msra.mxu0 %v2549
        %2940 = vmatpush.msra.mxu0 %v2547
        %2941 = vmatpush.msra.mxu0 %v2545
        %2942 = vmatpush.msra.mxu0 %v2543
        %2943 = vmatpush.msra.mxu0 %v2541
        %2944 = vmatmul.f32.gmra.mxu0 %v2338
        %v2945 = vpop.f32.mrf.mxu0
        %v2946 = vadd.f32 %v2923, %v2945
        %2947 = vmatmul.f32.gmra.mxu0 %v2346
        %v2948 = vpop.f32.mrf.mxu0
        %v2949 = vadd.f32 %v2926, %v2948
        %2950 = vdwg.mxu0
        %2951 = vmatpush.msra.mxu0 %v2603
        %2952 = vmatpush.msra.mxu0 %v2601
        %2953 = vmatpush.msra.mxu0 %v2599
        %2954 = vmatpush.msra.mxu0 %v2597
        %2955 = vmatpush.msra.mxu0 %v2595
        %2956 = vmatpush.msra.mxu0 %v2593
        %2957 = vmatpush.msra.mxu0 %v2591
        %2958 = vmatpush.msra.mxu0 %v2589
        %2959 = vmatpush.msra.mxu0 %v2587
        %2960 = vmatpush.msra.mxu0 %v2585
        %2961 = vmatpush.msra.mxu0 %v2583
        %2962 = vmatpush.msra.mxu0 %v2581
        %2963 = vmatpush.msra.mxu0 %v2579
        %2964 = vmatpush.msra.mxu0 %v2577
        %2965 = vmatpush.msra.mxu0 %v2575
        %2966 = vmatpush.msra.mxu0 %v2573
        %2967 = vmatmul.f32.gmra.mxu0 %v2339
        %v2968 = vpop.f32.mrf.mxu0
        %v2969 = vadd.f32 %v2946, %v2968
        %2970 = vmatmul.f32.gmra.mxu0 %v2347
        %v2971 = vpop.f32.mrf.mxu0
        %v2972 = vadd.f32 %v2949, %v2971
        %2973 = vdwg.mxu0
        %v2974 = vadd.f32 %v1620, %v2785
        %v2975 = vadd.f32 %v1621, %v2969
        %v2976 = vadd.f32 %v1622, %v2788
        %v2977 = vadd.f32 %v1623, %v2972
        %2978 = vst [vmem:[%s393] sm:$0xff] %v2974
        %2979 = vst [vmem:[%s393 + $0x8] sm:$0xff] %v2975
        %2980 = vst [vmem:[%s393 + $0x10] sm:$0xff] %v2976
        %2981 = vst [vmem:[%s393 + $0x18] sm:$0xff] %v2977
        %s2982 = sand.u32 %s187, 1
        %s2983 = scalar_lea.sflag [#allocation4], %s2982
        %s2984 = sand.u32 %s187, 1
        %s2985 = smul.addr %s2984, 32
        %s2986 = scalar_lea.vmem [#allocation14], %s2985
        // Predicated region
        $region77: #{tpu_custom_call.1} parent=47 // pred_check
          %p2987 = pneg %p197
        $region78: #{tpu_custom_call.1} parent=47 // pred_check_branch
          %2989 = sbr.rel (%p2987) target = $region80
        $region79: #{tpu_custom_call.1} parent=47 // pred_region
          %2991 = vsyncadd %s2983, 0
          %s2992 = smul.addr %s27, 4
          %s2993 = smul.addr %s2992, 8
          %s2994 = scalar_lea.hbm %s7, %s2993
          %s2995 = sshll.u32 %s2986, 4
          %s2996 = int_to_ptr.vmem [resolvable:$true] %s2995
          %s2997 = sshll.u32 %s2994, 4
          %s2998 = int_to_ptr.hbm [resolvable:$true] %s2997
          %3003 = dma.vmem_to_hbm [thread:$0]  %s2996, 512, %s2998, %s2983, 256, 256, 16
        $region80: #{tpu_custom_call.1} parent=47 // pred_fallthru
          _
      $region48: #{tpu_custom_call.1} parent=5 // pred_fallthru
        _
      %p3004 = scmp.le.s32.totalorder 2, %s22
      // Predicated region
      $region81: #{tpu_custom_call.1} parent=5 // pred_check
        %p3005 = pneg %p3004
      $region82: #{tpu_custom_call.1} parent=5 // pred_check_branch
        %3007 = sbr.rel (%p3005) target = $region84
      $region83: #{tpu_custom_call.1} parent=5 // pred_region
        %s3008 = ssub.s32 %s22, 2
        // Predicated region
        $region85: #{tpu_custom_call.1} parent=83 // pred_check
          %p3009 = pneg %p203
        $region86: #{tpu_custom_call.1} parent=83 // pred_check_branch
          %3011 = sbr.rel (%p3009) target = $region88
        $region87: #{tpu_custom_call.1} parent=83 // pred_region
          %s3012 = sand.u32 %s188, 1
          %s3013 = scalar_lea.sflag [#allocation4], %s3012
          %s3014 = sand.u32 %s188, 1
          %s3015 = smul.addr %s3014, 32
          %s3016 = scalar_lea.vmem [#allocation14], %s3015
          %3018 = dma.done %s3013, 512
        $region88: #{tpu_custom_call.1} parent=83 // pred_fallthru
          _
      $region84: #{tpu_custom_call.1} parent=5 // pred_fallthru
        _
    $region6: #{tpu_custom_call.1} parent=1 // loop_footer
      %s26 = sadd.s32 1, %s22
    $region7: #{tpu_custom_call.1} parent=1 // loop_footer_branch
      %21 = sbr.rel target = $region3
    $region8: #{tpu_custom_call.1} parent=1 // loop_exit
      _
    %3019 = vsyncpa [#allocation3], 1
    %s3020 = scalar_lea.sflag [#allocation3], 1
    %3021 = vsyncpa %s3020, 1
    %3022 = vsyncpa [#allocation6], 1
    %3023 = vsyncpa [#allocation9], 1
    %3024 = vsyncpa [#allocation12], 1
    %3025 = vsyncpa [#allocation4], 1
    %s3026 = scalar_lea.sflag [#allocation4], 1
    %3027 = vsyncpa %s3026, 1

</llo_original>
